<compile_context>
chip_gen: v7x
topology: tpu7x:2x2x1
jax: 0.10.0
libtpu: 0.0.40
codegen_flags: <defaults>
</compile_context>

<pallas_src>
import functools

import jax
import jax.numpy as jnp
from jax import lax
from jax.experimental import pallas as pl
from jax.experimental.pallas import tpu as pltpu

# -------------------- model hyper-parameters (small, self-consistent) -------
D_MODEL = 32
N_HEADS = 4
N_LAYERS = 2
INPUT_LEN = 8
VOCAB_SIZE = 16
STYLE_DIM = 8
EPS = 1e-5


# ----------------------------- fused Pallas kernel ---------------------------
def fused_transformer_kernel(
    x_ref,            # (B*L, D)      embedded tokens + PE (flattened batch)
    mask_ref,         # (B*L, B*L)    block-diag causal additive mask
    ada_scale_ref,    # (2*NL, B*L, D) folded adaptive-LN scale
    ada_shift_ref,    # (2*NL, B*L, D) folded adaptive-LN shift
    w_qkvo_ref,       # (NL, 4, D, D)  stacked wq/wk/wv/wo
    b_qkvo_ref,       # (NL, 4, 1, D)  stacked bq/bk/bv/bo
    w_ff1_ref,        # (NL, D, 4D)
    b_ff1_ref,        # (NL, 1, 4D)
    w_ff2_ref,        # (NL, 4D, D)
    b_ff2_ref,        # (NL, 1, D)
    w_out_ref,        # (D, V)
    b_out_ref,        # (1, V)
    o_ref,            # (B*L, V)
    *, n_layers, n_heads,
):
    x = x_ref[...]                       # (N, D) with N = B*L
    mask = mask_ref[...]                 # (N, N)
    N, D = x.shape
    dh = D // n_heads
    scale = jnp.float32(1.0 / (dh ** 0.5))

    def folded_adaptive_ln(y, sc, sh):
        # (1 + gain) * LayerNorm(y) + bias, with the affine + style terms
        # pre-folded into `sc` / `sh` outside the kernel.
        mu = jnp.mean(y, axis=-1, keepdims=True)
        var = jnp.mean((y - mu) ** 2, axis=-1, keepdims=True)
        yn = (y - mu) * lax.rsqrt(var + EPS)
        return yn * sc + sh

    for l in range(n_layers):            # static unroll (N_LAYERS = 2)
        # ---------------- attention sub-block ----------------
        a_in = folded_adaptive_ln(x, ada_scale_ref[2 * l], ada_shift_ref[2 * l])
        wq = w_qkvo_ref[l, 0]
        wk = w_qkvo_ref[l, 1]
        wv = w_qkvo_ref[l, 2]
        wo = w_qkvo_ref[l, 3]
        q = (jnp.dot(a_in, wq, preferred_element_type=jnp.float32)
             + b_qkvo_ref[l, 0]) * scale
        k = jnp.dot(a_in, wk, preferred_element_type=jnp.float32) + b_qkvo_ref[l, 1]
        v = jnp.dot(a_in, wv, preferred_element_type=jnp.float32) + b_qkvo_ref[l, 2]

        att = None
        for h in range(n_heads):         # static unroll (4 heads)
            cs = slice(h * dh, (h + 1) * dh)
            qh, kh, vh = q[:, cs], k[:, cs], v[:, cs]
            sc = lax.dot_general(qh, kh, (((1,), (1,)), ((), ())),
                                 preferred_element_type=jnp.float32) + mask
            sc = sc - jnp.max(sc, axis=-1, keepdims=True)
            p = jnp.exp(sc)
            p = p / jnp.sum(p, axis=-1, keepdims=True)   # exact norm (tolerance)
            oh = jnp.dot(p, vh, preferred_element_type=jnp.float32)
            # concat(heads) @ wo  ==  sum_h  head_h @ wo[h*dh:(h+1)*dh, :]
            contrib = jnp.dot(oh, wo[cs, :], preferred_element_type=jnp.float32)
            att = contrib if att is None else att + contrib
        # TODO(synk): dropout(p=0.1) is training-only; identity in eval mode.
        x = x + att + b_qkvo_ref[l, 3]

        # ---------------- feed-forward sub-block ----------------
        f_in = folded_adaptive_ln(x, ada_scale_ref[2 * l + 1],
                                  ada_shift_ref[2 * l + 1])
        h1 = jnp.maximum(
            jnp.dot(f_in, w_ff1_ref[l], preferred_element_type=jnp.float32)
            + b_ff1_ref[l],
            jnp.float32(0.0))
        x = x + jnp.dot(h1, w_ff2_ref[l],
                        preferred_element_type=jnp.float32) + b_ff2_ref[l]

    # ---------------- output projection (fused) ----------------
    o_ref[...] = (jnp.dot(x, w_out_ref[...], preferred_element_type=jnp.float32)
                  + b_out_ref[...])


# ----------------------------- wrapper ---------------------------------------
def conditional_transformer_forward(tokens, style, params):
    B, L = tokens.shape
    D = D_MODEL

    # ---- cheap JAX glue: gather, style map, PE, style-only precompute -------
    x = params["embedding"][tokens] + params["pe"][None]                 # (B,L,D)
    s_relu = jnp.maximum(style @ params["style_w"] + params["style_b"], 0.0)

    ada_scale, ada_shift = [], []
    for lp in params["layers"]:
        for p in ("1", "2"):
            gain = s_relu @ lp[f"g{p}_w"] + lp[f"g{p}_b"][0]             # (B, D)
            bias = s_relu @ lp[f"b{p}_w"] + lp[f"b{p}_b"][0]             # (B, D)
            g, b = lp[f"ln{p}_g"][0], lp[f"ln{p}_b"][0]                  # (D,)
            sc = (1.0 + gain) * g
            sh = (1.0 + gain) * b + bias
            ada_scale.append(jnp.repeat(sc, L, axis=0))                  # (B*L, D)
            ada_shift.append(jnp.repeat(sh, L, axis=0))
    ada_scale = jnp.stack(ada_scale)                                     # (2*NL,B*L,D)
    ada_shift = jnp.stack(ada_shift)

    w_qkvo = jnp.stack([jnp.stack([lp["wq"], lp["wk"], lp["wv"], lp["wo"]])
                        for lp in params["layers"]])                     # (NL,4,D,D)
    b_qkvo = jnp.stack([jnp.stack([lp["bq"], lp["bk"], lp["bv"], lp["bo"]])
                        for lp in params["layers"]])                     # (NL,4,1,D)
    w_ff1 = jnp.stack([lp["f1_w"] for lp in params["layers"]])           # (NL,D,4D)
    b_ff1 = jnp.stack([lp["f1_b"] for lp in params["layers"]])           # (NL,1,4D)
    w_ff2 = jnp.stack([lp["f2_w"] for lp in params["layers"]])           # (NL,4D,D)
    b_ff2 = jnp.stack([lp["f2_b"] for lp in params["layers"]])           # (NL,1,D)

    # block-diagonal causal mask over the flattened (B*L) token axis
    r = jnp.arange(B * L)
    same_batch = (r[:, None] // L) == (r[None, :] // L)
    causal = (r[None, :] % L) <= (r[:, None] % L)
    mask = jnp.where(same_batch & causal, 0.0, -1e30).astype(jnp.float32)

    vmem = pl.BlockSpec(memory_space=pltpu.MemorySpace.VMEM)
    out = pl.pallas_call(
        functools.partial(fused_transformer_kernel,
                          n_layers=N_LAYERS, n_heads=N_HEADS),
        out_shape=jax.ShapeDtypeStruct((B * L, VOCAB_SIZE), jnp.float32),
        in_specs=[vmem] * 12,
        out_specs=vmem,
    )(x.reshape(B * L, D), mask, ada_scale, ada_shift,
      w_qkvo, b_qkvo, w_ff1, b_ff1, w_ff2, b_ff2,
      params["out_w"], params["out_b"])
    return out.reshape(B, L, VOCAB_SIZE)


# ----------------------------- parameters -------------------------------------
def init_params(key):
    keys = iter(jax.random.split(key, 8 + 32 * N_LAYERS))

    def lin(din, dout, w_std=0.02, b_std=0.01):
        w = jax.random.normal(next(keys), (din, dout), jnp.float32) * w_std
        b = jax.random.normal(next(keys), (1, dout), jnp.float32) * b_std
        return w, b

    params = {}
    params["embedding"] = jax.random.normal(
        next(keys), (VOCAB_SIZE, D_MODEL), jnp.float32) * 0.02
    sw, sb = lin(STYLE_DIM, D_MODEL)
    params["style_w"], params["style_b"] = sw, sb[0]

    # sinusoidal positional encoding (same construction as the PyTorch module)
    pos = jnp.arange(INPUT_LEN, dtype=jnp.float32)[:, None]
    div_term = jnp.exp(jnp.arange(0, D_MODEL, 2, dtype=jnp.float32)
                       * (-jnp.log(10000.0) / D_MODEL))
    pe = jnp.zeros((INPUT_LEN, D_MODEL), jnp.float32)
    pe = pe.at[:, 0::2].set(jnp.sin(pos * div_term))
    pe = pe.at[:, 1::2].set(jnp.cos(pos * div_term))
    params["pe"] = pe

    layers = []
    for _ in range(N_LAYERS):
        lp = {}
        lp["ln1_g"] = jnp.ones((1, D_MODEL), jnp.float32)
        lp["ln1_b"] = jnp.zeros((1, D_MODEL), jnp.float32)
        lp["g1_w"], lp["g1_b"] = lin(D_MODEL, D_MODEL)
        lp["b1_w"], lp["b1_b"] = lin(D_MODEL, D_MODEL)
        lp["wq"], lp["bq"] = lin(D_MODEL, D_MODEL)
        lp["wk"], lp["bk"] = lin(D_MODEL, D_MODEL)
        lp["wv"], lp["bv"] = lin(D_MODEL, D_MODEL)
        lp["wo"], lp["bo"] = lin(D_MODEL, D_MODEL)
        lp["ln2_g"] = jnp.ones((1, D_MODEL), jnp.float32)
        lp["ln2_b"] = jnp.zeros((1, D_MODEL), jnp.float32)
        lp["g2_w"], lp["g2_b"] = lin(D_MODEL, D_MODEL)
        lp["b2_w"], lp["b2_b"] = lin(D_MODEL, D_MODEL)
        lp["f1_w"], lp["f1_b"] = lin(D_MODEL, 4 * D_MODEL)
        lp["f2_w"], lp["f2_b"] = lin(4 * D_MODEL, D_MODEL)
        layers.append(lp)
    params["layers"] = layers

    ow, ob = lin(D_MODEL, VOCAB_SIZE)
    params["out_w"], params["out_b"] = ow, ob
    return params


# ----------------------------- pure-JAX reference ------------------------------
def reference_forward(tokens, style, params):
    x = params["embedding"][tokens]
    s = style @ params["style_w"] + params["style_b"]
    x = x + params["pe"][None]
    B, L, D = x.shape
    dh = D // N_HEADS
    row = jnp.arange(L)[:, None]
    col = jnp.arange(L)[None, :]
    causal_neg = jnp.where(col > row, -1e30, 0.0).astype(jnp.float32)
    s_relu = jnp.maximum(s, 0.0)

    for p in params["layers"]:
        def aln(y, lng, lnb, gw, gb, bw, bb):
            mu = y.mean(-1, keepdims=True)
            var = ((y - mu) ** 2).mean(-1, keepdims=True)
            yn = (y - mu) / jnp.sqrt(var + EPS)
            yn = yn * lng + lnb
            gain = s_relu @ gw + gb
            bias = s_relu @ bw + bb
            return (1.0 + gain)[:, None, :] * yn + bias[:, None, :]

        a_in = aln(x, p["ln1_g"][0], p["ln1_b"][0],
                   p["g1_w"], p["g1_b"][0], p["b1_w"], p["b1_b"][0])
        q = a_in @ p["wq"] + p["bq"][0]
        k = a_in @ p["wk"] + p["bk"][0]
        v = a_in @ p["wv"] + p["bv"][0]
        qh = q.reshape(B, L, N_HEADS, dh).transpose(0, 2, 1, 3) / jnp.sqrt(dh)
        kh = k.reshape(B, L, N_HEADS, dh).transpose(0, 2, 1, 3)
        vh = v.reshape(B, L, N_HEADS, dh).transpose(0, 2, 1, 3)
        sc = jnp.einsum("bhqd,bhkd->bhqk", qh, kh) + causal_neg
        pw = jax.nn.softmax(sc, axis=-1)
        att = jnp.einsum("bhqk,bhkd->bhqd", pw, vh).transpose(0, 2, 1, 3).reshape(B, L, D)
        att = att @ p["wo"] + p["bo"][0]
        x = x + att

        f_in = aln(x, p["ln2_g"][0], p["ln2_b"][0],
                   p["g2_w"], p["g2_b"][0], p["b2_w"], p["b2_b"][0])
        h1 = jnp.maximum(f_in @ p["f1_w"] + p["f1_b"][0], 0.0)
        x = x + h1 @ p["f2_w"] + p["f2_b"][0]

    return x @ params["out_w"] + params["out_b"][0]


# ----------------------------- main ------------------------------------------
if __name__ == "__main__":
    key = jax.random.PRNGKey(0)
    k_tok, k_style, k_par = jax.random.split(key, 3)

    B = 2
    tokens = jax.random.randint(k_tok, (B, INPUT_LEN), 0, VOCAB_SIZE)
    style = jax.random.normal(k_style, (B, STYLE_DIM), jnp.float32)
    params = init_params(k_par)

    logits = conditional_transformer_forward(tokens, style, params)
    logits = jax.block_until_ready(logits)

    ref = reference_forward(tokens, style, params)
    assert logits.shape == (B, INPUT_LEN, VOCAB_SIZE)
    assert bool(jnp.all(jnp.isfinite(logits)))
    assert bool(jnp.allclose(logits, ref, rtol=2e-4, atol=2e-4)), (
        float(jnp.max(jnp.abs(logits - ref))))

    print("KERNEL_OK")
</pallas_src>

<mosaic_0001>
module attributes {stable_mosaic.version = 11 : i64} {
  func.func @fused_transformer_kernel(%arg0: memref<16x32xf32, #tpu.memory_space<vmem>>, %arg1: memref<16x16xf32, #tpu.memory_space<vmem>>, %arg2: memref<4x16x32xf32, #tpu.memory_space<vmem>>, %arg3: memref<4x16x32xf32, #tpu.memory_space<vmem>>, %arg4: memref<2x4x32x32xf32, #tpu.memory_space<vmem>>, %arg5: memref<2x4x1x32xf32, #tpu.memory_space<vmem>>, %arg6: memref<2x32x128xf32, #tpu.memory_space<vmem>>, %arg7: memref<2x1x128xf32, #tpu.memory_space<vmem>>, %arg8: memref<2x128x32xf32, #tpu.memory_space<vmem>>, %arg9: memref<2x1x32xf32, #tpu.memory_space<vmem>>, %arg10: memref<32x16xf32, #tpu.memory_space<vmem>>, %arg11: memref<1x16xf32, #tpu.memory_space<vmem>>, %arg12: memref<16x16xf32, #tpu.memory_space<vmem>>) attributes {dimension_semantics = [], scalar_prefetch = 0 : i64, scratch_operands = 0 : i64, tpu.core_type = #tpu.core_type<tc>} {
    %c0 = arith.constant 0 : index
    %c0_0 = arith.constant 0 : index
    %0 = vector.load %arg0[%c0, %c0_0] : memref<16x32xf32, #tpu.memory_space<vmem>>, vector<16x32xf32>
    %c0_1 = arith.constant 0 : index
    %c0_2 = arith.constant 0 : index
    %1 = vector.load %arg1[%c0_1, %c0_2] : memref<16x16xf32, #tpu.memory_space<vmem>>, vector<16x16xf32>
    %c0_3 = arith.constant 0 : index
    %c0_4 = arith.constant 0 : index
    %c0_5 = arith.constant 0 : index
    %2 = vector.load %arg2[%c0_3, %c0_4, %c0_5] : memref<4x16x32xf32, #tpu.memory_space<vmem>>, vector<1x16x32xf32>
    %3 = vector.shape_cast %2 : vector<1x16x32xf32> to vector<16x32xf32>
    %c0_6 = arith.constant 0 : index
    %c0_7 = arith.constant 0 : index
    %c0_8 = arith.constant 0 : index
    %4 = vector.load %arg3[%c0_6, %c0_7, %c0_8] : memref<4x16x32xf32, #tpu.memory_space<vmem>>, vector<1x16x32xf32>
    %5 = vector.shape_cast %4 : vector<1x16x32xf32> to vector<16x32xf32>
    %cst = arith.constant dense<0.000000e+00> : vector<16xf32>
    %6 = vector.multi_reduction <add>, %0, %cst [1] : vector<16x32xf32> to vector<16xf32>
    %7 = vector.shape_cast %6 : vector<16xf32> to vector<16x1xf32>
    %cst_9 = arith.constant 3.200000e+01 : f32
    %8 = vector.broadcast %cst_9 : f32 to vector<16x1xf32>
    %9 = arith.divf %7, %8 : vector<16x1xf32>
    %10 = vector.broadcast %9 : vector<16x1xf32> to vector<16x32xf32>
    %11 = arith.subf %0, %10 : vector<16x32xf32>
    %12 = arith.mulf %11, %11 : vector<16x32xf32>
    %cst_10 = arith.constant dense<0.000000e+00> : vector<16xf32>
    %13 = vector.multi_reduction <add>, %12, %cst_10 [1] : vector<16x32xf32> to vector<16xf32>
    %14 = vector.shape_cast %13 : vector<16xf32> to vector<16x1xf32>
    %cst_11 = arith.constant 3.200000e+01 : f32
    %15 = vector.broadcast %cst_11 : f32 to vector<16x1xf32>
    %16 = arith.divf %14, %15 : vector<16x1xf32>
    %17 = vector.broadcast %9 : vector<16x1xf32> to vector<16x32xf32>
    %18 = arith.subf %0, %17 : vector<16x32xf32>
    %cst_12 = arith.constant 9.99999974E-6 : f32
    %19 = vector.broadcast %cst_12 : f32 to vector<16x1xf32>
    %20 = arith.addf %16, %19 : vector<16x1xf32>
    %21 = math.rsqrt %20 : vector<16x1xf32>
    %22 = vector.broadcast %21 : vector<16x1xf32> to vector<16x32xf32>
    %23 = arith.mulf %18, %22 : vector<16x32xf32>
    %24 = arith.mulf %23, %3 : vector<16x32xf32>
    %25 = arith.addf %24, %5 : vector<16x32xf32>
    %c0_13 = arith.constant 0 : index
    %c0_14 = arith.constant 0 : index
    %c0_15 = arith.constant 0 : index
    %c0_16 = arith.constant 0 : index
    %26 = vector.load %arg4[%c0_13, %c0_14, %c0_15, %c0_16] : memref<2x4x32x32xf32, #tpu.memory_space<vmem>>, vector<1x1x32x32xf32>
    %27 = vector.shape_cast %26 : vector<1x1x32x32xf32> to vector<32x32xf32>
    %c0_17 = arith.constant 0 : index
    %c1 = arith.constant 1 : index
    %c0_18 = arith.constant 0 : index
    %c0_19 = arith.constant 0 : index
    %28 = vector.load %arg4[%c0_17, %c1, %c0_18, %c0_19] : memref<2x4x32x32xf32, #tpu.memory_space<vmem>>, vector<1x1x32x32xf32>
    %29 = vector.shape_cast %28 : vector<1x1x32x32xf32> to vector<32x32xf32>
    %c0_20 = arith.constant 0 : index
    %c2 = arith.constant 2 : index
    %c0_21 = arith.constant 0 : index
    %c0_22 = arith.constant 0 : index
    %30 = vector.load %arg4[%c0_20, %c2, %c0_21, %c0_22] : memref<2x4x32x32xf32, #tpu.memory_space<vmem>>, vector<1x1x32x32xf32>
    %31 = vector.shape_cast %30 : vector<1x1x32x32xf32> to vector<32x32xf32>
    %c0_23 = arith.constant 0 : index
    %c3 = arith.constant 3 : index
    %c0_24 = arith.constant 0 : index
    %c0_25 = arith.constant 0 : index
    %32 = vector.load %arg4[%c0_23, %c3, %c0_24, %c0_25] : memref<2x4x32x32xf32, #tpu.memory_space<vmem>>, vector<1x1x32x32xf32>
    %33 = vector.shape_cast %32 : vector<1x1x32x32xf32> to vector<32x32xf32>
    %cst_26 = arith.constant dense<0.000000e+00> : vector<16x32xf32>
    %34 = tpu.matmul %25, %27, %cst_26 {dimension_numbers = #tpu.dot_dimension_numbers<[1], [0], [0], [1], [0, 0, 1, 1], [], []>} : vector<16x32xf32>, vector<32x32xf32>, vector<16x32xf32> -> vector<16x32xf32>
    %c0_27 = arith.constant 0 : index
    %c0_28 = arith.constant 0 : index
    %c0_29 = arith.constant 0 : index
    %c0_30 = arith.constant 0 : index
    %35 = vector.load %arg5[%c0_27, %c0_28, %c0_29, %c0_30] : memref<2x4x1x32xf32, #tpu.memory_space<vmem>>, vector<1x1x1x32xf32>
    %36 = vector.shape_cast %35 : vector<1x1x1x32xf32> to vector<1x32xf32>
    %37 = vector.broadcast %36 : vector<1x32xf32> to vector<16x32xf32>
    %38 = arith.addf %34, %37 : vector<16x32xf32>
    %cst_31 = arith.constant 0.353553385 : f32
    %39 = vector.broadcast %cst_31 : f32 to vector<16x32xf32>
    %40 = arith.mulf %38, %39 : vector<16x32xf32>
    %cst_32 = arith.constant dense<0.000000e+00> : vector<16x32xf32>
    %41 = tpu.matmul %25, %29, %cst_32 {dimension_numbers = #tpu.dot_dimension_numbers<[1], [0], [0], [1], [0, 0, 1, 1], [], []>} : vector<16x32xf32>, vector<32x32xf32>, vector<16x32xf32> -> vector<16x32xf32>
    %c0_33 = arith.constant 0 : index
    %c1_34 = arith.constant 1 : index
    %c0_35 = arith.constant 0 : index
    %c0_36 = arith.constant 0 : index
    %42 = vector.load %arg5[%c0_33, %c1_34, %c0_35, %c0_36] : memref<2x4x1x32xf32, #tpu.memory_space<vmem>>, vector<1x1x1x32xf32>
    %43 = vector.shape_cast %42 : vector<1x1x1x32xf32> to vector<1x32xf32>
    %44 = vector.broadcast %43 : vector<1x32xf32> to vector<16x32xf32>
    %45 = arith.addf %41, %44 : vector<16x32xf32>
    %cst_37 = arith.constant dense<0.000000e+00> : vector<16x32xf32>
    %46 = tpu.matmul %25, %31, %cst_37 {dimension_numbers = #tpu.dot_dimension_numbers<[1], [0], [0], [1], [0, 0, 1, 1], [], []>} : vector<16x32xf32>, vector<32x32xf32>, vector<16x32xf32> -> vector<16x32xf32>
    %c0_38 = arith.constant 0 : index
    %c2_39 = arith.constant 2 : index
    %c0_40 = arith.constant 0 : index
    %c0_41 = arith.constant 0 : index
    %47 = vector.load %arg5[%c0_38, %c2_39, %c0_40, %c0_41] : memref<2x4x1x32xf32, #tpu.memory_space<vmem>>, vector<1x1x1x32xf32>
    %48 = vector.shape_cast %47 : vector<1x1x1x32xf32> to vector<1x32xf32>
    %49 = vector.broadcast %48 : vector<1x32xf32> to vector<16x32xf32>
    %50 = arith.addf %46, %49 : vector<16x32xf32>
    %51 = vector.extract_strided_slice %40 {offsets = [0, 0], sizes = [16, 8], strides = [1, 1]} : vector<16x32xf32> to vector<16x8xf32>
    %52 = vector.extract_strided_slice %45 {offsets = [0, 0], sizes = [16, 8], strides = [1, 1]} : vector<16x32xf32> to vector<16x8xf32>
    %53 = vector.extract_strided_slice %50 {offsets = [0, 0], sizes = [16, 8], strides = [1, 1]} : vector<16x32xf32> to vector<16x8xf32>
    %cst_42 = arith.constant dense<0.000000e+00> : vector<16x16xf32>
    %54 = tpu.matmul %51, %52, %cst_42 {dimension_numbers = #tpu.dot_dimension_numbers<[1], [1], [0], [0], [0, 0, 1, 0], [], []>} : vector<16x8xf32>, vector<16x8xf32>, vector<16x16xf32> -> vector<16x16xf32>
    %55 = arith.addf %54, %1 : vector<16x16xf32>
    %cst_43 = arith.constant dense<0xFF800000> : vector<16xf32>
    %56 = vector.multi_reduction <maximumf>, %55, %cst_43 [1] : vector<16x16xf32> to vector<16xf32>
    %57 = vector.shape_cast %56 : vector<16xf32> to vector<16x1xf32>
    %58 = vector.broadcast %57 : vector<16x1xf32> to vector<16x16xf32>
    %59 = arith.subf %55, %58 : vector<16x16xf32>
    %60 = math.exp %59 : vector<16x16xf32>
    %cst_44 = arith.constant dense<0.000000e+00> : vector<16xf32>
    %61 = vector.multi_reduction <add>, %60, %cst_44 [1] : vector<16x16xf32> to vector<16xf32>
    %62 = vector.shape_cast %61 : vector<16xf32> to vector<16x1xf32>
    %63 = vector.broadcast %62 : vector<16x1xf32> to vector<16x16xf32>
    %64 = arith.divf %60, %63 : vector<16x16xf32>
    %cst_45 = arith.constant dense<0.000000e+00> : vector<16x8xf32>
    %65 = tpu.matmul %64, %53, %cst_45 {dimension_numbers = #tpu.dot_dimension_numbers<[1], [0], [0], [1], [0, 0, 1, 1], [], []>} : vector<16x16xf32>, vector<16x8xf32>, vector<16x8xf32> -> vector<16x8xf32>
    %66 = vector.extract_strided_slice %33 {offsets = [0, 0], sizes = [8, 32], strides = [1, 1]} : vector<32x32xf32> to vector<8x32xf32>
    %cst_46 = arith.constant dense<0.000000e+00> : vector<16x32xf32>
    %67 = tpu.matmul %65, %66, %cst_46 {dimension_numbers = #tpu.dot_dimension_numbers<[1], [0], [0], [1], [0, 0, 1, 1], [], []>} : vector<16x8xf32>, vector<8x32xf32>, vector<16x32xf32> -> vector<16x32xf32>
    %68 = vector.extract_strided_slice %40 {offsets = [0, 8], sizes = [16, 8], strides = [1, 1]} : vector<16x32xf32> to vector<16x8xf32>
    %69 = vector.extract_strided_slice %45 {offsets = [0, 8], sizes = [16, 8], strides = [1, 1]} : vector<16x32xf32> to vector<16x8xf32>
    %70 = vector.extract_strided_slice %50 {offsets = [0, 8], sizes = [16, 8], strides = [1, 1]} : vector<16x32xf32> to vector<16x8xf32>
    %cst_47 = arith.constant dense<0.000000e+00> : vector<16x16xf32>
    %71 = tpu.matmul %68, %69, %cst_47 {dimension_numbers = #tpu.dot_dimension_numbers<[1], [1], [0], [0], [0, 0, 1, 0], [], []>} : vector<16x8xf32>, vector<16x8xf32>, vector<16x16xf32> -> vector<16x16xf32>
    %72 = arith.addf %71, %1 : vector<16x16xf32>
    %cst_48 = arith.constant dense<0xFF800000> : vector<16xf32>
    %73 = vector.multi_reduction <maximumf>, %72, %cst_48 [1] : vector<16x16xf32> to vector<16xf32>
    %74 = vector.shape_cast %73 : vector<16xf32> to vector<16x1xf32>
    %75 = vector.broadcast %74 : vector<16x1xf32> to vector<16x16xf32>
    %76 = arith.subf %72, %75 : vector<16x16xf32>
    %77 = math.exp %76 : vector<16x16xf32>
    %cst_49 = arith.constant dense<0.000000e+00> : vector<16xf32>
    %78 = vector.multi_reduction <add>, %77, %cst_49 [1] : vector<16x16xf32> to vector<16xf32>
    %79 = vector.shape_cast %78 : vector<16xf32> to vector<16x1xf32>
    %80 = vector.broadcast %79 : vector<16x1xf32> to vector<16x16xf32>
    %81 = arith.divf %77, %80 : vector<16x16xf32>
    %cst_50 = arith.constant dense<0.000000e+00> : vector<16x8xf32>
    %82 = tpu.matmul %81, %70, %cst_50 {dimension_numbers = #tpu.dot_dimension_numbers<[1], [0], [0], [1], [0, 0, 1, 1], [], []>} : vector<16x16xf32>, vector<16x8xf32>, vector<16x8xf32> -> vector<16x8xf32>
    %83 = vector.extract_strided_slice %33 {offsets = [8, 0], sizes = [8, 32], strides = [1, 1]} : vector<32x32xf32> to vector<8x32xf32>
    %cst_51 = arith.constant dense<0.000000e+00> : vector<16x32xf32>
    %84 = tpu.matmul %82, %83, %cst_51 {dimension_numbers = #tpu.dot_dimension_numbers<[1], [0], [0], [1], [0, 0, 1, 1], [], []>} : vector<16x8xf32>, vector<8x32xf32>, vector<16x32xf32> -> vector<16x32xf32>
    %85 = arith.addf %67, %84 : vector<16x32xf32>
    %86 = vector.extract_strided_slice %40 {offsets = [0, 16], sizes = [16, 8], strides = [1, 1]} : vector<16x32xf32> to vector<16x8xf32>
    %87 = vector.extract_strided_slice %45 {offsets = [0, 16], sizes = [16, 8], strides = [1, 1]} : vector<16x32xf32> to vector<16x8xf32>
    %88 = vector.extract_strided_slice %50 {offsets = [0, 16], sizes = [16, 8], strides = [1, 1]} : vector<16x32xf32> to vector<16x8xf32>
    %cst_52 = arith.constant dense<0.000000e+00> : vector<16x16xf32>
    %89 = tpu.matmul %86, %87, %cst_52 {dimension_numbers = #tpu.dot_dimension_numbers<[1], [1], [0], [0], [0, 0, 1, 0], [], []>} : vector<16x8xf32>, vector<16x8xf32>, vector<16x16xf32> -> vector<16x16xf32>
    %90 = arith.addf %89, %1 : vector<16x16xf32>
    %cst_53 = arith.constant dense<0xFF800000> : vector<16xf32>
    %91 = vector.multi_reduction <maximumf>, %90, %cst_53 [1] : vector<16x16xf32> to vector<16xf32>
    %92 = vector.shape_cast %91 : vector<16xf32> to vector<16x1xf32>
    %93 = vector.broadcast %92 : vector<16x1xf32> to vector<16x16xf32>
    %94 = arith.subf %90, %93 : vector<16x16xf32>
    %95 = math.exp %94 : vector<16x16xf32>
    %cst_54 = arith.constant dense<0.000000e+00> : vector<16xf32>
    %96 = vector.multi_reduction <add>, %95, %cst_54 [1] : vector<16x16xf32> to vector<16xf32>
    %97 = vector.shape_cast %96 : vector<16xf32> to vector<16x1xf32>
    %98 = vector.broadcast %97 : vector<16x1xf32> to vector<16x16xf32>
    %99 = arith.divf %95, %98 : vector<16x16xf32>
    %cst_55 = arith.constant dense<0.000000e+00> : vector<16x8xf32>
    %100 = tpu.matmul %99, %88, %cst_55 {dimension_numbers = #tpu.dot_dimension_numbers<[1], [0], [0], [1], [0, 0, 1, 1], [], []>} : vector<16x16xf32>, vector<16x8xf32>, vector<16x8xf32> -> vector<16x8xf32>
    %101 = vector.extract_strided_slice %33 {offsets = [16, 0], sizes = [8, 32], strides = [1, 1]} : vector<32x32xf32> to vector<8x32xf32>
    %cst_56 = arith.constant dense<0.000000e+00> : vector<16x32xf32>
    %102 = tpu.matmul %100, %101, %cst_56 {dimension_numbers = #tpu.dot_dimension_numbers<[1], [0], [0], [1], [0, 0, 1, 1], [], []>} : vector<16x8xf32>, vector<8x32xf32>, vector<16x32xf32> -> vector<16x32xf32>
    %103 = arith.addf %85, %102 : vector<16x32xf32>
    %104 = vector.extract_strided_slice %40 {offsets = [0, 24], sizes = [16, 8], strides = [1, 1]} : vector<16x32xf32> to vector<16x8xf32>
    %105 = vector.extract_strided_slice %45 {offsets = [0, 24], sizes = [16, 8], strides = [1, 1]} : vector<16x32xf32> to vector<16x8xf32>
    %106 = vector.extract_strided_slice %50 {offsets = [0, 24], sizes = [16, 8], strides = [1, 1]} : vector<16x32xf32> to vector<16x8xf32>
    %cst_57 = arith.constant dense<0.000000e+00> : vector<16x16xf32>
    %107 = tpu.matmul %104, %105, %cst_57 {dimension_numbers = #tpu.dot_dimension_numbers<[1], [1], [0], [0], [0, 0, 1, 0], [], []>} : vector<16x8xf32>, vector<16x8xf32>, vector<16x16xf32> -> vector<16x16xf32>
    %108 = arith.addf %107, %1 : vector<16x16xf32>
    %cst_58 = arith.constant dense<0xFF800000> : vector<16xf32>
    %109 = vector.multi_reduction <maximumf>, %108, %cst_58 [1] : vector<16x16xf32> to vector<16xf32>
    %110 = vector.shape_cast %109 : vector<16xf32> to vector<16x1xf32>
    %111 = vector.broadcast %110 : vector<16x1xf32> to vector<16x16xf32>
    %112 = arith.subf %108, %111 : vector<16x16xf32>
    %113 = math.exp %112 : vector<16x16xf32>
    %cst_59 = arith.constant dense<0.000000e+00> : vector<16xf32>
    %114 = vector.multi_reduction <add>, %113, %cst_59 [1] : vector<16x16xf32> to vector<16xf32>
    %115 = vector.shape_cast %114 : vector<16xf32> to vector<16x1xf32>
    %116 = vector.broadcast %115 : vector<16x1xf32> to vector<16x16xf32>
    %117 = arith.divf %113, %116 : vector<16x16xf32>
    %cst_60 = arith.constant dense<0.000000e+00> : vector<16x8xf32>
    %118 = tpu.matmul %117, %106, %cst_60 {dimension_numbers = #tpu.dot_dimension_numbers<[1], [0], [0], [1], [0, 0, 1, 1], [], []>} : vector<16x16xf32>, vector<16x8xf32>, vector<16x8xf32> -> vector<16x8xf32>
    %119 = vector.extract_strided_slice %33 {offsets = [24, 0], sizes = [8, 32], strides = [1, 1]} : vector<32x32xf32> to vector<8x32xf32>
    %cst_61 = arith.constant dense<0.000000e+00> : vector<16x32xf32>
    %120 = tpu.matmul %118, %119, %cst_61 {dimension_numbers = #tpu.dot_dimension_numbers<[1], [0], [0], [1], [0, 0, 1, 1], [], []>} : vector<16x8xf32>, vector<8x32xf32>, vector<16x32xf32> -> vector<16x32xf32>
    %121 = arith.addf %103, %120 : vector<16x32xf32>
    %122 = arith.addf %0, %121 : vector<16x32xf32>
    %c0_62 = arith.constant 0 : index
    %c3_63 = arith.constant 3 : index
    %c0_64 = arith.constant 0 : index
    %c0_65 = arith.constant 0 : index
    %123 = vector.load %arg5[%c0_62, %c3_63, %c0_64, %c0_65] : memref<2x4x1x32xf32, #tpu.memory_space<vmem>>, vector<1x1x1x32xf32>
    %124 = vector.shape_cast %123 : vector<1x1x1x32xf32> to vector<1x32xf32>
    %125 = vector.broadcast %124 : vector<1x32xf32> to vector<16x32xf32>
    %126 = arith.addf %122, %125 : vector<16x32xf32>
    %c1_66 = arith.constant 1 : index
    %c0_67 = arith.constant 0 : index
    %c0_68 = arith.constant 0 : index
    %127 = vector.load %arg2[%c1_66, %c0_67, %c0_68] : memref<4x16x32xf32, #tpu.memory_space<vmem>>, vector<1x16x32xf32>
    %128 = vector.shape_cast %127 : vector<1x16x32xf32> to vector<16x32xf32>
    %c1_69 = arith.constant 1 : index
    %c0_70 = arith.constant 0 : index
    %c0_71 = arith.constant 0 : index
    %129 = vector.load %arg3[%c1_69, %c0_70, %c0_71] : memref<4x16x32xf32, #tpu.memory_space<vmem>>, vector<1x16x32xf32>
    %130 = vector.shape_cast %129 : vector<1x16x32xf32> to vector<16x32xf32>
    %cst_72 = arith.constant dense<0.000000e+00> : vector<16xf32>
    %131 = vector.multi_reduction <add>, %126, %cst_72 [1] : vector<16x32xf32> to vector<16xf32>
    %132 = vector.shape_cast %131 : vector<16xf32> to vector<16x1xf32>
    %cst_73 = arith.constant 3.200000e+01 : f32
    %133 = vector.broadcast %cst_73 : f32 to vector<16x1xf32>
    %134 = arith.divf %132, %133 : vector<16x1xf32>
    %135 = vector.broadcast %134 : vector<16x1xf32> to vector<16x32xf32>
    %136 = arith.subf %126, %135 : vector<16x32xf32>
    %137 = arith.mulf %136, %136 : vector<16x32xf32>
    %cst_74 = arith.constant dense<0.000000e+00> : vector<16xf32>
    %138 = vector.multi_reduction <add>, %137, %cst_74 [1] : vector<16x32xf32> to vector<16xf32>
    %139 = vector.shape_cast %138 : vector<16xf32> to vector<16x1xf32>
    %cst_75 = arith.constant 3.200000e+01 : f32
    %140 = vector.broadcast %cst_75 : f32 to vector<16x1xf32>
    %141 = arith.divf %139, %140 : vector<16x1xf32>
    %142 = vector.broadcast %134 : vector<16x1xf32> to vector<16x32xf32>
    %143 = arith.subf %126, %142 : vector<16x32xf32>
    %cst_76 = arith.constant 9.99999974E-6 : f32
    %144 = vector.broadcast %cst_76 : f32 to vector<16x1xf32>
    %145 = arith.addf %141, %144 : vector<16x1xf32>
    %146 = math.rsqrt %145 : vector<16x1xf32>
    %147 = vector.broadcast %146 : vector<16x1xf32> to vector<16x32xf32>
    %148 = arith.mulf %143, %147 : vector<16x32xf32>
    %149 = arith.mulf %148, %128 : vector<16x32xf32>
    %150 = arith.addf %149, %130 : vector<16x32xf32>
    %c0_77 = arith.constant 0 : index
    %c0_78 = arith.constant 0 : index
    %c0_79 = arith.constant 0 : index
    %151 = vector.load %arg6[%c0_77, %c0_78, %c0_79] : memref<2x32x128xf32, #tpu.memory_space<vmem>>, vector<1x32x128xf32>
    %152 = vector.shape_cast %151 : vector<1x32x128xf32> to vector<32x128xf32>
    %cst_80 = arith.constant dense<0.000000e+00> : vector<16x128xf32>
    %153 = tpu.matmul %150, %152, %cst_80 {dimension_numbers = #tpu.dot_dimension_numbers<[1], [0], [0], [1], [0, 0, 1, 1], [], []>} : vector<16x32xf32>, vector<32x128xf32>, vector<16x128xf32> -> vector<16x128xf32>
    %c0_81 = arith.constant 0 : index
    %c0_82 = arith.constant 0 : index
    %c0_83 = arith.constant 0 : index
    %154 = vector.load %arg7[%c0_81, %c0_82, %c0_83] : memref<2x1x128xf32, #tpu.memory_space<vmem>>, vector<1x1x128xf32>
    %155 = vector.shape_cast %154 : vector<1x1x128xf32> to vector<1x128xf32>
    %156 = vector.broadcast %155 : vector<1x128xf32> to vector<16x128xf32>
    %157 = arith.addf %153, %156 : vector<16x128xf32>
    %cst_84 = arith.constant 0.000000e+00 : f32
    %158 = vector.broadcast %cst_84 : f32 to vector<16x128xf32>
    %159 = arith.maximumf %157, %158 : vector<16x128xf32>
    %c0_85 = arith.constant 0 : index
    %c0_86 = arith.constant 0 : index
    %c0_87 = arith.constant 0 : index
    %160 = vector.load %arg8[%c0_85, %c0_86, %c0_87] : memref<2x128x32xf32, #tpu.memory_space<vmem>>, vector<1x128x32xf32>
    %161 = vector.shape_cast %160 : vector<1x128x32xf32> to vector<128x32xf32>
    %cst_88 = arith.constant dense<0.000000e+00> : vector<16x32xf32>
    %162 = tpu.matmul %159, %161, %cst_88 {dimension_numbers = #tpu.dot_dimension_numbers<[1], [0], [0], [1], [0, 0, 1, 1], [], []>} : vector<16x128xf32>, vector<128x32xf32>, vector<16x32xf32> -> vector<16x32xf32>
    %163 = arith.addf %126, %162 : vector<16x32xf32>
    %c0_89 = arith.constant 0 : index
    %c0_90 = arith.constant 0 : index
    %c0_91 = arith.constant 0 : index
    %164 = vector.load %arg9[%c0_89, %c0_90, %c0_91] : memref<2x1x32xf32, #tpu.memory_space<vmem>>, vector<1x1x32xf32>
    %165 = vector.shape_cast %164 : vector<1x1x32xf32> to vector<1x32xf32>
    %166 = vector.broadcast %165 : vector<1x32xf32> to vector<16x32xf32>
    %167 = arith.addf %163, %166 : vector<16x32xf32>
    %c2_92 = arith.constant 2 : index
    %c0_93 = arith.constant 0 : index
    %c0_94 = arith.constant 0 : index
    %168 = vector.load %arg2[%c2_92, %c0_93, %c0_94] : memref<4x16x32xf32, #tpu.memory_space<vmem>>, vector<1x16x32xf32>
    %169 = vector.shape_cast %168 : vector<1x16x32xf32> to vector<16x32xf32>
    %c2_95 = arith.constant 2 : index
    %c0_96 = arith.constant 0 : index
    %c0_97 = arith.constant 0 : index
    %170 = vector.load %arg3[%c2_95, %c0_96, %c0_97] : memref<4x16x32xf32, #tpu.memory_space<vmem>>, vector<1x16x32xf32>
    %171 = vector.shape_cast %170 : vector<1x16x32xf32> to vector<16x32xf32>
    %cst_98 = arith.constant dense<0.000000e+00> : vector<16xf32>
    %172 = vector.multi_reduction <add>, %167, %cst_98 [1] : vector<16x32xf32> to vector<16xf32>
    %173 = vector.shape_cast %172 : vector<16xf32> to vector<16x1xf32>
    %cst_99 = arith.constant 3.200000e+01 : f32
    %174 = vector.broadcast %cst_99 : f32 to vector<16x1xf32>
    %175 = arith.divf %173, %174 : vector<16x1xf32>
    %176 = vector.broadcast %175 : vector<16x1xf32> to vector<16x32xf32>
    %177 = arith.subf %167, %176 : vector<16x32xf32>
    %178 = arith.mulf %177, %177 : vector<16x32xf32>
    %cst_100 = arith.constant dense<0.000000e+00> : vector<16xf32>
    %179 = vector.multi_reduction <add>, %178, %cst_100 [1] : vector<16x32xf32> to vector<16xf32>
    %180 = vector.shape_cast %179 : vector<16xf32> to vector<16x1xf32>
    %cst_101 = arith.constant 3.200000e+01 : f32
    %181 = vector.broadcast %cst_101 : f32 to vector<16x1xf32>
    %182 = arith.divf %180, %181 : vector<16x1xf32>
    %183 = vector.broadcast %175 : vector<16x1xf32> to vector<16x32xf32>
    %184 = arith.subf %167, %183 : vector<16x32xf32>
    %cst_102 = arith.constant 9.99999974E-6 : f32
    %185 = vector.broadcast %cst_102 : f32 to vector<16x1xf32>
    %186 = arith.addf %182, %185 : vector<16x1xf32>
    %187 = math.rsqrt %186 : vector<16x1xf32>
    %188 = vector.broadcast %187 : vector<16x1xf32> to vector<16x32xf32>
    %189 = arith.mulf %184, %188 : vector<16x32xf32>
    %190 = arith.mulf %189, %169 : vector<16x32xf32>
    %191 = arith.addf %190, %171 : vector<16x32xf32>
    %c1_103 = arith.constant 1 : index
    %c0_104 = arith.constant 0 : index
    %c0_105 = arith.constant 0 : index
    %c0_106 = arith.constant 0 : index
    %192 = vector.load %arg4[%c1_103, %c0_104, %c0_105, %c0_106] : memref<2x4x32x32xf32, #tpu.memory_space<vmem>>, vector<1x1x32x32xf32>
    %193 = vector.shape_cast %192 : vector<1x1x32x32xf32> to vector<32x32xf32>
    %c1_107 = arith.constant 1 : index
    %c1_108 = arith.constant 1 : index
    %c0_109 = arith.constant 0 : index
    %c0_110 = arith.constant 0 : index
    %194 = vector.load %arg4[%c1_107, %c1_108, %c0_109, %c0_110] : memref<2x4x32x32xf32, #tpu.memory_space<vmem>>, vector<1x1x32x32xf32>
    %195 = vector.shape_cast %194 : vector<1x1x32x32xf32> to vector<32x32xf32>
    %c1_111 = arith.constant 1 : index
    %c2_112 = arith.constant 2 : index
    %c0_113 = arith.constant 0 : index
    %c0_114 = arith.constant 0 : index
    %196 = vector.load %arg4[%c1_111, %c2_112, %c0_113, %c0_114] : memref<2x4x32x32xf32, #tpu.memory_space<vmem>>, vector<1x1x32x32xf32>
    %197 = vector.shape_cast %196 : vector<1x1x32x32xf32> to vector<32x32xf32>
    %c1_115 = arith.constant 1 : index
    %c3_116 = arith.constant 3 : index
    %c0_117 = arith.constant 0 : index
    %c0_118 = arith.constant 0 : index
    %198 = vector.load %arg4[%c1_115, %c3_116, %c0_117, %c0_118] : memref<2x4x32x32xf32, #tpu.memory_space<vmem>>, vector<1x1x32x32xf32>
    %199 = vector.shape_cast %198 : vector<1x1x32x32xf32> to vector<32x32xf32>
    %cst_119 = arith.constant dense<0.000000e+00> : vector<16x32xf32>
    %200 = tpu.matmul %191, %193, %cst_119 {dimension_numbers = #tpu.dot_dimension_numbers<[1], [0], [0], [1], [0, 0, 1, 1], [], []>} : vector<16x32xf32>, vector<32x32xf32>, vector<16x32xf32> -> vector<16x32xf32>
    %c1_120 = arith.constant 1 : index
    %c0_121 = arith.constant 0 : index
    %c0_122 = arith.constant 0 : index
    %c0_123 = arith.constant 0 : index
    %201 = vector.load %arg5[%c1_120, %c0_121, %c0_122, %c0_123] : memref<2x4x1x32xf32, #tpu.memory_space<vmem>>, vector<1x1x1x32xf32>
    %202 = vector.shape_cast %201 : vector<1x1x1x32xf32> to vector<1x32xf32>
    %203 = vector.broadcast %202 : vector<1x32xf32> to vector<16x32xf32>
    %204 = arith.addf %200, %203 : vector<16x32xf32>
    %cst_124 = arith.constant 0.353553385 : f32
    %205 = vector.broadcast %cst_124 : f32 to vector<16x32xf32>
    %206 = arith.mulf %204, %205 : vector<16x32xf32>
    %cst_125 = arith.constant dense<0.000000e+00> : vector<16x32xf32>
    %207 = tpu.matmul %191, %195, %cst_125 {dimension_numbers = #tpu.dot_dimension_numbers<[1], [0], [0], [1], [0, 0, 1, 1], [], []>} : vector<16x32xf32>, vector<32x32xf32>, vector<16x32xf32> -> vector<16x32xf32>
    %c1_126 = arith.constant 1 : index
    %c1_127 = arith.constant 1 : index
    %c0_128 = arith.constant 0 : index
    %c0_129 = arith.constant 0 : index
    %208 = vector.load %arg5[%c1_126, %c1_127, %c0_128, %c0_129] : memref<2x4x1x32xf32, #tpu.memory_space<vmem>>, vector<1x1x1x32xf32>
    %209 = vector.shape_cast %208 : vector<1x1x1x32xf32> to vector<1x32xf32>
    %210 = vector.broadcast %209 : vector<1x32xf32> to vector<16x32xf32>
    %211 = arith.addf %207, %210 : vector<16x32xf32>
    %cst_130 = arith.constant dense<0.000000e+00> : vector<16x32xf32>
    %212 = tpu.matmul %191, %197, %cst_130 {dimension_numbers = #tpu.dot_dimension_numbers<[1], [0], [0], [1], [0, 0, 1, 1], [], []>} : vector<16x32xf32>, vector<32x32xf32>, vector<16x32xf32> -> vector<16x32xf32>
    %c1_131 = arith.constant 1 : index
    %c2_132 = arith.constant 2 : index
    %c0_133 = arith.constant 0 : index
    %c0_134 = arith.constant 0 : index
    %213 = vector.load %arg5[%c1_131, %c2_132, %c0_133, %c0_134] : memref<2x4x1x32xf32, #tpu.memory_space<vmem>>, vector<1x1x1x32xf32>
    %214 = vector.shape_cast %213 : vector<1x1x1x32xf32> to vector<1x32xf32>
    %215 = vector.broadcast %214 : vector<1x32xf32> to vector<16x32xf32>
    %216 = arith.addf %212, %215 : vector<16x32xf32>
    %217 = vector.extract_strided_slice %206 {offsets = [0, 0], sizes = [16, 8], strides = [1, 1]} : vector<16x32xf32> to vector<16x8xf32>
    %218 = vector.extract_strided_slice %211 {offsets = [0, 0], sizes = [16, 8], strides = [1, 1]} : vector<16x32xf32> to vector<16x8xf32>
    %219 = vector.extract_strided_slice %216 {offsets = [0, 0], sizes = [16, 8], strides = [1, 1]} : vector<16x32xf32> to vector<16x8xf32>
    %cst_135 = arith.constant dense<0.000000e+00> : vector<16x16xf32>
    %220 = tpu.matmul %217, %218, %cst_135 {dimension_numbers = #tpu.dot_dimension_numbers<[1], [1], [0], [0], [0, 0, 1, 0], [], []>} : vector<16x8xf32>, vector<16x8xf32>, vector<16x16xf32> -> vector<16x16xf32>
    %221 = arith.addf %220, %1 : vector<16x16xf32>
    %cst_136 = arith.constant dense<0xFF800000> : vector<16xf32>
    %222 = vector.multi_reduction <maximumf>, %221, %cst_136 [1] : vector<16x16xf32> to vector<16xf32>
    %223 = vector.shape_cast %222 : vector<16xf32> to vector<16x1xf32>
    %224 = vector.broadcast %223 : vector<16x1xf32> to vector<16x16xf32>
    %225 = arith.subf %221, %224 : vector<16x16xf32>
    %226 = math.exp %225 : vector<16x16xf32>
    %cst_137 = arith.constant dense<0.000000e+00> : vector<16xf32>
    %227 = vector.multi_reduction <add>, %226, %cst_137 [1] : vector<16x16xf32> to vector<16xf32>
    %228 = vector.shape_cast %227 : vector<16xf32> to vector<16x1xf32>
    %229 = vector.broadcast %228 : vector<16x1xf32> to vector<16x16xf32>
    %230 = arith.divf %226, %229 : vector<16x16xf32>
    %cst_138 = arith.constant dense<0.000000e+00> : vector<16x8xf32>
    %231 = tpu.matmul %230, %219, %cst_138 {dimension_numbers = #tpu.dot_dimension_numbers<[1], [0], [0], [1], [0, 0, 1, 1], [], []>} : vector<16x16xf32>, vector<16x8xf32>, vector<16x8xf32> -> vector<16x8xf32>
    %232 = vector.extract_strided_slice %199 {offsets = [0, 0], sizes = [8, 32], strides = [1, 1]} : vector<32x32xf32> to vector<8x32xf32>
    %cst_139 = arith.constant dense<0.000000e+00> : vector<16x32xf32>
    %233 = tpu.matmul %231, %232, %cst_139 {dimension_numbers = #tpu.dot_dimension_numbers<[1], [0], [0], [1], [0, 0, 1, 1], [], []>} : vector<16x8xf32>, vector<8x32xf32>, vector<16x32xf32> -> vector<16x32xf32>
    %234 = vector.extract_strided_slice %206 {offsets = [0, 8], sizes = [16, 8], strides = [1, 1]} : vector<16x32xf32> to vector<16x8xf32>
    %235 = vector.extract_strided_slice %211 {offsets = [0, 8], sizes = [16, 8], strides = [1, 1]} : vector<16x32xf32> to vector<16x8xf32>
    %236 = vector.extract_strided_slice %216 {offsets = [0, 8], sizes = [16, 8], strides = [1, 1]} : vector<16x32xf32> to vector<16x8xf32>
    %cst_140 = arith.constant dense<0.000000e+00> : vector<16x16xf32>
    %237 = tpu.matmul %234, %235, %cst_140 {dimension_numbers = #tpu.dot_dimension_numbers<[1], [1], [0], [0], [0, 0, 1, 0], [], []>} : vector<16x8xf32>, vector<16x8xf32>, vector<16x16xf32> -> vector<16x16xf32>
    %238 = arith.addf %237, %1 : vector<16x16xf32>
    %cst_141 = arith.constant dense<0xFF800000> : vector<16xf32>
    %239 = vector.multi_reduction <maximumf>, %238, %cst_141 [1] : vector<16x16xf32> to vector<16xf32>
    %240 = vector.shape_cast %239 : vector<16xf32> to vector<16x1xf32>
    %241 = vector.broadcast %240 : vector<16x1xf32> to vector<16x16xf32>
    %242 = arith.subf %238, %241 : vector<16x16xf32>
    %243 = math.exp %242 : vector<16x16xf32>
    %cst_142 = arith.constant dense<0.000000e+00> : vector<16xf32>
    %244 = vector.multi_reduction <add>, %243, %cst_142 [1] : vector<16x16xf32> to vector<16xf32>
    %245 = vector.shape_cast %244 : vector<16xf32> to vector<16x1xf32>
    %246 = vector.broadcast %245 : vector<16x1xf32> to vector<16x16xf32>
    %247 = arith.divf %243, %246 : vector<16x16xf32>
    %cst_143 = arith.constant dense<0.000000e+00> : vector<16x8xf32>
    %248 = tpu.matmul %247, %236, %cst_143 {dimension_numbers = #tpu.dot_dimension_numbers<[1], [0], [0], [1], [0, 0, 1, 1], [], []>} : vector<16x16xf32>, vector<16x8xf32>, vector<16x8xf32> -> vector<16x8xf32>
    %249 = vector.extract_strided_slice %199 {offsets = [8, 0], sizes = [8, 32], strides = [1, 1]} : vector<32x32xf32> to vector<8x32xf32>
    %cst_144 = arith.constant dense<0.000000e+00> : vector<16x32xf32>
    %250 = tpu.matmul %248, %249, %cst_144 {dimension_numbers = #tpu.dot_dimension_numbers<[1], [0], [0], [1], [0, 0, 1, 1], [], []>} : vector<16x8xf32>, vector<8x32xf32>, vector<16x32xf32> -> vector<16x32xf32>
    %251 = arith.addf %233, %250 : vector<16x32xf32>
    %252 = vector.extract_strided_slice %206 {offsets = [0, 16], sizes = [16, 8], strides = [1, 1]} : vector<16x32xf32> to vector<16x8xf32>
    %253 = vector.extract_strided_slice %211 {offsets = [0, 16], sizes = [16, 8], strides = [1, 1]} : vector<16x32xf32> to vector<16x8xf32>
    %254 = vector.extract_strided_slice %216 {offsets = [0, 16], sizes = [16, 8], strides = [1, 1]} : vector<16x32xf32> to vector<16x8xf32>
    %cst_145 = arith.constant dense<0.000000e+00> : vector<16x16xf32>
    %255 = tpu.matmul %252, %253, %cst_145 {dimension_numbers = #tpu.dot_dimension_numbers<[1], [1], [0], [0], [0, 0, 1, 0], [], []>} : vector<16x8xf32>, vector<16x8xf32>, vector<16x16xf32> -> vector<16x16xf32>
    %256 = arith.addf %255, %1 : vector<16x16xf32>
    %cst_146 = arith.constant dense<0xFF800000> : vector<16xf32>
    %257 = vector.multi_reduction <maximumf>, %256, %cst_146 [1] : vector<16x16xf32> to vector<16xf32>
    %258 = vector.shape_cast %257 : vector<16xf32> to vector<16x1xf32>
    %259 = vector.broadcast %258 : vector<16x1xf32> to vector<16x16xf32>
    %260 = arith.subf %256, %259 : vector<16x16xf32>
    %261 = math.exp %260 : vector<16x16xf32>
    %cst_147 = arith.constant dense<0.000000e+00> : vector<16xf32>
    %262 = vector.multi_reduction <add>, %261, %cst_147 [1] : vector<16x16xf32> to vector<16xf32>
    %263 = vector.shape_cast %262 : vector<16xf32> to vector<16x1xf32>
    %264 = vector.broadcast %263 : vector<16x1xf32> to vector<16x16xf32>
    %265 = arith.divf %261, %264 : vector<16x16xf32>
    %cst_148 = arith.constant dense<0.000000e+00> : vector<16x8xf32>
    %266 = tpu.matmul %265, %254, %cst_148 {dimension_numbers = #tpu.dot_dimension_numbers<[1], [0], [0], [1], [0, 0, 1, 1], [], []>} : vector<16x16xf32>, vector<16x8xf32>, vector<16x8xf32> -> vector<16x8xf32>
    %267 = vector.extract_strided_slice %199 {offsets = [16, 0], sizes = [8, 32], strides = [1, 1]} : vector<32x32xf32> to vector<8x32xf32>
    %cst_149 = arith.constant dense<0.000000e+00> : vector<16x32xf32>
    %268 = tpu.matmul %266, %267, %cst_149 {dimension_numbers = #tpu.dot_dimension_numbers<[1], [0], [0], [1], [0, 0, 1, 1], [], []>} : vector<16x8xf32>, vector<8x32xf32>, vector<16x32xf32> -> vector<16x32xf32>
    %269 = arith.addf %251, %268 : vector<16x32xf32>
    %270 = vector.extract_strided_slice %206 {offsets = [0, 24], sizes = [16, 8], strides = [1, 1]} : vector<16x32xf32> to vector<16x8xf32>
    %271 = vector.extract_strided_slice %211 {offsets = [0, 24], sizes = [16, 8], strides = [1, 1]} : vector<16x32xf32> to vector<16x8xf32>
    %272 = vector.extract_strided_slice %216 {offsets = [0, 24], sizes = [16, 8], strides = [1, 1]} : vector<16x32xf32> to vector<16x8xf32>
    %cst_150 = arith.constant dense<0.000000e+00> : vector<16x16xf32>
    %273 = tpu.matmul %270, %271, %cst_150 {dimension_numbers = #tpu.dot_dimension_numbers<[1], [1], [0], [0], [0, 0, 1, 0], [], []>} : vector<16x8xf32>, vector<16x8xf32>, vector<16x16xf32> -> vector<16x16xf32>
    %274 = arith.addf %273, %1 : vector<16x16xf32>
    %cst_151 = arith.constant dense<0xFF800000> : vector<16xf32>
    %275 = vector.multi_reduction <maximumf>, %274, %cst_151 [1] : vector<16x16xf32> to vector<16xf32>
    %276 = vector.shape_cast %275 : vector<16xf32> to vector<16x1xf32>
    %277 = vector.broadcast %276 : vector<16x1xf32> to vector<16x16xf32>
    %278 = arith.subf %274, %277 : vector<16x16xf32>
    %279 = math.exp %278 : vector<16x16xf32>
    %cst_152 = arith.constant dense<0.000000e+00> : vector<16xf32>
    %280 = vector.multi_reduction <add>, %279, %cst_152 [1] : vector<16x16xf32> to vector<16xf32>
    %281 = vector.shape_cast %280 : vector<16xf32> to vector<16x1xf32>
    %282 = vector.broadcast %281 : vector<16x1xf32> to vector<16x16xf32>
    %283 = arith.divf %279, %282 : vector<16x16xf32>
    %cst_153 = arith.constant dense<0.000000e+00> : vector<16x8xf32>
    %284 = tpu.matmul %283, %272, %cst_153 {dimension_numbers = #tpu.dot_dimension_numbers<[1], [0], [0], [1], [0, 0, 1, 1], [], []>} : vector<16x16xf32>, vector<16x8xf32>, vector<16x8xf32> -> vector<16x8xf32>
    %285 = vector.extract_strided_slice %199 {offsets = [24, 0], sizes = [8, 32], strides = [1, 1]} : vector<32x32xf32> to vector<8x32xf32>
    %cst_154 = arith.constant dense<0.000000e+00> : vector<16x32xf32>
    %286 = tpu.matmul %284, %285, %cst_154 {dimension_numbers = #tpu.dot_dimension_numbers<[1], [0], [0], [1], [0, 0, 1, 1], [], []>} : vector<16x8xf32>, vector<8x32xf32>, vector<16x32xf32> -> vector<16x32xf32>
    %287 = arith.addf %269, %286 : vector<16x32xf32>
    %288 = arith.addf %167, %287 : vector<16x32xf32>
    %c1_155 = arith.constant 1 : index
    %c3_156 = arith.constant 3 : index
    %c0_157 = arith.constant 0 : index
    %c0_158 = arith.constant 0 : index
    %289 = vector.load %arg5[%c1_155, %c3_156, %c0_157, %c0_158] : memref<2x4x1x32xf32, #tpu.memory_space<vmem>>, vector<1x1x1x32xf32>
    %290 = vector.shape_cast %289 : vector<1x1x1x32xf32> to vector<1x32xf32>
    %291 = vector.broadcast %290 : vector<1x32xf32> to vector<16x32xf32>
    %292 = arith.addf %288, %291 : vector<16x32xf32>
    %c3_159 = arith.constant 3 : index
    %c0_160 = arith.constant 0 : index
    %c0_161 = arith.constant 0 : index
    %293 = vector.load %arg2[%c3_159, %c0_160, %c0_161] : memref<4x16x32xf32, #tpu.memory_space<vmem>>, vector<1x16x32xf32>
    %294 = vector.shape_cast %293 : vector<1x16x32xf32> to vector<16x32xf32>
    %c3_162 = arith.constant 3 : index
    %c0_163 = arith.constant 0 : index
    %c0_164 = arith.constant 0 : index
    %295 = vector.load %arg3[%c3_162, %c0_163, %c0_164] : memref<4x16x32xf32, #tpu.memory_space<vmem>>, vector<1x16x32xf32>
    %296 = vector.shape_cast %295 : vector<1x16x32xf32> to vector<16x32xf32>
    %cst_165 = arith.constant dense<0.000000e+00> : vector<16xf32>
    %297 = vector.multi_reduction <add>, %292, %cst_165 [1] : vector<16x32xf32> to vector<16xf32>
    %298 = vector.shape_cast %297 : vector<16xf32> to vector<16x1xf32>
    %cst_166 = arith.constant 3.200000e+01 : f32
    %299 = vector.broadcast %cst_166 : f32 to vector<16x1xf32>
    %300 = arith.divf %298, %299 : vector<16x1xf32>
    %301 = vector.broadcast %300 : vector<16x1xf32> to vector<16x32xf32>
    %302 = arith.subf %292, %301 : vector<16x32xf32>
    %303 = arith.mulf %302, %302 : vector<16x32xf32>
    %cst_167 = arith.constant dense<0.000000e+00> : vector<16xf32>
    %304 = vector.multi_reduction <add>, %303, %cst_167 [1] : vector<16x32xf32> to vector<16xf32>
    %305 = vector.shape_cast %304 : vector<16xf32> to vector<16x1xf32>
    %cst_168 = arith.constant 3.200000e+01 : f32
    %306 = vector.broadcast %cst_168 : f32 to vector<16x1xf32>
    %307 = arith.divf %305, %306 : vector<16x1xf32>
    %308 = vector.broadcast %300 : vector<16x1xf32> to vector<16x32xf32>
    %309 = arith.subf %292, %308 : vector<16x32xf32>
    %cst_169 = arith.constant 9.99999974E-6 : f32
    %310 = vector.broadcast %cst_169 : f32 to vector<16x1xf32>
    %311 = arith.addf %307, %310 : vector<16x1xf32>
    %312 = math.rsqrt %311 : vector<16x1xf32>
    %313 = vector.broadcast %312 : vector<16x1xf32> to vector<16x32xf32>
    %314 = arith.mulf %309, %313 : vector<16x32xf32>
    %315 = arith.mulf %314, %294 : vector<16x32xf32>
    %316 = arith.addf %315, %296 : vector<16x32xf32>
    %c1_170 = arith.constant 1 : index
    %c0_171 = arith.constant 0 : index
    %c0_172 = arith.constant 0 : index
    %317 = vector.load %arg6[%c1_170, %c0_171, %c0_172] : memref<2x32x128xf32, #tpu.memory_space<vmem>>, vector<1x32x128xf32>
    %318 = vector.shape_cast %317 : vector<1x32x128xf32> to vector<32x128xf32>
    %cst_173 = arith.constant dense<0.000000e+00> : vector<16x128xf32>
    %319 = tpu.matmul %316, %318, %cst_173 {dimension_numbers = #tpu.dot_dimension_numbers<[1], [0], [0], [1], [0, 0, 1, 1], [], []>} : vector<16x32xf32>, vector<32x128xf32>, vector<16x128xf32> -> vector<16x128xf32>
    %c1_174 = arith.constant 1 : index
    %c0_175 = arith.constant 0 : index
    %c0_176 = arith.constant 0 : index
    %320 = vector.load %arg7[%c1_174, %c0_175, %c0_176] : memref<2x1x128xf32, #tpu.memory_space<vmem>>, vector<1x1x128xf32>
    %321 = vector.shape_cast %320 : vector<1x1x128xf32> to vector<1x128xf32>
    %322 = vector.broadcast %321 : vector<1x128xf32> to vector<16x128xf32>
    %323 = arith.addf %319, %322 : vector<16x128xf32>
    %cst_177 = arith.constant 0.000000e+00 : f32
    %324 = vector.broadcast %cst_177 : f32 to vector<16x128xf32>
    %325 = arith.maximumf %323, %324 : vector<16x128xf32>
    %c1_178 = arith.constant 1 : index
    %c0_179 = arith.constant 0 : index
    %c0_180 = arith.constant 0 : index
    %326 = vector.load %arg8[%c1_178, %c0_179, %c0_180] : memref<2x128x32xf32, #tpu.memory_space<vmem>>, vector<1x128x32xf32>
    %327 = vector.shape_cast %326 : vector<1x128x32xf32> to vector<128x32xf32>
    %cst_181 = arith.constant dense<0.000000e+00> : vector<16x32xf32>
    %328 = tpu.matmul %325, %327, %cst_181 {dimension_numbers = #tpu.dot_dimension_numbers<[1], [0], [0], [1], [0, 0, 1, 1], [], []>} : vector<16x128xf32>, vector<128x32xf32>, vector<16x32xf32> -> vector<16x32xf32>
    %329 = arith.addf %292, %328 : vector<16x32xf32>
    %c1_182 = arith.constant 1 : index
    %c0_183 = arith.constant 0 : index
    %c0_184 = arith.constant 0 : index
    %330 = vector.load %arg9[%c1_182, %c0_183, %c0_184] : memref<2x1x32xf32, #tpu.memory_space<vmem>>, vector<1x1x32xf32>
    %331 = vector.shape_cast %330 : vector<1x1x32xf32> to vector<1x32xf32>
    %332 = vector.broadcast %331 : vector<1x32xf32> to vector<16x32xf32>
    %333 = arith.addf %329, %332 : vector<16x32xf32>
    %c0_185 = arith.constant 0 : index
    %c0_186 = arith.constant 0 : index
    %334 = vector.load %arg10[%c0_185, %c0_186] : memref<32x16xf32, #tpu.memory_space<vmem>>, vector<32x16xf32>
    %cst_187 = arith.constant dense<0.000000e+00> : vector<16x16xf32>
    %335 = tpu.matmul %333, %334, %cst_187 {dimension_numbers = #tpu.dot_dimension_numbers<[1], [0], [0], [1], [0, 0, 1, 1], [], []>} : vector<16x32xf32>, vector<32x16xf32>, vector<16x16xf32> -> vector<16x16xf32>
    %c0_188 = arith.constant 0 : index
    %c0_189 = arith.constant 0 : index
    %336 = vector.load %arg11[%c0_188, %c0_189] : memref<1x16xf32, #tpu.memory_space<vmem>>, vector<1x16xf32>
    %337 = vector.broadcast %336 : vector<1x16xf32> to vector<16x16xf32>
    %338 = arith.addf %335, %337 : vector<16x16xf32>
    %c0_190 = arith.constant 0 : index
    %c0_191 = arith.constant 0 : index
    %339 = vector.load %arg12[%c0_190, %c0_191] : memref<16x16xf32, #tpu.memory_space<vmem>>, vector<16x16xf32>
    tpu.vector_store %arg12[%c0_190, %c0_191], %338 {strides = array<i32>} : memref<16x16xf32, #tpu.memory_space<vmem>>, vector<16x16xf32>,
    return
  }
}

</mosaic_0001>

<llo_original>
// kernel: tpu_custom_call.1
$region0: #{tpu_custom_call.1}
  #allocation0 [shape = 'u32[]', space=smem, size = 0x4, offset = 0x4, fixed_abs, tag = 'smem constant byte address 0x4 - core index']
  #allocation1 [shape = 'u32[144,128]{1,0:T(1,128)}', space=vmem, size = 0x12000, scoped, tag = 'internal scratch']
  %s0 = inlined_call_operand.hbm [shape: f32[16,32], index: 0, kind: input, shape index: {}]
  %s1 = inlined_call_operand.hbm [shape: f32[16,16], index: 1, kind: input, shape index: {}]
  %s2 = inlined_call_operand.vmem [shape: f32[4,16,32], index: 2, kind: input, shape index: {}]
  %s3 = inlined_call_operand.hbm [shape: f32[4,16,32], index: 3, kind: input, shape index: {}]
  %s4 = inlined_call_operand.vmem [shape: f32[2,4,32,32], index: 4, kind: input, shape index: {}]
  %s5 = inlined_call_operand.hbm [shape: f32[2,4,1,32], index: 5, kind: input, shape index: {}]
  %s6 = inlined_call_operand.hbm [shape: f32[2,32,128], index: 6, kind: input, shape index: {}]
  %s7 = inlined_call_operand.vmem [shape: f32[2,1,128], index: 7, kind: input, shape index: {}]
  %s8 = inlined_call_operand.vmem [shape: f32[2,128,32], index: 8, kind: input, shape index: {}]
  %s9 = inlined_call_operand.hbm [shape: f32[2,1,32], index: 9, kind: input, shape index: {}]
  %s10 = inlined_call_operand.vmem [shape: f32[32,16], index: 10, kind: input, shape index: {}]
  %s11 = inlined_call_operand.vmem [shape: f32[1,16], index: 11, kind: input, shape index: {}]
  %s12 = inlined_call_operand.hbm [shape: f32[16,16], index: 12, kind: output, shape index: {}]
  %s13 = sld [smem:[#allocation0]]
  $region82: #{tpu_custom_call.1} parent=0
    _
  %s15 = ssub.s32 1, %s13
  %s16 = scalar_select 0, %s15, %s13
  $region1: #{tpu_custom_call.1} parent=0
    #allocation2 [shape = 'u8[8192]{0}', space=vmem, size = 0x2000, scoped, tag = 'input window, operand 0, single buffered']
    #allocation3 [shape = 's32[1]{0}', space=sflag, size = 0x4, scoped, tag = 'scoped memory for tpu_custom_call.1']
    #allocation4 [shape = 's32[1]{0}', space=sflag, size = 0x4, scoped, tag = 'scoped memory for tpu_custom_call.1']
    #allocation5 [shape = 'u8[8192]{0}', space=vmem, size = 0x2000, scoped, tag = 'input window, operand 1, single buffered']
    #allocation6 [shape = 's32[1]{0}', space=sflag, size = 0x4, scoped, tag = 'scoped memory for tpu_custom_call.1']
    #allocation7 [shape = 'u8[32768]{0}', space=vmem, size = 0x8000, scoped, tag = 'input window, operand 3, single buffered']
    #allocation8 [shape = 'u8[4096]{0}', space=vmem, size = 0x1000, scoped, tag = 'input window, operand 5, single buffered']
    #allocation9 [shape = 's32[1]{0}', space=sflag, size = 0x4, scoped, tag = 'scoped memory for tpu_custom_call.1']
    #allocation10 [shape = 'u8[32768]{0}', space=vmem, size = 0x8000, scoped, tag = 'input window, operand 6, single buffered']
    #allocation11 [shape = 'u8[1024]{0}', space=vmem, size = 0x400, scoped, tag = 'input window, operand 9, single buffered']
    #allocation12 [shape = 's32[1]{0}', space=sflag, size = 0x4, scoped, tag = 'scoped memory for tpu_custom_call.1']
    #allocation13 [shape = 'u8[8192]{0}', space=vmem, size = 0x2000, scoped, tag = 'output window, operand 0, single buffered']
    %17 = vsyncpa [#allocation3], 0
    %18 = vsyncpa [#allocation6], 0
    %19 = vsyncpa [#allocation9], 0
    %20 = vsyncpa [#allocation12], 0
    %21 = vsyncpa [#allocation4], 0
    // Predicated region
    $region2: #{tpu_custom_call.1} parent=1 // pred_check
      _
    $region3: #{tpu_custom_call.1} parent=1 // pred_check_branch
      %23 = sbr.rel (0) target = $region5
    $region4: #{tpu_custom_call.1} parent=1 // pred_region
      %s25 = ssub.s32 256, 256
      %26 = vsyncadd [#allocation3], %s25
      %s27 = sshll.u32 [#allocation2], 4
      %s28 = int_to_ptr.vmem [resolvable:$true] %s27
      %33 = dma.hbm_to_vmem [thread:$0]  %s0, 256, %s28, [#allocation3], 128, 128, 8
    $region5: #{tpu_custom_call.1} parent=1 // pred_fallthru
      _
    // Predicated region
    $region6: #{tpu_custom_call.1} parent=1 // pred_check
      _
    $region7: #{tpu_custom_call.1} parent=1 // pred_check_branch
      %35 = sbr.rel (0) target = $region9
    $region8: #{tpu_custom_call.1} parent=1 // pred_region
      %s37 = ssub.s32 256, 256
      %38 = vsyncadd [#allocation6], %s37
      %s39 = sshll.u32 [#allocation5], 4
      %s40 = int_to_ptr.vmem [resolvable:$true] %s39
      %45 = dma.hbm_to_vmem [thread:$0]  %s1, 256, %s40, [#allocation6], 128, 128, 8
    $region9: #{tpu_custom_call.1} parent=1 // pred_fallthru
      _
    // Predicated region
    $region10: #{tpu_custom_call.1} parent=1 // pred_check
      _
    $region11: #{tpu_custom_call.1} parent=1 // pred_check_branch
      %47 = sbr.rel (0) target = $region13
    $region12: #{tpu_custom_call.1} parent=1 // pred_region
      _
    $region13: #{tpu_custom_call.1} parent=1 // pred_fallthru
      _
    // Predicated region
    $region14: #{tpu_custom_call.1} parent=1 // pred_check
      _
    $region15: #{tpu_custom_call.1} parent=1 // pred_check_branch
      %49 = sbr.rel (0) target = $region17
    $region16: #{tpu_custom_call.1} parent=1 // pred_region
      %s51 = ssub.s32 1024, 1024
      %52 = vsyncadd [#allocation6], %s51
      %s53 = sshll.u32 [#allocation7], 4
      %s54 = int_to_ptr.vmem [resolvable:$true] %s53
      %59 = dma.hbm_to_vmem [thread:$0]  %s3, 1024, %s54, [#allocation6], 128, 128, 8
    $region17: #{tpu_custom_call.1} parent=1 // pred_fallthru
      _
    // Predicated region
    $region18: #{tpu_custom_call.1} parent=1 // pred_check
      _
    $region19: #{tpu_custom_call.1} parent=1 // pred_check_branch
      %61 = sbr.rel (0) target = $region21
    $region20: #{tpu_custom_call.1} parent=1 // pred_region
      _
    $region21: #{tpu_custom_call.1} parent=1 // pred_fallthru
      _
    // Predicated region
    $region22: #{tpu_custom_call.1} parent=1 // pred_check
      _
    $region23: #{tpu_custom_call.1} parent=1 // pred_check_branch
      %63 = sbr.rel (0) target = $region25
    $region24: #{tpu_custom_call.1} parent=1 // pred_region
      %s65 = ssub.s32 128, 128
      %66 = vsyncadd [#allocation9], %s65
      %s67 = sshll.u32 [#allocation8], 4
      %s68 = int_to_ptr.vmem [resolvable:$true] %s67
      %73 = dma.hbm_to_vmem [thread:$0]  %s5, 128, %s68, [#allocation9], 16, 16, 1
    $region25: #{tpu_custom_call.1} parent=1 // pred_fallthru
      _
    // Predicated region
    $region26: #{tpu_custom_call.1} parent=1 // pred_check
      _
    $region27: #{tpu_custom_call.1} parent=1 // pred_check_branch
      %75 = sbr.rel (0) target = $region29
    $region28: #{tpu_custom_call.1} parent=1 // pred_region
      %s77 = ssub.s32 1024, 1024
      %78 = vsyncadd [#allocation9], %s77
      %s79 = sshll.u32 [#allocation10], 4
      %s80 = int_to_ptr.vmem [resolvable:$true] %s79
      %85 = dma.hbm_to_vmem [thread:$0]  %s6, 1024, %s80, [#allocation9], 128, 128, 8
    $region29: #{tpu_custom_call.1} parent=1 // pred_fallthru
      _
    // Predicated region
    $region30: #{tpu_custom_call.1} parent=1 // pred_check
      _
    $region31: #{tpu_custom_call.1} parent=1 // pred_check_branch
      %87 = sbr.rel (0) target = $region33
    $region32: #{tpu_custom_call.1} parent=1 // pred_region
      _
    $region33: #{tpu_custom_call.1} parent=1 // pred_fallthru
      _
    // Predicated region
    $region34: #{tpu_custom_call.1} parent=1 // pred_check
      _
    $region35: #{tpu_custom_call.1} parent=1 // pred_check_branch
      %89 = sbr.rel (0) target = $region37
    $region36: #{tpu_custom_call.1} parent=1 // pred_region
      _
    $region37: #{tpu_custom_call.1} parent=1 // pred_fallthru
      _
    // Predicated region
    $region38: #{tpu_custom_call.1} parent=1 // pred_check
      _
    $region39: #{tpu_custom_call.1} parent=1 // pred_check_branch
      %91 = sbr.rel (0) target = $region41
    $region40: #{tpu_custom_call.1} parent=1 // pred_region
      %s93 = ssub.s32 32, 32
      %94 = vsyncadd [#allocation12], %s93
      %s95 = sshll.u32 [#allocation11], 4
      %s96 = int_to_ptr.vmem [resolvable:$true] %s95
      %101 = dma.hbm_to_vmem [thread:$0]  %s9, 32, %s96, [#allocation12], 16, 16, 1
    $region41: #{tpu_custom_call.1} parent=1 // pred_fallthru
      _
    // Predicated region
    $region42: #{tpu_custom_call.1} parent=1 // pred_check
      _
    $region43: #{tpu_custom_call.1} parent=1 // pred_check_branch
      %103 = sbr.rel (0) target = $region45
    $region44: #{tpu_custom_call.1} parent=1 // pred_region
      _
    $region45: #{tpu_custom_call.1} parent=1 // pred_fallthru
      _
    // Predicated region
    $region46: #{tpu_custom_call.1} parent=1 // pred_check
      _
    $region47: #{tpu_custom_call.1} parent=1 // pred_check_branch
      %105 = sbr.rel (0) target = $region49
    $region48: #{tpu_custom_call.1} parent=1 // pred_region
      _
    $region49: #{tpu_custom_call.1} parent=1 // pred_fallthru
      _
    // Predicated region
    $region50: #{tpu_custom_call.1} parent=1 // pred_check
      _
    $region51: #{tpu_custom_call.1} parent=1 // pred_check_branch
      %107 = sbr.rel (0) target = $region53
    $region52: #{tpu_custom_call.1} parent=1 // pred_region
      %108 = dma.done [#allocation3], 256
    $region53: #{tpu_custom_call.1} parent=1 // pred_fallthru
      _
    // Predicated region
    $region54: #{tpu_custom_call.1} parent=1 // pred_check
      _
    $region55: #{tpu_custom_call.1} parent=1 // pred_check_branch
      %110 = sbr.rel (0) target = $region57
    $region56: #{tpu_custom_call.1} parent=1 // pred_region
      %111 = dma.done [#allocation6], 256
    $region57: #{tpu_custom_call.1} parent=1 // pred_fallthru
      _
    // Predicated region
    $region58: #{tpu_custom_call.1} parent=1 // pred_check
      _
    $region59: #{tpu_custom_call.1} parent=1 // pred_check_branch
      %113 = sbr.rel (0) target = $region61
    $region60: #{tpu_custom_call.1} parent=1 // pred_region
      %114 = dma.done [#allocation6], 1024
    $region61: #{tpu_custom_call.1} parent=1 // pred_fallthru
      _
    // Predicated region
    $region62: #{tpu_custom_call.1} parent=1 // pred_check
      _
    $region63: #{tpu_custom_call.1} parent=1 // pred_check_branch
      %116 = sbr.rel (0) target = $region65
    $region64: #{tpu_custom_call.1} parent=1 // pred_region
      %117 = dma.done [#allocation9], 128
    $region65: #{tpu_custom_call.1} parent=1 // pred_fallthru
      _
    // Predicated region
    $region66: #{tpu_custom_call.1} parent=1 // pred_check
      _
    $region67: #{tpu_custom_call.1} parent=1 // pred_check_branch
      %119 = sbr.rel (0) target = $region69
    $region68: #{tpu_custom_call.1} parent=1 // pred_region
      %120 = dma.done [#allocation9], 1024
    $region69: #{tpu_custom_call.1} parent=1 // pred_fallthru
      _
    // Predicated region
    $region70: #{tpu_custom_call.1} parent=1 // pred_check
      _
    $region71: #{tpu_custom_call.1} parent=1 // pred_check_branch
      %122 = sbr.rel (0) target = $region73
    $region72: #{tpu_custom_call.1} parent=1 // pred_region
      %123 = dma.done [#allocation12], 32
    $region73: #{tpu_custom_call.1} parent=1 // pred_fallthru
      _
    %v124 = vld [vmem:[#allocation2] sm:$0xff]
    %v125 = vld [vmem:[#allocation2 + $0x8] sm:$0xff]
    %v126 = vld [vmem:[#allocation5] sm:$0xff]
    %v127 = vld [vmem:[#allocation5 + $0x8] sm:$0xff]
    %v128 = vld [vmem:[%s2] sm:$0xff]
    %v129 = vld [vmem:[%s2 + $0x8] sm:$0xff]
    %v130 = vld [vmem:[#allocation7] sm:$0xff]
    %v131 = vld [vmem:[#allocation7 + $0x8] sm:$0xff]
    %vm132 = vcmask 261120
    %v133 = vsel %vm132, %v124, 0.0
    %134 = vadd.xlane.f32.xlu0 %v133
    %v135 = vpop.xlane.xlu0 %134
    %v136 = vsel %vm132, %v125, 0.0
    %137 = vadd.xlane.f32.xlu0 %v136
    %v138 = vpop.xlane.xlu0 %137
    %v139 = vrcp.pop 32.0
    %v140 = vmul.f32 %v135, %v139
    %v141 = vmul.f32 %v138, %v139
    %v142 = vsub.f32 %v124, %v140
    %v143 = vsub.f32 %v125, %v141
    %v144 = vmul.f32 %v142, %v142
    %v145 = vmul.f32 %v143, %v143
    %v146 = vsel %vm132, %v144, 0.0
    %147 = vadd.xlane.f32.xlu0 %v146
    %v148 = vpop.xlane.xlu0 %147
    %v149 = vsel %vm132, %v145, 0.0
    %150 = vadd.xlane.f32.xlu0 %v149
    %v151 = vpop.xlane.xlu0 %150
    %v152 = vmul.f32 %v148, %v139
    %v153 = vmul.f32 %v151, %v139
    %v154 = vadd.f32 %v152, 1e-05
    %v155 = vadd.f32 %v153, 1e-05
    %v156 = vrsqrt.pop %v154
    %v157 = vrsqrt.pop %v155
    %v158 = vmul.f32 %v142, %v156
    %v159 = vmul.f32 %v143, %v157
    %v160 = vmul.f32 %v158, %v128
    %v161 = vmul.f32 %v159, %v129
    %v162 = vadd.f32 %v160, %v130
    %v163 = vadd.f32 %v161, %v131
    %v164 = vld [vmem:[%s4] sm:$0xff]
    %v165 = vld [vmem:[%s4 + $0x8] sm:$0xff]
    %v166 = vld [vmem:[%s4 + $0x10] sm:$0xff]
    %v167 = vld [vmem:[%s4 + $0x18] sm:$0xff]
    %s168 = scalar_lea.vmem %s4, 32
    %v169 = vld [vmem:[%s168] sm:$0xff]
    %v170 = vld [vmem:[%s168 + $0x8] sm:$0xff]
    %v171 = vld [vmem:[%s168 + $0x10] sm:$0xff]
    %v172 = vld [vmem:[%s168 + $0x18] sm:$0xff]
    %s173 = scalar_lea.vmem %s4, 64
    %v174 = vld [vmem:[%s173] sm:$0xff]
    %v175 = vld [vmem:[%s173 + $0x8] sm:$0xff]
    %v176 = vld [vmem:[%s173 + $0x10] sm:$0xff]
    %v177 = vld [vmem:[%s173 + $0x18] sm:$0xff]
    %s178 = scalar_lea.vmem %s4, 96
    %v179 = vld [vmem:[%s178] sm:$0xff]
    %v180 = vld [vmem:[%s178 + $0x8] sm:$0xff]
    %v181 = vld [vmem:[%s178 + $0x10] sm:$0xff]
    %v182 = vld [vmem:[%s178 + $0x18] sm:$0xff]
    %v183 = vld [vmem:[#allocation8] sm:$0x1]
    %v185 = vlaneseq
    %v186 = vshrl.u32 %v185, 7
    %v187 = vsub.s32 0, %v186
    %v188 = vrot.slane %v183, %v187
    %v191 = vsel %vm132, %v162, 0
    %v194 = vsel %vm132, %v163, 0
    %196 = vmatprep.subr.mxu0 0.0
    %197 = vmatpush1.msra.mxu0 %v164
    %198 = vmatprep.subr.mxu0 0.0
    %199 = vmatpush1.msra.mxu0 %v165
    %200 = vmatprep.subr.mxu0 0.0
    %201 = vmatpush1.msra.mxu0 %v166
    %202 = vmatprep.subr.mxu0 0.0
    %203 = vmatpush1.msra.mxu0 %v167
    %204 = vmatprep.subr.mxu0 0.0
    %205 = vmatpush1.msra.mxu0 0.0
    %206 = vmatprep.subr.mxu0 0.0
    %207 = vmatpush1.msra.mxu0 0.0
    %208 = vmatprep.subr.mxu0 0.0
    %209 = vmatpush1.msra.mxu0 0.0
    %210 = vmatprep.subr.mxu0 0.0
    %211 = vmatpush1.msra.mxu0 0.0
    %212 = vmatprep.subr.mxu0 0.0
    %213 = vmatpush1.msra.mxu0 0.0
    %214 = vmatprep.subr.mxu0 0.0
    %215 = vmatpush1.msra.mxu0 0.0
    %216 = vmatprep.subr.mxu0 0.0
    %217 = vmatpush1.msra.mxu0 0.0
    %218 = vmatprep.subr.mxu0 0.0
    %219 = vmatpush1.msra.mxu0 0.0
    %220 = vmatprep.subr.mxu0 0.0
    %221 = vmatpush1.msra.mxu0 0.0
    %222 = vmatprep.subr.mxu0 0.0
    %223 = vmatpush1.msra.mxu0 0.0
    %224 = vmatprep.subr.mxu0 0.0
    %225 = vmatpush1.msra.mxu0 0.0
    %226 = vmatprep.subr.mxu0 0.0
    %227 = vmatpush1.msra.mxu0 0.0
    %228 = vmatprep.subr.mxu0 0.0
    %229 = vmatpush1.msra.mxu0 0.0
    %230 = vmatprep.subr.mxu0 0.0
    %231 = vmatpush1.msra.mxu0 0.0
    %232 = vmatprep.subr.mxu0 0.0
    %233 = vmatpush1.msra.mxu0 0.0
    %234 = vmatprep.subr.mxu0 0.0
    %235 = vmatpush1.msra.mxu0 0.0
    %236 = vmatprep.subr.mxu0 0.0
    %237 = vmatpush1.msra.mxu0 0.0
    %238 = vmatprep.subr.mxu0 0.0
    %239 = vmatpush1.msra.mxu0 0.0
    %240 = vmatprep.subr.mxu0 0.0
    %241 = vmatpush1.msra.mxu0 0.0
    %242 = vmatprep.subr.mxu0 0.0
    %243 = vmatpush1.msra.mxu0 0.0
    %244 = vmatprep.subr.mxu0 0.0
    %245 = vmatpush1.msra.mxu0 0.0
    %246 = vmatprep.subr.mxu0 0.0
    %247 = vmatpush1.msra.mxu0 0.0
    %248 = vmatprep.subr.mxu0 0.0
    %249 = vmatpush1.msra.mxu0 0.0
    %250 = vmatprep.subr.mxu0 0.0
    %251 = vmatpush1.msra.mxu0 0.0
    %252 = vmatprep.subr.mxu0 0.0
    %253 = vmatpush1.msra.mxu0 0.0
    %254 = vmatprep.subr.mxu0 0.0
    %255 = vmatpush1.msra.mxu0 0.0
    %256 = vmatprep.subr.mxu0 0.0
    %257 = vmatpush1.msra.mxu0 0.0
    %258 = vmatprep.subr.mxu0 0.0
    %259 = vmatpush1.msra.mxu0 0.0
    %260 = vmatprep.mubr.f32.mxu0 0.0
    %261 = vmatmul.mubr.f32.gmra.mrb[0].mxu0 %v191
    %v262 = vpop.f32.mrb[0].mxu0
    %v263 = vadd.f32 %v188, %v262
    %v264 = vpop.f32.mrb[0].mxu0
    %265 = vmatprep.mubr.f32.mxu0 0.0
    %266 = vmatmul.mubr.f32.gmra.mrb[0].mxu0 %v194
    %v267 = vpop.f32.mrb[0].mxu0
    %v268 = vadd.f32 %v188, %v267
    %v269 = vpop.f32.mrb[0].mxu0
    %270 = vdwg.mxu0
    %v271 = vmul.f32 %v263, 0.35355338
    %v272 = vmul.f32 %v268, 0.35355338
    %s273 = scalar_lea.vmem [#allocation8], 1
    %v274 = vld [vmem:[%s273] sm:$0x1]
    %v276 = vlaneseq
    %v277 = vshrl.u32 %v276, 7
    %v278 = vsub.s32 0, %v277
    %v279 = vrot.slane %v274, %v278
    %281 = vmatprep.subr.mxu0 0.0
    %282 = vmatpush1.msra.mxu0 %v169
    %283 = vmatprep.subr.mxu0 0.0
    %284 = vmatpush1.msra.mxu0 %v170
    %285 = vmatprep.subr.mxu0 0.0
    %286 = vmatpush1.msra.mxu0 %v171
    %287 = vmatprep.subr.mxu0 0.0
    %288 = vmatpush1.msra.mxu0 %v172
    %289 = vmatprep.subr.mxu0 0.0
    %290 = vmatpush1.msra.mxu0 0.0
    %291 = vmatprep.subr.mxu0 0.0
    %292 = vmatpush1.msra.mxu0 0.0
    %293 = vmatprep.subr.mxu0 0.0
    %294 = vmatpush1.msra.mxu0 0.0
    %295 = vmatprep.subr.mxu0 0.0
    %296 = vmatpush1.msra.mxu0 0.0
    %297 = vmatprep.subr.mxu0 0.0
    %298 = vmatpush1.msra.mxu0 0.0
    %299 = vmatprep.subr.mxu0 0.0
    %300 = vmatpush1.msra.mxu0 0.0
    %301 = vmatprep.subr.mxu0 0.0
    %302 = vmatpush1.msra.mxu0 0.0
    %303 = vmatprep.subr.mxu0 0.0
    %304 = vmatpush1.msra.mxu0 0.0
    %305 = vmatprep.subr.mxu0 0.0
    %306 = vmatpush1.msra.mxu0 0.0
    %307 = vmatprep.subr.mxu0 0.0
    %308 = vmatpush1.msra.mxu0 0.0
    %309 = vmatprep.subr.mxu0 0.0
    %310 = vmatpush1.msra.mxu0 0.0
    %311 = vmatprep.subr.mxu0 0.0
    %312 = vmatpush1.msra.mxu0 0.0
    %313 = vmatprep.subr.mxu0 0.0
    %314 = vmatpush1.msra.mxu0 0.0
    %315 = vmatprep.subr.mxu0 0.0
    %316 = vmatpush1.msra.mxu0 0.0
    %317 = vmatprep.subr.mxu0 0.0
    %318 = vmatpush1.msra.mxu0 0.0
    %319 = vmatprep.subr.mxu0 0.0
    %320 = vmatpush1.msra.mxu0 0.0
    %321 = vmatprep.subr.mxu0 0.0
    %322 = vmatpush1.msra.mxu0 0.0
    %323 = vmatprep.subr.mxu0 0.0
    %324 = vmatpush1.msra.mxu0 0.0
    %325 = vmatprep.subr.mxu0 0.0
    %326 = vmatpush1.msra.mxu0 0.0
    %327 = vmatprep.subr.mxu0 0.0
    %328 = vmatpush1.msra.mxu0 0.0
    %329 = vmatprep.subr.mxu0 0.0
    %330 = vmatpush1.msra.mxu0 0.0
    %331 = vmatprep.subr.mxu0 0.0
    %332 = vmatpush1.msra.mxu0 0.0
    %333 = vmatprep.subr.mxu0 0.0
    %334 = vmatpush1.msra.mxu0 0.0
    %335 = vmatprep.subr.mxu0 0.0
    %336 = vmatpush1.msra.mxu0 0.0
    %337 = vmatprep.subr.mxu0 0.0
    %338 = vmatpush1.msra.mxu0 0.0
    %339 = vmatprep.subr.mxu0 0.0
    %340 = vmatpush1.msra.mxu0 0.0
    %341 = vmatprep.subr.mxu0 0.0
    %342 = vmatpush1.msra.mxu0 0.0
    %343 = vmatprep.subr.mxu0 0.0
    %344 = vmatpush1.msra.mxu0 0.0
    %345 = vmatprep.mubr.f32.mxu0 0.0
    %346 = vmatmul.mubr.f32.gmra.mrb[0].mxu0 %v191
    %v347 = vpop.f32.mrb[0].mxu0
    %v348 = vadd.f32 %v279, %v347
    %v349 = vpop.f32.mrb[0].mxu0
    %350 = vmatprep.mubr.f32.mxu0 0.0
    %351 = vmatmul.mubr.f32.gmra.mrb[0].mxu0 %v194
    %v352 = vpop.f32.mrb[0].mxu0
    %v353 = vadd.f32 %v279, %v352
    %v354 = vpop.f32.mrb[0].mxu0
    %355 = vdwg.mxu0
    %s356 = scalar_lea.vmem [#allocation8], 2
    %v357 = vld [vmem:[%s356] sm:$0x1]
    %v359 = vlaneseq
    %v360 = vshrl.u32 %v359, 7
    %v361 = vsub.s32 0, %v360
    %v362 = vrot.slane %v357, %v361
    %364 = vmatprep.subr.mxu0 0.0
    %365 = vmatpush1.msra.mxu0 %v174
    %366 = vmatprep.subr.mxu0 0.0
    %367 = vmatpush1.msra.mxu0 %v175
    %368 = vmatprep.subr.mxu0 0.0
    %369 = vmatpush1.msra.mxu0 %v176
    %370 = vmatprep.subr.mxu0 0.0
    %371 = vmatpush1.msra.mxu0 %v177
    %372 = vmatprep.subr.mxu0 0.0
    %373 = vmatpush1.msra.mxu0 0.0
    %374 = vmatprep.subr.mxu0 0.0
    %375 = vmatpush1.msra.mxu0 0.0
    %376 = vmatprep.subr.mxu0 0.0
    %377 = vmatpush1.msra.mxu0 0.0
    %378 = vmatprep.subr.mxu0 0.0
    %379 = vmatpush1.msra.mxu0 0.0
    %380 = vmatprep.subr.mxu0 0.0
    %381 = vmatpush1.msra.mxu0 0.0
    %382 = vmatprep.subr.mxu0 0.0
    %383 = vmatpush1.msra.mxu0 0.0
    %384 = vmatprep.subr.mxu0 0.0
    %385 = vmatpush1.msra.mxu0 0.0
    %386 = vmatprep.subr.mxu0 0.0
    %387 = vmatpush1.msra.mxu0 0.0
    %388 = vmatprep.subr.mxu0 0.0
    %389 = vmatpush1.msra.mxu0 0.0
    %390 = vmatprep.subr.mxu0 0.0
    %391 = vmatpush1.msra.mxu0 0.0
    %392 = vmatprep.subr.mxu0 0.0
    %393 = vmatpush1.msra.mxu0 0.0
    %394 = vmatprep.subr.mxu0 0.0
    %395 = vmatpush1.msra.mxu0 0.0
    %396 = vmatprep.subr.mxu0 0.0
    %397 = vmatpush1.msra.mxu0 0.0
    %398 = vmatprep.subr.mxu0 0.0
    %399 = vmatpush1.msra.mxu0 0.0
    %400 = vmatprep.subr.mxu0 0.0
    %401 = vmatpush1.msra.mxu0 0.0
    %402 = vmatprep.subr.mxu0 0.0
    %403 = vmatpush1.msra.mxu0 0.0
    %404 = vmatprep.subr.mxu0 0.0
    %405 = vmatpush1.msra.mxu0 0.0
    %406 = vmatprep.subr.mxu0 0.0
    %407 = vmatpush1.msra.mxu0 0.0
    %408 = vmatprep.subr.mxu0 0.0
    %409 = vmatpush1.msra.mxu0 0.0
    %410 = vmatprep.subr.mxu0 0.0
    %411 = vmatpush1.msra.mxu0 0.0
    %412 = vmatprep.subr.mxu0 0.0
    %413 = vmatpush1.msra.mxu0 0.0
    %414 = vmatprep.subr.mxu0 0.0
    %415 = vmatpush1.msra.mxu0 0.0
    %416 = vmatprep.subr.mxu0 0.0
    %417 = vmatpush1.msra.mxu0 0.0
    %418 = vmatprep.subr.mxu0 0.0
    %419 = vmatpush1.msra.mxu0 0.0
    %420 = vmatprep.subr.mxu0 0.0
    %421 = vmatpush1.msra.mxu0 0.0
    %422 = vmatprep.subr.mxu0 0.0
    %423 = vmatpush1.msra.mxu0 0.0
    %424 = vmatprep.subr.mxu0 0.0
    %425 = vmatpush1.msra.mxu0 0.0
    %426 = vmatprep.subr.mxu0 0.0
    %427 = vmatpush1.msra.mxu0 0.0
    %428 = vmatprep.mubr.f32.mxu0 0.0
    %429 = vmatmul.mubr.f32.gmra.mrb[0].mxu0 %v191
    %v430 = vpop.f32.mrb[0].mxu0
    %v431 = vadd.f32 %v362, %v430
    %v432 = vpop.f32.mrb[0].mxu0
    %433 = vmatprep.mubr.f32.mxu0 0.0
    %434 = vmatmul.mubr.f32.gmra.mrb[0].mxu0 %v194
    %v435 = vpop.f32.mrb[0].mxu0
    %v436 = vadd.f32 %v362, %v435
    %v437 = vpop.f32.mrb[0].mxu0
    %438 = vdwg.mxu0
    %vm439 = vcmask 64512
    %v441 = vsel %vm439, %v271, 0
    %v444 = vsel %vm439, %v272, 0
    %v447 = vsel %vm439, %v348, 0
    %v450 = vsel %vm439, %v353, 0
    %452 = vmatprep.subr.mxu0 0.0
    %453 = vmatpush1.xpose.msra.mxu0 %v447
    %454 = vmatprep.subr.mxu0 0.0
    %455 = vmatpush1.xpose.msra.mxu0 %v450
    %456 = vmatprep.subr.mxu0 0.0
    %457 = vmatpush1.xpose.msra.mxu0 0.0
    %458 = vmatprep.subr.mxu0 0.0
    %459 = vmatpush1.xpose.msra.mxu0 0.0
    %460 = vmatprep.subr.mxu0 0.0
    %461 = vmatpush1.xpose.msra.mxu0 0.0
    %462 = vmatprep.subr.mxu0 0.0
    %463 = vmatpush1.xpose.msra.mxu0 0.0
    %464 = vmatprep.subr.mxu0 0.0
    %465 = vmatpush1.xpose.msra.mxu0 0.0
    %466 = vmatprep.subr.mxu0 0.0
    %467 = vmatpush1.xpose.msra.mxu0 0.0
    %468 = vmatprep.subr.mxu0 0.0
    %469 = vmatpush1.xpose.msra.mxu0 0.0
    %470 = vmatprep.subr.mxu0 0.0
    %471 = vmatpush1.xpose.msra.mxu0 0.0
    %472 = vmatprep.subr.mxu0 0.0
    %473 = vmatpush1.xpose.msra.mxu0 0.0
    %474 = vmatprep.subr.mxu0 0.0
    %475 = vmatpush1.xpose.msra.mxu0 0.0
    %476 = vmatprep.subr.mxu0 0.0
    %477 = vmatpush1.xpose.msra.mxu0 0.0
    %478 = vmatprep.subr.mxu0 0.0
    %479 = vmatpush1.xpose.msra.mxu0 0.0
    %480 = vmatprep.subr.mxu0 0.0
    %481 = vmatpush1.xpose.msra.mxu0 0.0
    %482 = vmatprep.subr.mxu0 0.0
    %483 = vmatpush1.xpose.msra.mxu0 0.0
    %484 = vmatprep.subr.mxu0 0.0
    %485 = vmatpush1.xpose.msra.mxu0 0.0
    %486 = vmatprep.subr.mxu0 0.0
    %487 = vmatpush1.xpose.msra.mxu0 0.0
    %488 = vmatprep.subr.mxu0 0.0
    %489 = vmatpush1.xpose.msra.mxu0 0.0
    %490 = vmatprep.subr.mxu0 0.0
    %491 = vmatpush1.xpose.msra.mxu0 0.0
    %492 = vmatprep.subr.mxu0 0.0
    %493 = vmatpush1.xpose.msra.mxu0 0.0
    %494 = vmatprep.subr.mxu0 0.0
    %495 = vmatpush1.xpose.msra.mxu0 0.0
    %496 = vmatprep.subr.mxu0 0.0
    %497 = vmatpush1.xpose.msra.mxu0 0.0
    %498 = vmatprep.subr.mxu0 0.0
    %499 = vmatpush1.xpose.msra.mxu0 0.0
    %500 = vmatprep.subr.mxu0 0.0
    %501 = vmatpush1.xpose.msra.mxu0 0.0
    %502 = vmatprep.subr.mxu0 0.0
    %503 = vmatpush1.xpose.msra.mxu0 0.0
    %504 = vmatprep.subr.mxu0 0.0
    %505 = vmatpush1.xpose.msra.mxu0 0.0
    %506 = vmatprep.subr.mxu0 0.0
    %507 = vmatpush1.xpose.msra.mxu0 0.0
    %508 = vmatprep.subr.mxu0 0.0
    %509 = vmatpush1.xpose.msra.mxu0 0.0
    %510 = vmatprep.subr.mxu0 0.0
    %511 = vmatpush1.xpose.msra.mxu0 0.0
    %512 = vmatprep.subr.mxu0 0.0
    %513 = vmatpush1.xpose.msra.mxu0 0.0
    %514 = vmatprep.subr.mxu0 0.0
    %515 = vmatpush1.xpose.msra.mxu0 0.0
    %516 = vmatprep.mubr.f32.mxu0 0.0
    %517 = vmatmul.mubr.f32.gmra.mrb[0].mxu0 %v441
    %v518 = vpop.f32.mrb[0].mxu0
    %v519 = vadd.f32 %v126, %v518
    %v520 = vpop.f32.mrb[0].mxu0
    %521 = vmatprep.mubr.f32.mxu0 0.0
    %522 = vmatmul.mubr.f32.gmra.mrb[0].mxu0 %v444
    %v523 = vpop.f32.mrb[0].mxu0
    %v524 = vadd.f32 %v127, %v523
    %v525 = vpop.f32.mrb[0].mxu0
    %526 = vdwg.mxu0
    %vm527 = vcmask 130048
    %v528 = vsel %vm527, %v519, -inf
    %529 = vmax.xlane.f32.xlu0 %v528
    %v530 = vpop.xlane.xlu0 %529
    %v531 = vsel %vm527, %v524, -inf
    %532 = vmax.xlane.f32.xlu0 %v531
    %v533 = vpop.xlane.xlu0 %532
    %v534 = vsub.f32 %v519, %v530
    %v535 = vsub.f32 %v524, %v533
    %v536 = vmul.f32 %v534, 1.442695
    %v537 = vpow.pop %v536
    %v538 = vmul.f32 %v535, 1.442695
    %v539 = vpow.pop %v538
    %v540 = vsel %vm527, %v537, 0.0
    %541 = vadd.xlane.f32.xlu0 %v540
    %v542 = vpop.xlane.xlu0 %541
    %v543 = vsel %vm527, %v539, 0.0
    %544 = vadd.xlane.f32.xlu0 %v543
    %v545 = vpop.xlane.xlu0 %544
    %v546 = vrcp.pop %v542
    %v547 = vmul.f32 %v537, %v546
    %v548 = vrcp.pop %v545
    %v549 = vmul.f32 %v539, %v548
    %v551 = vsel %vm527, %v547, 0
    %v554 = vsel %vm527, %v549, 0
    %556 = vmatprep.subr.mxu0 0.0
    %557 = vmatpush1.msra.mxu0 %v431
    %558 = vmatprep.subr.mxu0 0.0
    %559 = vmatpush1.msra.mxu0 %v436
    %560 = vmatprep.subr.mxu0 0.0
    %561 = vmatpush1.msra.mxu0 0.0
    %562 = vmatprep.subr.mxu0 0.0
    %563 = vmatpush1.msra.mxu0 0.0
    %564 = vmatprep.subr.mxu0 0.0
    %565 = vmatpush1.msra.mxu0 0.0
    %566 = vmatprep.subr.mxu0 0.0
    %567 = vmatpush1.msra.mxu0 0.0
    %568 = vmatprep.subr.mxu0 0.0
    %569 = vmatpush1.msra.mxu0 0.0
    %570 = vmatprep.subr.mxu0 0.0
    %571 = vmatpush1.msra.mxu0 0.0
    %572 = vmatprep.subr.mxu0 0.0
    %573 = vmatpush1.msra.mxu0 0.0
    %574 = vmatprep.subr.mxu0 0.0
    %575 = vmatpush1.msra.mxu0 0.0
    %576 = vmatprep.subr.mxu0 0.0
    %577 = vmatpush1.msra.mxu0 0.0
    %578 = vmatprep.subr.mxu0 0.0
    %579 = vmatpush1.msra.mxu0 0.0
    %580 = vmatprep.subr.mxu0 0.0
    %581 = vmatpush1.msra.mxu0 0.0
    %582 = vmatprep.subr.mxu0 0.0
    %583 = vmatpush1.msra.mxu0 0.0
    %584 = vmatprep.subr.mxu0 0.0
    %585 = vmatpush1.msra.mxu0 0.0
    %586 = vmatprep.subr.mxu0 0.0
    %587 = vmatpush1.msra.mxu0 0.0
    %588 = vmatprep.subr.mxu0 0.0
    %589 = vmatpush1.msra.mxu0 0.0
    %590 = vmatprep.subr.mxu0 0.0
    %591 = vmatpush1.msra.mxu0 0.0
    %592 = vmatprep.subr.mxu0 0.0
    %593 = vmatpush1.msra.mxu0 0.0
    %594 = vmatprep.subr.mxu0 0.0
    %595 = vmatpush1.msra.mxu0 0.0
    %596 = vmatprep.subr.mxu0 0.0
    %597 = vmatpush1.msra.mxu0 0.0
    %598 = vmatprep.subr.mxu0 0.0
    %599 = vmatpush1.msra.mxu0 0.0
    %600 = vmatprep.subr.mxu0 0.0
    %601 = vmatpush1.msra.mxu0 0.0
    %602 = vmatprep.subr.mxu0 0.0
    %603 = vmatpush1.msra.mxu0 0.0
    %604 = vmatprep.subr.mxu0 0.0
    %605 = vmatpush1.msra.mxu0 0.0
    %606 = vmatprep.subr.mxu0 0.0
    %607 = vmatpush1.msra.mxu0 0.0
    %608 = vmatprep.subr.mxu0 0.0
    %609 = vmatpush1.msra.mxu0 0.0
    %610 = vmatprep.subr.mxu0 0.0
    %611 = vmatpush1.msra.mxu0 0.0
    %612 = vmatprep.subr.mxu0 0.0
    %613 = vmatpush1.msra.mxu0 0.0
    %614 = vmatprep.subr.mxu0 0.0
    %615 = vmatpush1.msra.mxu0 0.0
    %616 = vmatprep.subr.mxu0 0.0
    %617 = vmatpush1.msra.mxu0 0.0
    %618 = vmatprep.subr.mxu0 0.0
    %619 = vmatpush1.msra.mxu0 0.0
    %620 = vmatprep.mubr.f32.mxu0 0.0
    %621 = vmatmul.mubr.f32.gmra.mrb[0].mxu0 %v551
    %v622 = vpop.f32.mrb[0].mxu0
    %v623 = vadd.f32 0.0, %v622
    %v624 = vpop.f32.mrb[0].mxu0
    %625 = vmatprep.mubr.f32.mxu0 0.0
    %626 = vmatmul.mubr.f32.gmra.mrb[0].mxu0 %v554
    %v627 = vpop.f32.mrb[0].mxu0
    %v628 = vadd.f32 0.0, %v627
    %v629 = vpop.f32.mrb[0].mxu0
    %630 = vdwg.mxu0
    %631 = vrot.lane.b32.xlu0 %v271, 120
    %v632 = vpop.permute.xlu0 %631
    %633 = vrot.lane.b32.xlu0 %v272, 120
    %v634 = vpop.permute.xlu0 %633
    %635 = vrot.lane.b32.xlu0 %v348, 120
    %v636 = vpop.permute.xlu0 %635
    %637 = vrot.lane.b32.xlu0 %v353, 120
    %v638 = vpop.permute.xlu0 %637
    %v639 = vsel %vm439, %v632, 0
    %v641 = vsel %vm439, %v634, 0
    %v643 = vsel %vm439, %v636, 0
    %v645 = vsel %vm439, %v638, 0
    %647 = vmatprep.subr.mxu0 0.0
    %648 = vmatpush1.xpose.msra.mxu0 %v643
    %649 = vmatprep.subr.mxu0 0.0
    %650 = vmatpush1.xpose.msra.mxu0 %v645
    %651 = vmatprep.subr.mxu0 0.0
    %652 = vmatpush1.xpose.msra.mxu0 0.0
    %653 = vmatprep.subr.mxu0 0.0
    %654 = vmatpush1.xpose.msra.mxu0 0.0
    %655 = vmatprep.subr.mxu0 0.0
    %656 = vmatpush1.xpose.msra.mxu0 0.0
    %657 = vmatprep.subr.mxu0 0.0
    %658 = vmatpush1.xpose.msra.mxu0 0.0
    %659 = vmatprep.subr.mxu0 0.0
    %660 = vmatpush1.xpose.msra.mxu0 0.0
    %661 = vmatprep.subr.mxu0 0.0
    %662 = vmatpush1.xpose.msra.mxu0 0.0
    %663 = vmatprep.subr.mxu0 0.0
    %664 = vmatpush1.xpose.msra.mxu0 0.0
    %665 = vmatprep.subr.mxu0 0.0
    %666 = vmatpush1.xpose.msra.mxu0 0.0
    %667 = vmatprep.subr.mxu0 0.0
    %668 = vmatpush1.xpose.msra.mxu0 0.0
    %669 = vmatprep.subr.mxu0 0.0
    %670 = vmatpush1.xpose.msra.mxu0 0.0
    %671 = vmatprep.subr.mxu0 0.0
    %672 = vmatpush1.xpose.msra.mxu0 0.0
    %673 = vmatprep.subr.mxu0 0.0
    %674 = vmatpush1.xpose.msra.mxu0 0.0
    %675 = vmatprep.subr.mxu0 0.0
    %676 = vmatpush1.xpose.msra.mxu0 0.0
    %677 = vmatprep.subr.mxu0 0.0
    %678 = vmatpush1.xpose.msra.mxu0 0.0
    %679 = vmatprep.subr.mxu0 0.0
    %680 = vmatpush1.xpose.msra.mxu0 0.0
    %681 = vmatprep.subr.mxu0 0.0
    %682 = vmatpush1.xpose.msra.mxu0 0.0
    %683 = vmatprep.subr.mxu0 0.0
    %684 = vmatpush1.xpose.msra.mxu0 0.0
    %685 = vmatprep.subr.mxu0 0.0
    %686 = vmatpush1.xpose.msra.mxu0 0.0
    %687 = vmatprep.subr.mxu0 0.0
    %688 = vmatpush1.xpose.msra.mxu0 0.0
    %689 = vmatprep.subr.mxu0 0.0
    %690 = vmatpush1.xpose.msra.mxu0 0.0
    %691 = vmatprep.subr.mxu0 0.0
    %692 = vmatpush1.xpose.msra.mxu0 0.0
    %693 = vmatprep.subr.mxu0 0.0
    %694 = vmatpush1.xpose.msra.mxu0 0.0
    %695 = vmatprep.subr.mxu0 0.0
    %696 = vmatpush1.xpose.msra.mxu0 0.0
    %697 = vmatprep.subr.mxu0 0.0
    %698 = vmatpush1.xpose.msra.mxu0 0.0
    %699 = vmatprep.subr.mxu0 0.0
    %700 = vmatpush1.xpose.msra.mxu0 0.0
    %701 = vmatprep.subr.mxu0 0.0
    %702 = vmatpush1.xpose.msra.mxu0 0.0
    %703 = vmatprep.subr.mxu0 0.0
    %704 = vmatpush1.xpose.msra.mxu0 0.0
    %705 = vmatprep.subr.mxu0 0.0
    %706 = vmatpush1.xpose.msra.mxu0 0.0
    %707 = vmatprep.subr.mxu0 0.0
    %708 = vmatpush1.xpose.msra.mxu0 0.0
    %709 = vmatprep.subr.mxu0 0.0
    %710 = vmatpush1.xpose.msra.mxu0 0.0
    %711 = vmatprep.mubr.f32.mxu0 0.0
    %712 = vmatmul.mubr.f32.gmra.mrb[0].mxu0 %v639
    %v713 = vpop.f32.mrb[0].mxu0
    %v714 = vadd.f32 %v126, %v713
    %v715 = vpop.f32.mrb[0].mxu0
    %716 = vmatprep.mubr.f32.mxu0 0.0
    %717 = vmatmul.mubr.f32.gmra.mrb[0].mxu0 %v641
    %v718 = vpop.f32.mrb[0].mxu0
    %v719 = vadd.f32 %v127, %v718
    %v720 = vpop.f32.mrb[0].mxu0
    %721 = vdwg.mxu0
    %v722 = vsel %vm527, %v714, -inf
    %723 = vmax.xlane.f32.xlu0 %v722
    %v724 = vpop.xlane.xlu0 %723
    %v725 = vsel %vm527, %v719, -inf
    %726 = vmax.xlane.f32.xlu0 %v725
    %v727 = vpop.xlane.xlu0 %726
    %v728 = vsub.f32 %v714, %v724
    %v729 = vsub.f32 %v719, %v727
    %v730 = vmul.f32 %v728, 1.442695
    %v731 = vpow.pop %v730
    %v732 = vmul.f32 %v729, 1.442695
    %v733 = vpow.pop %v732
    %v734 = vsel %vm527, %v731, 0.0
    %735 = vadd.xlane.f32.xlu0 %v734
    %v736 = vpop.xlane.xlu0 %735
    %v737 = vsel %vm527, %v733, 0.0
    %738 = vadd.xlane.f32.xlu0 %v737
    %v739 = vpop.xlane.xlu0 %738
    %v740 = vrcp.pop %v736
    %v741 = vmul.f32 %v731, %v740
    %v742 = vrcp.pop %v739
    %v743 = vmul.f32 %v733, %v742
    %746 = vrot.lane.b32.xlu0 %v431, 120
    %v747 = vpop.permute.xlu0 %746
    %748 = vrot.lane.b32.xlu0 %v436, 120
    %v749 = vpop.permute.xlu0 %748
    %v753 = vsel %vm527, %v741, 0
    %v756 = vsel %vm527, %v743, 0
    %758 = vmatprep.subr.mxu0 0.0
    %759 = vmatpush1.msra.mxu0 %v747
    %760 = vmatprep.subr.mxu0 0.0
    %761 = vmatpush1.msra.mxu0 %v749
    %762 = vmatprep.subr.mxu0 0.0
    %763 = vmatpush1.msra.mxu0 0.0
    %764 = vmatprep.subr.mxu0 0.0
    %765 = vmatpush1.msra.mxu0 0.0
    %766 = vmatprep.subr.mxu0 0.0
    %767 = vmatpush1.msra.mxu0 0.0
    %768 = vmatprep.subr.mxu0 0.0
    %769 = vmatpush1.msra.mxu0 0.0
    %770 = vmatprep.subr.mxu0 0.0
    %771 = vmatpush1.msra.mxu0 0.0
    %772 = vmatprep.subr.mxu0 0.0
    %773 = vmatpush1.msra.mxu0 0.0
    %774 = vmatprep.subr.mxu0 0.0
    %775 = vmatpush1.msra.mxu0 0.0
    %776 = vmatprep.subr.mxu0 0.0
    %777 = vmatpush1.msra.mxu0 0.0
    %778 = vmatprep.subr.mxu0 0.0
    %779 = vmatpush1.msra.mxu0 0.0
    %780 = vmatprep.subr.mxu0 0.0
    %781 = vmatpush1.msra.mxu0 0.0
    %782 = vmatprep.subr.mxu0 0.0
    %783 = vmatpush1.msra.mxu0 0.0
    %784 = vmatprep.subr.mxu0 0.0
    %785 = vmatpush1.msra.mxu0 0.0
    %786 = vmatprep.subr.mxu0 0.0
    %787 = vmatpush1.msra.mxu0 0.0
    %788 = vmatprep.subr.mxu0 0.0
    %789 = vmatpush1.msra.mxu0 0.0
    %790 = vmatprep.subr.mxu0 0.0
    %791 = vmatpush1.msra.mxu0 0.0
    %792 = vmatprep.subr.mxu0 0.0
    %793 = vmatpush1.msra.mxu0 0.0
    %794 = vmatprep.subr.mxu0 0.0
    %795 = vmatpush1.msra.mxu0 0.0
    %796 = vmatprep.subr.mxu0 0.0
    %797 = vmatpush1.msra.mxu0 0.0
    %798 = vmatprep.subr.mxu0 0.0
    %799 = vmatpush1.msra.mxu0 0.0
    %800 = vmatprep.subr.mxu0 0.0
    %801 = vmatpush1.msra.mxu0 0.0
    %802 = vmatprep.subr.mxu0 0.0
    %803 = vmatpush1.msra.mxu0 0.0
    %804 = vmatprep.subr.mxu0 0.0
    %805 = vmatpush1.msra.mxu0 0.0
    %806 = vmatprep.subr.mxu0 0.0
    %807 = vmatpush1.msra.mxu0 0.0
    %808 = vmatprep.subr.mxu0 0.0
    %809 = vmatpush1.msra.mxu0 0.0
    %810 = vmatprep.subr.mxu0 0.0
    %811 = vmatpush1.msra.mxu0 0.0
    %812 = vmatprep.subr.mxu0 0.0
    %813 = vmatpush1.msra.mxu0 0.0
    %814 = vmatprep.subr.mxu0 0.0
    %815 = vmatpush1.msra.mxu0 0.0
    %816 = vmatprep.subr.mxu0 0.0
    %817 = vmatpush1.msra.mxu0 0.0
    %818 = vmatprep.subr.mxu0 0.0
    %819 = vmatpush1.msra.mxu0 0.0
    %820 = vmatprep.subr.mxu0 0.0
    %821 = vmatpush1.msra.mxu0 0.0
    %822 = vmatprep.mubr.f32.mxu0 0.0
    %823 = vmatmul.mubr.f32.gmra.mrb[0].mxu0 %v753
    %v824 = vpop.f32.mrb[0].mxu0
    %v825 = vadd.f32 0.0, %v824
    %v826 = vpop.f32.mrb[0].mxu0
    %827 = vmatprep.mubr.f32.mxu0 0.0
    %828 = vmatmul.mubr.f32.gmra.mrb[0].mxu0 %v756
    %v829 = vpop.f32.mrb[0].mxu0
    %v830 = vadd.f32 0.0, %v829
    %v831 = vpop.f32.mrb[0].mxu0
    %832 = vdwg.mxu0
    %v834 = vsel %vm439, %v825, 0
    %v837 = vsel %vm439, %v830, 0
    %839 = vmatprep.subr.mxu0 0.0
    %840 = vmatpush1.msra.mxu0 %v180
    %841 = vmatprep.subr.mxu0 0.0
    %842 = vmatpush1.msra.mxu0 0.0
    %843 = vmatprep.subr.mxu0 0.0
    %844 = vmatpush1.msra.mxu0 0.0
    %845 = vmatprep.subr.mxu0 0.0
    %846 = vmatpush1.msra.mxu0 0.0
    %847 = vmatprep.subr.mxu0 0.0
    %848 = vmatpush1.msra.mxu0 0.0
    %849 = vmatprep.subr.mxu0 0.0
    %850 = vmatpush1.msra.mxu0 0.0
    %851 = vmatprep.subr.mxu0 0.0
    %852 = vmatpush1.msra.mxu0 0.0
    %853 = vmatprep.subr.mxu0 0.0
    %854 = vmatpush1.msra.mxu0 0.0
    %855 = vmatprep.subr.mxu0 0.0
    %856 = vmatpush1.msra.mxu0 0.0
    %857 = vmatprep.subr.mxu0 0.0
    %858 = vmatpush1.msra.mxu0 0.0
    %859 = vmatprep.subr.mxu0 0.0
    %860 = vmatpush1.msra.mxu0 0.0
    %861 = vmatprep.subr.mxu0 0.0
    %862 = vmatpush1.msra.mxu0 0.0
    %863 = vmatprep.subr.mxu0 0.0
    %864 = vmatpush1.msra.mxu0 0.0
    %865 = vmatprep.subr.mxu0 0.0
    %866 = vmatpush1.msra.mxu0 0.0
    %867 = vmatprep.subr.mxu0 0.0
    %868 = vmatpush1.msra.mxu0 0.0
    %869 = vmatprep.subr.mxu0 0.0
    %870 = vmatpush1.msra.mxu0 0.0
    %871 = vmatprep.subr.mxu0 0.0
    %872 = vmatpush1.msra.mxu0 0.0
    %873 = vmatprep.subr.mxu0 0.0
    %874 = vmatpush1.msra.mxu0 0.0
    %875 = vmatprep.subr.mxu0 0.0
    %876 = vmatpush1.msra.mxu0 0.0
    %877 = vmatprep.subr.mxu0 0.0
    %878 = vmatpush1.msra.mxu0 0.0
    %879 = vmatprep.subr.mxu0 0.0
    %880 = vmatpush1.msra.mxu0 0.0
    %881 = vmatprep.subr.mxu0 0.0
    %882 = vmatpush1.msra.mxu0 0.0
    %883 = vmatprep.subr.mxu0 0.0
    %884 = vmatpush1.msra.mxu0 0.0
    %885 = vmatprep.subr.mxu0 0.0
    %886 = vmatpush1.msra.mxu0 0.0
    %887 = vmatprep.subr.mxu0 0.0
    %888 = vmatpush1.msra.mxu0 0.0
    %889 = vmatprep.subr.mxu0 0.0
    %890 = vmatpush1.msra.mxu0 0.0
    %891 = vmatprep.subr.mxu0 0.0
    %892 = vmatpush1.msra.mxu0 0.0
    %893 = vmatprep.subr.mxu0 0.0
    %894 = vmatpush1.msra.mxu0 0.0
    %895 = vmatprep.subr.mxu0 0.0
    %896 = vmatpush1.msra.mxu0 0.0
    %897 = vmatprep.subr.mxu0 0.0
    %898 = vmatpush1.msra.mxu0 0.0
    %899 = vmatprep.subr.mxu0 0.0
    %900 = vmatpush1.msra.mxu0 0.0
    %901 = vmatprep.subr.mxu0 0.0
    %902 = vmatpush1.msra.mxu0 0.0
    %903 = vmatprep.mubr.f32.mxu0 0.0
    %904 = vmatmul.mubr.f32.gmra.mrb[0].mxu0 %v834
    %v905 = vpop.f32.mrb[0].mxu0
    %v906 = vadd.f32 0.0, %v905
    %v907 = vpop.f32.mrb[0].mxu0
    %908 = vmatprep.mubr.f32.mxu0 0.0
    %909 = vmatmul.mubr.f32.gmra.mrb[0].mxu0 %v837
    %v910 = vpop.f32.mrb[0].mxu0
    %v911 = vadd.f32 0.0, %v910
    %v912 = vpop.f32.mrb[0].mxu0
    %913 = vdwg.mxu0
    %v915 = vsel %vm439, %v623, 0
    %v918 = vsel %vm439, %v628, 0
    %920 = vmatprep.subr.mxu0 0.0
    %921 = vmatpush1.msra.mxu0 %v179
    %922 = vmatprep.subr.mxu0 0.0
    %923 = vmatpush1.msra.mxu0 0.0
    %924 = vmatprep.subr.mxu0 0.0
    %925 = vmatpush1.msra.mxu0 0.0
    %926 = vmatprep.subr.mxu0 0.0
    %927 = vmatpush1.msra.mxu0 0.0
    %928 = vmatprep.subr.mxu0 0.0
    %929 = vmatpush1.msra.mxu0 0.0
    %930 = vmatprep.subr.mxu0 0.0
    %931 = vmatpush1.msra.mxu0 0.0
    %932 = vmatprep.subr.mxu0 0.0
    %933 = vmatpush1.msra.mxu0 0.0
    %934 = vmatprep.subr.mxu0 0.0
    %935 = vmatpush1.msra.mxu0 0.0
    %936 = vmatprep.subr.mxu0 0.0
    %937 = vmatpush1.msra.mxu0 0.0
    %938 = vmatprep.subr.mxu0 0.0
    %939 = vmatpush1.msra.mxu0 0.0
    %940 = vmatprep.subr.mxu0 0.0
    %941 = vmatpush1.msra.mxu0 0.0
    %942 = vmatprep.subr.mxu0 0.0
    %943 = vmatpush1.msra.mxu0 0.0
    %944 = vmatprep.subr.mxu0 0.0
    %945 = vmatpush1.msra.mxu0 0.0
    %946 = vmatprep.subr.mxu0 0.0
    %947 = vmatpush1.msra.mxu0 0.0
    %948 = vmatprep.subr.mxu0 0.0
    %949 = vmatpush1.msra.mxu0 0.0
    %950 = vmatprep.subr.mxu0 0.0
    %951 = vmatpush1.msra.mxu0 0.0
    %952 = vmatprep.subr.mxu0 0.0
    %953 = vmatpush1.msra.mxu0 0.0
    %954 = vmatprep.subr.mxu0 0.0
    %955 = vmatpush1.msra.mxu0 0.0
    %956 = vmatprep.subr.mxu0 0.0
    %957 = vmatpush1.msra.mxu0 0.0
    %958 = vmatprep.subr.mxu0 0.0
    %959 = vmatpush1.msra.mxu0 0.0
    %960 = vmatprep.subr.mxu0 0.0
    %961 = vmatpush1.msra.mxu0 0.0
    %962 = vmatprep.subr.mxu0 0.0
    %963 = vmatpush1.msra.mxu0 0.0
    %964 = vmatprep.subr.mxu0 0.0
    %965 = vmatpush1.msra.mxu0 0.0
    %966 = vmatprep.subr.mxu0 0.0
    %967 = vmatpush1.msra.mxu0 0.0
    %968 = vmatprep.subr.mxu0 0.0
    %969 = vmatpush1.msra.mxu0 0.0
    %970 = vmatprep.subr.mxu0 0.0
    %971 = vmatpush1.msra.mxu0 0.0
    %972 = vmatprep.subr.mxu0 0.0
    %973 = vmatpush1.msra.mxu0 0.0
    %974 = vmatprep.subr.mxu0 0.0
    %975 = vmatpush1.msra.mxu0 0.0
    %976 = vmatprep.subr.mxu0 0.0
    %977 = vmatpush1.msra.mxu0 0.0
    %978 = vmatprep.subr.mxu0 0.0
    %979 = vmatpush1.msra.mxu0 0.0
    %980 = vmatprep.subr.mxu0 0.0
    %981 = vmatpush1.msra.mxu0 0.0
    %982 = vmatprep.subr.mxu0 0.0
    %983 = vmatpush1.msra.mxu0 0.0
    %984 = vmatprep.mubr.f32.mxu0 0.0
    %985 = vmatmul.mubr.f32.gmra.mrb[0].mxu0 %v915
    %v986 = vpop.f32.mrb[0].mxu0
    %v987 = vadd.f32 %v906, %v986
    %v988 = vpop.f32.mrb[0].mxu0
    %989 = vmatprep.mubr.f32.mxu0 0.0
    %990 = vmatmul.mubr.f32.gmra.mrb[0].mxu0 %v918
    %v991 = vpop.f32.mrb[0].mxu0
    %v992 = vadd.f32 %v911, %v991
    %v993 = vpop.f32.mrb[0].mxu0
    %994 = vdwg.mxu0
    %995 = vrot.lane.b32.xlu0 %v271, 112
    %v996 = vpop.permute.xlu0 %995
    %997 = vrot.lane.b32.xlu0 %v272, 112
    %v998 = vpop.permute.xlu0 %997
    %999 = vrot.lane.b32.xlu0 %v348, 112
    %v1000 = vpop.permute.xlu0 %999
    %1001 = vrot.lane.b32.xlu0 %v353, 112
    %v1002 = vpop.permute.xlu0 %1001
    %v1003 = vsel %vm439, %v996, 0
    %v1005 = vsel %vm439, %v998, 0
    %v1007 = vsel %vm439, %v1000, 0
    %v1009 = vsel %vm439, %v1002, 0
    %1011 = vmatprep.subr.mxu0 0.0
    %1012 = vmatpush1.xpose.msra.mxu0 %v1007
    %1013 = vmatprep.subr.mxu0 0.0
    %1014 = vmatpush1.xpose.msra.mxu0 %v1009
    %1015 = vmatprep.subr.mxu0 0.0
    %1016 = vmatpush1.xpose.msra.mxu0 0.0
    %1017 = vmatprep.subr.mxu0 0.0
    %1018 = vmatpush1.xpose.msra.mxu0 0.0
    %1019 = vmatprep.subr.mxu0 0.0
    %1020 = vmatpush1.xpose.msra.mxu0 0.0
    %1021 = vmatprep.subr.mxu0 0.0
    %1022 = vmatpush1.xpose.msra.mxu0 0.0
    %1023 = vmatprep.subr.mxu0 0.0
    %1024 = vmatpush1.xpose.msra.mxu0 0.0
    %1025 = vmatprep.subr.mxu0 0.0
    %1026 = vmatpush1.xpose.msra.mxu0 0.0
    %1027 = vmatprep.subr.mxu0 0.0
    %1028 = vmatpush1.xpose.msra.mxu0 0.0
    %1029 = vmatprep.subr.mxu0 0.0
    %1030 = vmatpush1.xpose.msra.mxu0 0.0
    %1031 = vmatprep.subr.mxu0 0.0
    %1032 = vmatpush1.xpose.msra.mxu0 0.0
    %1033 = vmatprep.subr.mxu0 0.0
    %1034 = vmatpush1.xpose.msra.mxu0 0.0
    %1035 = vmatprep.subr.mxu0 0.0
    %1036 = vmatpush1.xpose.msra.mxu0 0.0
    %1037 = vmatprep.subr.mxu0 0.0
    %1038 = vmatpush1.xpose.msra.mxu0 0.0
    %1039 = vmatprep.subr.mxu0 0.0
    %1040 = vmatpush1.xpose.msra.mxu0 0.0
    %1041 = vmatprep.subr.mxu0 0.0
    %1042 = vmatpush1.xpose.msra.mxu0 0.0
    %1043 = vmatprep.subr.mxu0 0.0
    %1044 = vmatpush1.xpose.msra.mxu0 0.0
    %1045 = vmatprep.subr.mxu0 0.0
    %1046 = vmatpush1.xpose.msra.mxu0 0.0
    %1047 = vmatprep.subr.mxu0 0.0
    %1048 = vmatpush1.xpose.msra.mxu0 0.0
    %1049 = vmatprep.subr.mxu0 0.0
    %1050 = vmatpush1.xpose.msra.mxu0 0.0
    %1051 = vmatprep.subr.mxu0 0.0
    %1052 = vmatpush1.xpose.msra.mxu0 0.0
    %1053 = vmatprep.subr.mxu0 0.0
    %1054 = vmatpush1.xpose.msra.mxu0 0.0
    %1055 = vmatprep.subr.mxu0 0.0
    %1056 = vmatpush1.xpose.msra.mxu0 0.0
    %1057 = vmatprep.subr.mxu0 0.0
    %1058 = vmatpush1.xpose.msra.mxu0 0.0
    %1059 = vmatprep.subr.mxu0 0.0
    %1060 = vmatpush1.xpose.msra.mxu0 0.0
    %1061 = vmatprep.subr.mxu0 0.0
    %1062 = vmatpush1.xpose.msra.mxu0 0.0
    %1063 = vmatprep.subr.mxu0 0.0
    %1064 = vmatpush1.xpose.msra.mxu0 0.0
    %1065 = vmatprep.subr.mxu0 0.0
    %1066 = vmatpush1.xpose.msra.mxu0 0.0
    %1067 = vmatprep.subr.mxu0 0.0
    %1068 = vmatpush1.xpose.msra.mxu0 0.0
    %1069 = vmatprep.subr.mxu0 0.0
    %1070 = vmatpush1.xpose.msra.mxu0 0.0
    %1071 = vmatprep.subr.mxu0 0.0
    %1072 = vmatpush1.xpose.msra.mxu0 0.0
    %1073 = vmatprep.subr.mxu0 0.0
    %1074 = vmatpush1.xpose.msra.mxu0 0.0
    %1075 = vmatprep.mubr.f32.mxu0 0.0
    %1076 = vmatmul.mubr.f32.gmra.mrb[0].mxu0 %v1003
    %v1077 = vpop.f32.mrb[0].mxu0
    %v1078 = vadd.f32 %v126, %v1077
    %v1079 = vpop.f32.mrb[0].mxu0
    %1080 = vmatprep.mubr.f32.mxu0 0.0
    %1081 = vmatmul.mubr.f32.gmra.mrb[0].mxu0 %v1005
    %v1082 = vpop.f32.mrb[0].mxu0
    %v1083 = vadd.f32 %v127, %v1082
    %v1084 = vpop.f32.mrb[0].mxu0
    %1085 = vdwg.mxu0
    %v1086 = vsel %vm527, %v1078, -inf
    %1087 = vmax.xlane.f32.xlu0 %v1086
    %v1088 = vpop.xlane.xlu0 %1087
    %v1089 = vsel %vm527, %v1083, -inf
    %1090 = vmax.xlane.f32.xlu0 %v1089
    %v1091 = vpop.xlane.xlu0 %1090
    %v1092 = vsub.f32 %v1078, %v1088
    %v1093 = vsub.f32 %v1083, %v1091
    %v1094 = vmul.f32 %v1092, 1.442695
    %v1095 = vpow.pop %v1094
    %v1096 = vmul.f32 %v1093, 1.442695
    %v1097 = vpow.pop %v1096
    %v1098 = vsel %vm527, %v1095, 0.0
    %1099 = vadd.xlane.f32.xlu0 %v1098
    %v1100 = vpop.xlane.xlu0 %1099
    %v1101 = vsel %vm527, %v1097, 0.0
    %1102 = vadd.xlane.f32.xlu0 %v1101
    %v1103 = vpop.xlane.xlu0 %1102
    %v1104 = vrcp.pop %v1100
    %v1105 = vmul.f32 %v1095, %v1104
    %v1106 = vrcp.pop %v1103
    %v1107 = vmul.f32 %v1097, %v1106
    %1108 = vrot.lane.b32.xlu0 %v431, 112
    %v1109 = vpop.permute.xlu0 %1108
    %1110 = vrot.lane.b32.xlu0 %v436, 112
    %v1111 = vpop.permute.xlu0 %1110
    %v1115 = vsel %vm527, %v1105, 0
    %v1118 = vsel %vm527, %v1107, 0
    %1120 = vmatprep.subr.mxu0 0.0
    %1121 = vmatpush1.msra.mxu0 %v1109
    %1122 = vmatprep.subr.mxu0 0.0
    %1123 = vmatpush1.msra.mxu0 %v1111
    %1124 = vmatprep.subr.mxu0 0.0
    %1125 = vmatpush1.msra.mxu0 0.0
    %1126 = vmatprep.subr.mxu0 0.0
    %1127 = vmatpush1.msra.mxu0 0.0
    %1128 = vmatprep.subr.mxu0 0.0
    %1129 = vmatpush1.msra.mxu0 0.0
    %1130 = vmatprep.subr.mxu0 0.0
    %1131 = vmatpush1.msra.mxu0 0.0
    %1132 = vmatprep.subr.mxu0 0.0
    %1133 = vmatpush1.msra.mxu0 0.0
    %1134 = vmatprep.subr.mxu0 0.0
    %1135 = vmatpush1.msra.mxu0 0.0
    %1136 = vmatprep.subr.mxu0 0.0
    %1137 = vmatpush1.msra.mxu0 0.0
    %1138 = vmatprep.subr.mxu0 0.0
    %1139 = vmatpush1.msra.mxu0 0.0
    %1140 = vmatprep.subr.mxu0 0.0
    %1141 = vmatpush1.msra.mxu0 0.0
    %1142 = vmatprep.subr.mxu0 0.0
    %1143 = vmatpush1.msra.mxu0 0.0
    %1144 = vmatprep.subr.mxu0 0.0
    %1145 = vmatpush1.msra.mxu0 0.0
    %1146 = vmatprep.subr.mxu0 0.0
    %1147 = vmatpush1.msra.mxu0 0.0
    %1148 = vmatprep.subr.mxu0 0.0
    %1149 = vmatpush1.msra.mxu0 0.0
    %1150 = vmatprep.subr.mxu0 0.0
    %1151 = vmatpush1.msra.mxu0 0.0
    %1152 = vmatprep.subr.mxu0 0.0
    %1153 = vmatpush1.msra.mxu0 0.0
    %1154 = vmatprep.subr.mxu0 0.0
    %1155 = vmatpush1.msra.mxu0 0.0
    %1156 = vmatprep.subr.mxu0 0.0
    %1157 = vmatpush1.msra.mxu0 0.0
    %1158 = vmatprep.subr.mxu0 0.0
    %1159 = vmatpush1.msra.mxu0 0.0
    %1160 = vmatprep.subr.mxu0 0.0
    %1161 = vmatpush1.msra.mxu0 0.0
    %1162 = vmatprep.subr.mxu0 0.0
    %1163 = vmatpush1.msra.mxu0 0.0
    %1164 = vmatprep.subr.mxu0 0.0
    %1165 = vmatpush1.msra.mxu0 0.0
    %1166 = vmatprep.subr.mxu0 0.0
    %1167 = vmatpush1.msra.mxu0 0.0
    %1168 = vmatprep.subr.mxu0 0.0
    %1169 = vmatpush1.msra.mxu0 0.0
    %1170 = vmatprep.subr.mxu0 0.0
    %1171 = vmatpush1.msra.mxu0 0.0
    %1172 = vmatprep.subr.mxu0 0.0
    %1173 = vmatpush1.msra.mxu0 0.0
    %1174 = vmatprep.subr.mxu0 0.0
    %1175 = vmatpush1.msra.mxu0 0.0
    %1176 = vmatprep.subr.mxu0 0.0
    %1177 = vmatpush1.msra.mxu0 0.0
    %1178 = vmatprep.subr.mxu0 0.0
    %1179 = vmatpush1.msra.mxu0 0.0
    %1180 = vmatprep.subr.mxu0 0.0
    %1181 = vmatpush1.msra.mxu0 0.0
    %1182 = vmatprep.subr.mxu0 0.0
    %1183 = vmatpush1.msra.mxu0 0.0
    %1184 = vmatprep.mubr.f32.mxu0 0.0
    %1185 = vmatmul.mubr.f32.gmra.mrb[0].mxu0 %v1115
    %v1186 = vpop.f32.mrb[0].mxu0
    %v1187 = vadd.f32 0.0, %v1186
    %v1188 = vpop.f32.mrb[0].mxu0
    %1189 = vmatprep.mubr.f32.mxu0 0.0
    %1190 = vmatmul.mubr.f32.gmra.mrb[0].mxu0 %v1118
    %v1191 = vpop.f32.mrb[0].mxu0
    %v1192 = vadd.f32 0.0, %v1191
    %v1193 = vpop.f32.mrb[0].mxu0
    %1194 = vdwg.mxu0
    %v1196 = vsel %vm439, %v1187, 0
    %v1199 = vsel %vm439, %v1192, 0
    %1201 = vmatprep.subr.mxu0 0.0
    %1202 = vmatpush1.msra.mxu0 %v181
    %1203 = vmatprep.subr.mxu0 0.0
    %1204 = vmatpush1.msra.mxu0 0.0
    %1205 = vmatprep.subr.mxu0 0.0
    %1206 = vmatpush1.msra.mxu0 0.0
    %1207 = vmatprep.subr.mxu0 0.0
    %1208 = vmatpush1.msra.mxu0 0.0
    %1209 = vmatprep.subr.mxu0 0.0
    %1210 = vmatpush1.msra.mxu0 0.0
    %1211 = vmatprep.subr.mxu0 0.0
    %1212 = vmatpush1.msra.mxu0 0.0
    %1213 = vmatprep.subr.mxu0 0.0
    %1214 = vmatpush1.msra.mxu0 0.0
    %1215 = vmatprep.subr.mxu0 0.0
    %1216 = vmatpush1.msra.mxu0 0.0
    %1217 = vmatprep.subr.mxu0 0.0
    %1218 = vmatpush1.msra.mxu0 0.0
    %1219 = vmatprep.subr.mxu0 0.0
    %1220 = vmatpush1.msra.mxu0 0.0
    %1221 = vmatprep.subr.mxu0 0.0
    %1222 = vmatpush1.msra.mxu0 0.0
    %1223 = vmatprep.subr.mxu0 0.0
    %1224 = vmatpush1.msra.mxu0 0.0
    %1225 = vmatprep.subr.mxu0 0.0
    %1226 = vmatpush1.msra.mxu0 0.0
    %1227 = vmatprep.subr.mxu0 0.0
    %1228 = vmatpush1.msra.mxu0 0.0
    %1229 = vmatprep.subr.mxu0 0.0
    %1230 = vmatpush1.msra.mxu0 0.0
    %1231 = vmatprep.subr.mxu0 0.0
    %1232 = vmatpush1.msra.mxu0 0.0
    %1233 = vmatprep.subr.mxu0 0.0
    %1234 = vmatpush1.msra.mxu0 0.0
    %1235 = vmatprep.subr.mxu0 0.0
    %1236 = vmatpush1.msra.mxu0 0.0
    %1237 = vmatprep.subr.mxu0 0.0
    %1238 = vmatpush1.msra.mxu0 0.0
    %1239 = vmatprep.subr.mxu0 0.0
    %1240 = vmatpush1.msra.mxu0 0.0
    %1241 = vmatprep.subr.mxu0 0.0
    %1242 = vmatpush1.msra.mxu0 0.0
    %1243 = vmatprep.subr.mxu0 0.0
    %1244 = vmatpush1.msra.mxu0 0.0
    %1245 = vmatprep.subr.mxu0 0.0
    %1246 = vmatpush1.msra.mxu0 0.0
    %1247 = vmatprep.subr.mxu0 0.0
    %1248 = vmatpush1.msra.mxu0 0.0
    %1249 = vmatprep.subr.mxu0 0.0
    %1250 = vmatpush1.msra.mxu0 0.0
    %1251 = vmatprep.subr.mxu0 0.0
    %1252 = vmatpush1.msra.mxu0 0.0
    %1253 = vmatprep.subr.mxu0 0.0
    %1254 = vmatpush1.msra.mxu0 0.0
    %1255 = vmatprep.subr.mxu0 0.0
    %1256 = vmatpush1.msra.mxu0 0.0
    %1257 = vmatprep.subr.mxu0 0.0
    %1258 = vmatpush1.msra.mxu0 0.0
    %1259 = vmatprep.subr.mxu0 0.0
    %1260 = vmatpush1.msra.mxu0 0.0
    %1261 = vmatprep.subr.mxu0 0.0
    %1262 = vmatpush1.msra.mxu0 0.0
    %1263 = vmatprep.subr.mxu0 0.0
    %1264 = vmatpush1.msra.mxu0 0.0
    %1265 = vmatprep.mubr.f32.mxu0 0.0
    %1266 = vmatmul.mubr.f32.gmra.mrb[0].mxu0 %v1196
    %v1267 = vpop.f32.mrb[0].mxu0
    %v1268 = vadd.f32 0.0, %v1267
    %v1269 = vpop.f32.mrb[0].mxu0
    %1270 = vmatprep.mubr.f32.mxu0 0.0
    %1271 = vmatmul.mubr.f32.gmra.mrb[0].mxu0 %v1199
    %v1272 = vpop.f32.mrb[0].mxu0
    %v1273 = vadd.f32 0.0, %v1272
    %v1274 = vpop.f32.mrb[0].mxu0
    %1275 = vdwg.mxu0
    %v1276 = vadd.f32 %v987, %v1268
    %v1277 = vadd.f32 %v992, %v1273
    %1278 = vrot.lane.b32.xlu0 %v271, 104
    %v1279 = vpop.permute.xlu0 %1278
    %1280 = vrot.lane.b32.xlu0 %v272, 104
    %v1281 = vpop.permute.xlu0 %1280
    %1282 = vrot.lane.b32.xlu0 %v348, 104
    %v1283 = vpop.permute.xlu0 %1282
    %1284 = vrot.lane.b32.xlu0 %v353, 104
    %v1285 = vpop.permute.xlu0 %1284
    %v1286 = vsel %vm439, %v1279, 0
    %v1288 = vsel %vm439, %v1281, 0
    %v1290 = vsel %vm439, %v1283, 0
    %v1292 = vsel %vm439, %v1285, 0
    %1294 = vmatprep.subr.mxu0 0.0
    %1295 = vmatpush1.xpose.msra.mxu0 %v1290
    %1296 = vmatprep.subr.mxu0 0.0
    %1297 = vmatpush1.xpose.msra.mxu0 %v1292
    %1298 = vmatprep.subr.mxu0 0.0
    %1299 = vmatpush1.xpose.msra.mxu0 0.0
    %1300 = vmatprep.subr.mxu0 0.0
    %1301 = vmatpush1.xpose.msra.mxu0 0.0
    %1302 = vmatprep.subr.mxu0 0.0
    %1303 = vmatpush1.xpose.msra.mxu0 0.0
    %1304 = vmatprep.subr.mxu0 0.0
    %1305 = vmatpush1.xpose.msra.mxu0 0.0
    %1306 = vmatprep.subr.mxu0 0.0
    %1307 = vmatpush1.xpose.msra.mxu0 0.0
    %1308 = vmatprep.subr.mxu0 0.0
    %1309 = vmatpush1.xpose.msra.mxu0 0.0
    %1310 = vmatprep.subr.mxu0 0.0
    %1311 = vmatpush1.xpose.msra.mxu0 0.0
    %1312 = vmatprep.subr.mxu0 0.0
    %1313 = vmatpush1.xpose.msra.mxu0 0.0
    %1314 = vmatprep.subr.mxu0 0.0
    %1315 = vmatpush1.xpose.msra.mxu0 0.0
    %1316 = vmatprep.subr.mxu0 0.0
    %1317 = vmatpush1.xpose.msra.mxu0 0.0
    %1318 = vmatprep.subr.mxu0 0.0
    %1319 = vmatpush1.xpose.msra.mxu0 0.0
    %1320 = vmatprep.subr.mxu0 0.0
    %1321 = vmatpush1.xpose.msra.mxu0 0.0
    %1322 = vmatprep.subr.mxu0 0.0
    %1323 = vmatpush1.xpose.msra.mxu0 0.0
    %1324 = vmatprep.subr.mxu0 0.0
    %1325 = vmatpush1.xpose.msra.mxu0 0.0
    %1326 = vmatprep.subr.mxu0 0.0
    %1327 = vmatpush1.xpose.msra.mxu0 0.0
    %1328 = vmatprep.subr.mxu0 0.0
    %1329 = vmatpush1.xpose.msra.mxu0 0.0
    %1330 = vmatprep.subr.mxu0 0.0
    %1331 = vmatpush1.xpose.msra.mxu0 0.0
    %1332 = vmatprep.subr.mxu0 0.0
    %1333 = vmatpush1.xpose.msra.mxu0 0.0
    %1334 = vmatprep.subr.mxu0 0.0
    %1335 = vmatpush1.xpose.msra.mxu0 0.0
    %1336 = vmatprep.subr.mxu0 0.0
    %1337 = vmatpush1.xpose.msra.mxu0 0.0
    %1338 = vmatprep.subr.mxu0 0.0
    %1339 = vmatpush1.xpose.msra.mxu0 0.0
    %1340 = vmatprep.subr.mxu0 0.0
    %1341 = vmatpush1.xpose.msra.mxu0 0.0
    %1342 = vmatprep.subr.mxu0 0.0
    %1343 = vmatpush1.xpose.msra.mxu0 0.0
    %1344 = vmatprep.subr.mxu0 0.0
    %1345 = vmatpush1.xpose.msra.mxu0 0.0
    %1346 = vmatprep.subr.mxu0 0.0
    %1347 = vmatpush1.xpose.msra.mxu0 0.0
    %1348 = vmatprep.subr.mxu0 0.0
    %1349 = vmatpush1.xpose.msra.mxu0 0.0
    %1350 = vmatprep.subr.mxu0 0.0
    %1351 = vmatpush1.xpose.msra.mxu0 0.0
    %1352 = vmatprep.subr.mxu0 0.0
    %1353 = vmatpush1.xpose.msra.mxu0 0.0
    %1354 = vmatprep.subr.mxu0 0.0
    %1355 = vmatpush1.xpose.msra.mxu0 0.0
    %1356 = vmatprep.subr.mxu0 0.0
    %1357 = vmatpush1.xpose.msra.mxu0 0.0
    %1358 = vmatprep.mubr.f32.mxu0 0.0
    %1359 = vmatmul.mubr.f32.gmra.mrb[0].mxu0 %v1286
    %v1360 = vpop.f32.mrb[0].mxu0
    %v1361 = vadd.f32 %v126, %v1360
    %v1362 = vpop.f32.mrb[0].mxu0
    %1363 = vmatprep.mubr.f32.mxu0 0.0
    %1364 = vmatmul.mubr.f32.gmra.mrb[0].mxu0 %v1288
    %v1365 = vpop.f32.mrb[0].mxu0
    %v1366 = vadd.f32 %v127, %v1365
    %v1367 = vpop.f32.mrb[0].mxu0
    %1368 = vdwg.mxu0
    %v1369 = vsel %vm527, %v1361, -inf
    %1370 = vmax.xlane.f32.xlu0 %v1369
    %v1371 = vpop.xlane.xlu0 %1370
    %v1372 = vsel %vm527, %v1366, -inf
    %1373 = vmax.xlane.f32.xlu0 %v1372
    %v1374 = vpop.xlane.xlu0 %1373
    %v1375 = vsub.f32 %v1361, %v1371
    %v1376 = vsub.f32 %v1366, %v1374
    %v1377 = vmul.f32 %v1375, 1.442695
    %v1378 = vpow.pop %v1377
    %v1379 = vmul.f32 %v1376, 1.442695
    %v1380 = vpow.pop %v1379
    %v1381 = vsel %vm527, %v1378, 0.0
    %1382 = vadd.xlane.f32.xlu0 %v1381
    %v1383 = vpop.xlane.xlu0 %1382
    %v1384 = vsel %vm527, %v1380, 0.0
    %1385 = vadd.xlane.f32.xlu0 %v1384
    %v1386 = vpop.xlane.xlu0 %1385
    %v1387 = vrcp.pop %v1383
    %v1388 = vmul.f32 %v1378, %v1387
    %v1389 = vrcp.pop %v1386
    %v1390 = vmul.f32 %v1380, %v1389
    %1391 = vrot.lane.b32.xlu0 %v431, 104
    %v1392 = vpop.permute.xlu0 %1391
    %1393 = vrot.lane.b32.xlu0 %v436, 104
    %v1394 = vpop.permute.xlu0 %1393
    %v1398 = vsel %vm527, %v1388, 0
    %v1401 = vsel %vm527, %v1390, 0
    %1403 = vmatprep.subr.mxu0 0.0
    %1404 = vmatpush1.msra.mxu0 %v1392
    %1405 = vmatprep.subr.mxu0 0.0
    %1406 = vmatpush1.msra.mxu0 %v1394
    %1407 = vmatprep.subr.mxu0 0.0
    %1408 = vmatpush1.msra.mxu0 0.0
    %1409 = vmatprep.subr.mxu0 0.0
    %1410 = vmatpush1.msra.mxu0 0.0
    %1411 = vmatprep.subr.mxu0 0.0
    %1412 = vmatpush1.msra.mxu0 0.0
    %1413 = vmatprep.subr.mxu0 0.0
    %1414 = vmatpush1.msra.mxu0 0.0
    %1415 = vmatprep.subr.mxu0 0.0
    %1416 = vmatpush1.msra.mxu0 0.0
    %1417 = vmatprep.subr.mxu0 0.0
    %1418 = vmatpush1.msra.mxu0 0.0
    %1419 = vmatprep.subr.mxu0 0.0
    %1420 = vmatpush1.msra.mxu0 0.0
    %1421 = vmatprep.subr.mxu0 0.0
    %1422 = vmatpush1.msra.mxu0 0.0
    %1423 = vmatprep.subr.mxu0 0.0
    %1424 = vmatpush1.msra.mxu0 0.0
    %1425 = vmatprep.subr.mxu0 0.0
    %1426 = vmatpush1.msra.mxu0 0.0
    %1427 = vmatprep.subr.mxu0 0.0
    %1428 = vmatpush1.msra.mxu0 0.0
    %1429 = vmatprep.subr.mxu0 0.0
    %1430 = vmatpush1.msra.mxu0 0.0
    %1431 = vmatprep.subr.mxu0 0.0
    %1432 = vmatpush1.msra.mxu0 0.0
    %1433 = vmatprep.subr.mxu0 0.0
    %1434 = vmatpush1.msra.mxu0 0.0
    %1435 = vmatprep.subr.mxu0 0.0
    %1436 = vmatpush1.msra.mxu0 0.0
    %1437 = vmatprep.subr.mxu0 0.0
    %1438 = vmatpush1.msra.mxu0 0.0
    %1439 = vmatprep.subr.mxu0 0.0
    %1440 = vmatpush1.msra.mxu0 0.0
    %1441 = vmatprep.subr.mxu0 0.0
    %1442 = vmatpush1.msra.mxu0 0.0
    %1443 = vmatprep.subr.mxu0 0.0
    %1444 = vmatpush1.msra.mxu0 0.0
    %1445 = vmatprep.subr.mxu0 0.0
    %1446 = vmatpush1.msra.mxu0 0.0
    %1447 = vmatprep.subr.mxu0 0.0
    %1448 = vmatpush1.msra.mxu0 0.0
    %1449 = vmatprep.subr.mxu0 0.0
    %1450 = vmatpush1.msra.mxu0 0.0
    %1451 = vmatprep.subr.mxu0 0.0
    %1452 = vmatpush1.msra.mxu0 0.0
    %1453 = vmatprep.subr.mxu0 0.0
    %1454 = vmatpush1.msra.mxu0 0.0
    %1455 = vmatprep.subr.mxu0 0.0
    %1456 = vmatpush1.msra.mxu0 0.0
    %1457 = vmatprep.subr.mxu0 0.0
    %1458 = vmatpush1.msra.mxu0 0.0
    %1459 = vmatprep.subr.mxu0 0.0
    %1460 = vmatpush1.msra.mxu0 0.0
    %1461 = vmatprep.subr.mxu0 0.0
    %1462 = vmatpush1.msra.mxu0 0.0
    %1463 = vmatprep.subr.mxu0 0.0
    %1464 = vmatpush1.msra.mxu0 0.0
    %1465 = vmatprep.subr.mxu0 0.0
    %1466 = vmatpush1.msra.mxu0 0.0
    %1467 = vmatprep.mubr.f32.mxu0 0.0
    %1468 = vmatmul.mubr.f32.gmra.mrb[0].mxu0 %v1398
    %v1469 = vpop.f32.mrb[0].mxu0
    %v1470 = vadd.f32 0.0, %v1469
    %v1471 = vpop.f32.mrb[0].mxu0
    %1472 = vmatprep.mubr.f32.mxu0 0.0
    %1473 = vmatmul.mubr.f32.gmra.mrb[0].mxu0 %v1401
    %v1474 = vpop.f32.mrb[0].mxu0
    %v1475 = vadd.f32 0.0, %v1474
    %v1476 = vpop.f32.mrb[0].mxu0
    %1477 = vdwg.mxu0
    %v1479 = vsel %vm439, %v1470, 0
    %v1482 = vsel %vm439, %v1475, 0
    %1484 = vmatprep.subr.mxu0 0.0
    %1485 = vmatpush1.msra.mxu0 %v182
    %1486 = vmatprep.subr.mxu0 0.0
    %1487 = vmatpush1.msra.mxu0 0.0
    %1488 = vmatprep.subr.mxu0 0.0
    %1489 = vmatpush1.msra.mxu0 0.0
    %1490 = vmatprep.subr.mxu0 0.0
    %1491 = vmatpush1.msra.mxu0 0.0
    %1492 = vmatprep.subr.mxu0 0.0
    %1493 = vmatpush1.msra.mxu0 0.0
    %1494 = vmatprep.subr.mxu0 0.0
    %1495 = vmatpush1.msra.mxu0 0.0
    %1496 = vmatprep.subr.mxu0 0.0
    %1497 = vmatpush1.msra.mxu0 0.0
    %1498 = vmatprep.subr.mxu0 0.0
    %1499 = vmatpush1.msra.mxu0 0.0
    %1500 = vmatprep.subr.mxu0 0.0
    %1501 = vmatpush1.msra.mxu0 0.0
    %1502 = vmatprep.subr.mxu0 0.0
    %1503 = vmatpush1.msra.mxu0 0.0
    %1504 = vmatprep.subr.mxu0 0.0
    %1505 = vmatpush1.msra.mxu0 0.0
    %1506 = vmatprep.subr.mxu0 0.0
    %1507 = vmatpush1.msra.mxu0 0.0
    %1508 = vmatprep.subr.mxu0 0.0
    %1509 = vmatpush1.msra.mxu0 0.0
    %1510 = vmatprep.subr.mxu0 0.0
    %1511 = vmatpush1.msra.mxu0 0.0
    %1512 = vmatprep.subr.mxu0 0.0
    %1513 = vmatpush1.msra.mxu0 0.0
    %1514 = vmatprep.subr.mxu0 0.0
    %1515 = vmatpush1.msra.mxu0 0.0
    %1516 = vmatprep.subr.mxu0 0.0
    %1517 = vmatpush1.msra.mxu0 0.0
    %1518 = vmatprep.subr.mxu0 0.0
    %1519 = vmatpush1.msra.mxu0 0.0
    %1520 = vmatprep.subr.mxu0 0.0
    %1521 = vmatpush1.msra.mxu0 0.0
    %1522 = vmatprep.subr.mxu0 0.0
    %1523 = vmatpush1.msra.mxu0 0.0
    %1524 = vmatprep.subr.mxu0 0.0
    %1525 = vmatpush1.msra.mxu0 0.0
    %1526 = vmatprep.subr.mxu0 0.0
    %1527 = vmatpush1.msra.mxu0 0.0
    %1528 = vmatprep.subr.mxu0 0.0
    %1529 = vmatpush1.msra.mxu0 0.0
    %1530 = vmatprep.subr.mxu0 0.0
    %1531 = vmatpush1.msra.mxu0 0.0
    %1532 = vmatprep.subr.mxu0 0.0
    %1533 = vmatpush1.msra.mxu0 0.0
    %1534 = vmatprep.subr.mxu0 0.0
    %1535 = vmatpush1.msra.mxu0 0.0
    %1536 = vmatprep.subr.mxu0 0.0
    %1537 = vmatpush1.msra.mxu0 0.0
    %1538 = vmatprep.subr.mxu0 0.0
    %1539 = vmatpush1.msra.mxu0 0.0
    %1540 = vmatprep.subr.mxu0 0.0
    %1541 = vmatpush1.msra.mxu0 0.0
    %1542 = vmatprep.subr.mxu0 0.0
    %1543 = vmatpush1.msra.mxu0 0.0
    %1544 = vmatprep.subr.mxu0 0.0
    %1545 = vmatpush1.msra.mxu0 0.0
    %1546 = vmatprep.subr.mxu0 0.0
    %1547 = vmatpush1.msra.mxu0 0.0
    %1548 = vmatprep.mubr.f32.mxu0 0.0
    %1549 = vmatmul.mubr.f32.gmra.mrb[0].mxu0 %v1479
    %v1550 = vpop.f32.mrb[0].mxu0
    %v1551 = vadd.f32 0.0, %v1550
    %v1552 = vpop.f32.mrb[0].mxu0
    %1553 = vmatprep.mubr.f32.mxu0 0.0
    %1554 = vmatmul.mubr.f32.gmra.mrb[0].mxu0 %v1482
    %v1555 = vpop.f32.mrb[0].mxu0
    %v1556 = vadd.f32 0.0, %v1555
    %v1557 = vpop.f32.mrb[0].mxu0
    %1558 = vdwg.mxu0
    %v1559 = vadd.f32 %v1276, %v1551
    %v1560 = vadd.f32 %v1277, %v1556
    %v1561 = vadd.f32 %v124, %v1559
    %v1562 = vadd.f32 %v125, %v1560
    %s1563 = scalar_lea.vmem [#allocation8], 3
    %v1564 = vld [vmem:[%s1563] sm:$0x1]
    %v1566 = vlaneseq
    %v1567 = vshrl.u32 %v1566, 7
    %v1568 = vsub.s32 0, %v1567
    %v1569 = vrot.slane %v1564, %v1568
    %v1571 = vadd.f32 %v1561, %v1569
    %v1572 = vadd.f32 %v1562, %v1569
    %s1573 = scalar_lea.vmem %s2, 16
    %v1574 = vld [vmem:[%s1573] sm:$0xff]
    %v1575 = vld [vmem:[%s1573 + $0x8] sm:$0xff]
    %s1576 = scalar_lea.vmem [#allocation7], 16
    %v1577 = vld [vmem:[%s1576] sm:$0xff]
    %v1578 = vld [vmem:[%s1576 + $0x8] sm:$0xff]
    %v1579 = vsel %vm132, %v1571, 0.0
    %1580 = vadd.xlane.f32.xlu0 %v1579
    %v1581 = vpop.xlane.xlu0 %1580
    %v1582 = vsel %vm132, %v1572, 0.0
    %1583 = vadd.xlane.f32.xlu0 %v1582
    %v1584 = vpop.xlane.xlu0 %1583
    %v1585 = vmul.f32 %v1581, %v139
    %v1586 = vmul.f32 %v1584, %v139
    %v1587 = vsub.f32 %v1571, %v1585
    %v1588 = vsub.f32 %v1572, %v1586
    %v1589 = vmul.f32 %v1587, %v1587
    %v1590 = vmul.f32 %v1588, %v1588
    %v1591 = vsel %vm132, %v1589, 0.0
    %1592 = vadd.xlane.f32.xlu0 %v1591
    %v1593 = vpop.xlane.xlu0 %1592
    %v1594 = vsel %vm132, %v1590, 0.0
    %1595 = vadd.xlane.f32.xlu0 %v1594
    %v1596 = vpop.xlane.xlu0 %1595
    %v1597 = vmul.f32 %v1593, %v139
    %v1598 = vmul.f32 %v1596, %v139
    %v1599 = vadd.f32 %v1597, 1e-05
    %v1600 = vadd.f32 %v1598, 1e-05
    %v1601 = vrsqrt.pop %v1599
    %v1602 = vrsqrt.pop %v1600
    %v1603 = vmul.f32 %v1587, %v1601
    %v1604 = vmul.f32 %v1588, %v1602
    %v1605 = vmul.f32 %v1603, %v1574
    %v1606 = vmul.f32 %v1604, %v1575
    %v1607 = vadd.f32 %v1605, %v1577
    %v1608 = vadd.f32 %v1606, %v1578
    %v1609 = vld [vmem:[#allocation10] sm:$0xff]
    %v1610 = vld [vmem:[#allocation10 + $0x8] sm:$0xff]
    %v1611 = vld [vmem:[#allocation10 + $0x10] sm:$0xff]
    %v1612 = vld [vmem:[#allocation10 + $0x18] sm:$0xff]
    %v1613 = vld [vmem:[%s7] sm:$0x1]
    %v1615 = vlaneseq
    %v1616 = vshrl.u32 %v1615, 7
    %v1617 = vsub.s32 0, %v1616
    %v1618 = vrot.slane %v1613, %v1617
    %v1621 = vsel %vm132, %v1607, 0
    %v1624 = vsel %vm132, %v1608, 0
    %1626 = vmatprep.subr.mxu0 0.0
    %1627 = vmatpush1.msra.mxu0 %v1609
    %1628 = vmatprep.subr.mxu0 0.0
    %1629 = vmatpush1.msra.mxu0 %v1610
    %1630 = vmatprep.subr.mxu0 0.0
    %1631 = vmatpush1.msra.mxu0 %v1611
    %1632 = vmatprep.subr.mxu0 0.0
    %1633 = vmatpush1.msra.mxu0 %v1612
    %1634 = vmatprep.subr.mxu0 0.0
    %1635 = vmatpush1.msra.mxu0 0.0
    %1636 = vmatprep.subr.mxu0 0.0
    %1637 = vmatpush1.msra.mxu0 0.0
    %1638 = vmatprep.subr.mxu0 0.0
    %1639 = vmatpush1.msra.mxu0 0.0
    %1640 = vmatprep.subr.mxu0 0.0
    %1641 = vmatpush1.msra.mxu0 0.0
    %1642 = vmatprep.subr.mxu0 0.0
    %1643 = vmatpush1.msra.mxu0 0.0
    %1644 = vmatprep.subr.mxu0 0.0
    %1645 = vmatpush1.msra.mxu0 0.0
    %1646 = vmatprep.subr.mxu0 0.0
    %1647 = vmatpush1.msra.mxu0 0.0
    %1648 = vmatprep.subr.mxu0 0.0
    %1649 = vmatpush1.msra.mxu0 0.0
    %1650 = vmatprep.subr.mxu0 0.0
    %1651 = vmatpush1.msra.mxu0 0.0
    %1652 = vmatprep.subr.mxu0 0.0
    %1653 = vmatpush1.msra.mxu0 0.0
    %1654 = vmatprep.subr.mxu0 0.0
    %1655 = vmatpush1.msra.mxu0 0.0
    %1656 = vmatprep.subr.mxu0 0.0
    %1657 = vmatpush1.msra.mxu0 0.0
    %1658 = vmatprep.subr.mxu0 0.0
    %1659 = vmatpush1.msra.mxu0 0.0
    %1660 = vmatprep.subr.mxu0 0.0
    %1661 = vmatpush1.msra.mxu0 0.0
    %1662 = vmatprep.subr.mxu0 0.0
    %1663 = vmatpush1.msra.mxu0 0.0
    %1664 = vmatprep.subr.mxu0 0.0
    %1665 = vmatpush1.msra.mxu0 0.0
    %1666 = vmatprep.subr.mxu0 0.0
    %1667 = vmatpush1.msra.mxu0 0.0
    %1668 = vmatprep.subr.mxu0 0.0
    %1669 = vmatpush1.msra.mxu0 0.0
    %1670 = vmatprep.subr.mxu0 0.0
    %1671 = vmatpush1.msra.mxu0 0.0
    %1672 = vmatprep.subr.mxu0 0.0
    %1673 = vmatpush1.msra.mxu0 0.0
    %1674 = vmatprep.subr.mxu0 0.0
    %1675 = vmatpush1.msra.mxu0 0.0
    %1676 = vmatprep.subr.mxu0 0.0
    %1677 = vmatpush1.msra.mxu0 0.0
    %1678 = vmatprep.subr.mxu0 0.0
    %1679 = vmatpush1.msra.mxu0 0.0
    %1680 = vmatprep.subr.mxu0 0.0
    %1681 = vmatpush1.msra.mxu0 0.0
    %1682 = vmatprep.subr.mxu0 0.0
    %1683 = vmatpush1.msra.mxu0 0.0
    %1684 = vmatprep.subr.mxu0 0.0
    %1685 = vmatpush1.msra.mxu0 0.0
    %1686 = vmatprep.subr.mxu0 0.0
    %1687 = vmatpush1.msra.mxu0 0.0
    %1688 = vmatprep.subr.mxu0 0.0
    %1689 = vmatpush1.msra.mxu0 0.0
    %1690 = vmatprep.mubr.f32.mxu0 0.0
    %1691 = vmatmul.mubr.f32.gmra.mrb[0].mxu0 %v1621
    %v1692 = vpop.f32.mrb[0].mxu0
    %v1693 = vadd.f32 %v1618, %v1692
    %v1694 = vpop.f32.mrb[0].mxu0
    %1695 = vmatprep.mubr.f32.mxu0 0.0
    %1696 = vmatmul.mubr.f32.gmra.mrb[0].mxu0 %v1624
    %v1697 = vpop.f32.mrb[0].mxu0
    %v1698 = vadd.f32 %v1618, %v1697
    %v1699 = vpop.f32.mrb[0].mxu0
    %1700 = vdwg.mxu0
    %v1701 = vmax.f32 %v1693, 0.0
    %v1702 = vmax.f32 %v1698, 0.0
    %v1703 = vld [vmem:[%s8] sm:$0xff]
    %v1704 = vld [vmem:[%s8 + $0x8] sm:$0xff]
    %v1705 = vld [vmem:[%s8 + $0x10] sm:$0xff]
    %v1706 = vld [vmem:[%s8 + $0x18] sm:$0xff]
    %v1707 = vld [vmem:[%s8 + $0x20] sm:$0xff]
    %v1708 = vld [vmem:[%s8 + $0x28] sm:$0xff]
    %v1709 = vld [vmem:[%s8 + $0x30] sm:$0xff]
    %v1710 = vld [vmem:[%s8 + $0x38] sm:$0xff]
    %v1711 = vld [vmem:[%s8 + $0x40] sm:$0xff]
    %v1712 = vld [vmem:[%s8 + $0x48] sm:$0xff]
    %v1713 = vld [vmem:[%s8 + $0x50] sm:$0xff]
    %v1714 = vld [vmem:[%s8 + $0x58] sm:$0xff]
    %v1715 = vld [vmem:[%s8 + $0x60] sm:$0xff]
    %v1716 = vld [vmem:[%s8 + $0x68] sm:$0xff]
    %v1717 = vld [vmem:[%s8 + $0x70] sm:$0xff]
    %v1718 = vld [vmem:[%s8 + $0x78] sm:$0xff]
    %1719 = vmatprep.subr.mxu0 0.0
    %1720 = vmatpush1.msra.mxu0 %v1703
    %1721 = vmatprep.subr.mxu0 0.0
    %1722 = vmatpush1.msra.mxu0 %v1704
    %1723 = vmatprep.subr.mxu0 0.0
    %1724 = vmatpush1.msra.mxu0 %v1705
    %1725 = vmatprep.subr.mxu0 0.0
    %1726 = vmatpush1.msra.mxu0 %v1706
    %1727 = vmatprep.subr.mxu0 0.0
    %1728 = vmatpush1.msra.mxu0 %v1707
    %1729 = vmatprep.subr.mxu0 0.0
    %1730 = vmatpush1.msra.mxu0 %v1708
    %1731 = vmatprep.subr.mxu0 0.0
    %1732 = vmatpush1.msra.mxu0 %v1709
    %1733 = vmatprep.subr.mxu0 0.0
    %1734 = vmatpush1.msra.mxu0 %v1710
    %1735 = vmatprep.subr.mxu0 0.0
    %1736 = vmatpush1.msra.mxu0 %v1711
    %1737 = vmatprep.subr.mxu0 0.0
    %1738 = vmatpush1.msra.mxu0 %v1712
    %1739 = vmatprep.subr.mxu0 0.0
    %1740 = vmatpush1.msra.mxu0 %v1713
    %1741 = vmatprep.subr.mxu0 0.0
    %1742 = vmatpush1.msra.mxu0 %v1714
    %1743 = vmatprep.subr.mxu0 0.0
    %1744 = vmatpush1.msra.mxu0 %v1715
    %1745 = vmatprep.subr.mxu0 0.0
    %1746 = vmatpush1.msra.mxu0 %v1716
    %1747 = vmatprep.subr.mxu0 0.0
    %1748 = vmatpush1.msra.mxu0 %v1717
    %1749 = vmatprep.subr.mxu0 0.0
    %1750 = vmatpush1.msra.mxu0 %v1718
    %1751 = vmatprep.subr.mxu0 0.0
    %1752 = vmatpush1.msra.mxu0 0.0
    %1753 = vmatprep.subr.mxu0 0.0
    %1754 = vmatpush1.msra.mxu0 0.0
    %1755 = vmatprep.subr.mxu0 0.0
    %1756 = vmatpush1.msra.mxu0 0.0
    %1757 = vmatprep.subr.mxu0 0.0
    %1758 = vmatpush1.msra.mxu0 0.0
    %1759 = vmatprep.subr.mxu0 0.0
    %1760 = vmatpush1.msra.mxu0 0.0
    %1761 = vmatprep.subr.mxu0 0.0
    %1762 = vmatpush1.msra.mxu0 0.0
    %1763 = vmatprep.subr.mxu0 0.0
    %1764 = vmatpush1.msra.mxu0 0.0
    %1765 = vmatprep.subr.mxu0 0.0
    %1766 = vmatpush1.msra.mxu0 0.0
    %1767 = vmatprep.subr.mxu0 0.0
    %1768 = vmatpush1.msra.mxu0 0.0
    %1769 = vmatprep.subr.mxu0 0.0
    %1770 = vmatpush1.msra.mxu0 0.0
    %1771 = vmatprep.subr.mxu0 0.0
    %1772 = vmatpush1.msra.mxu0 0.0
    %1773 = vmatprep.subr.mxu0 0.0
    %1774 = vmatpush1.msra.mxu0 0.0
    %1775 = vmatprep.subr.mxu0 0.0
    %1776 = vmatpush1.msra.mxu0 0.0
    %1777 = vmatprep.subr.mxu0 0.0
    %1778 = vmatpush1.msra.mxu0 0.0
    %1779 = vmatprep.subr.mxu0 0.0
    %1780 = vmatpush1.msra.mxu0 0.0
    %1781 = vmatprep.subr.mxu0 0.0
    %1782 = vmatpush1.msra.mxu0 0.0
    %1783 = vmatprep.mubr.f32.mxu0 0.0
    %1784 = vmatmul.mubr.f32.gmra.mrb[0].mxu0 %v1701
    %v1785 = vpop.f32.mrb[0].mxu0
    %v1786 = vadd.f32 0.0, %v1785
    %v1787 = vpop.f32.mrb[0].mxu0
    %1788 = vmatprep.mubr.f32.mxu0 0.0
    %1789 = vmatmul.mubr.f32.gmra.mrb[0].mxu0 %v1702
    %v1790 = vpop.f32.mrb[0].mxu0
    %v1791 = vadd.f32 0.0, %v1790
    %v1792 = vpop.f32.mrb[0].mxu0
    %1793 = vdwg.mxu0
    %v1794 = vadd.f32 %v1571, %v1786
    %v1795 = vadd.f32 %v1572, %v1791
    %v1796 = vld [vmem:[#allocation11] sm:$0x1]
    %v1798 = vlaneseq
    %v1799 = vshrl.u32 %v1798, 7
    %v1800 = vsub.s32 0, %v1799
    %v1801 = vrot.slane %v1796, %v1800
    %v1803 = vadd.f32 %v1794, %v1801
    %v1804 = vadd.f32 %v1795, %v1801
    %s1805 = scalar_lea.vmem %s2, 32
    %v1806 = vld [vmem:[%s1805] sm:$0xff]
    %v1807 = vld [vmem:[%s1805 + $0x8] sm:$0xff]
    %s1808 = scalar_lea.vmem [#allocation7], 32
    %v1809 = vld [vmem:[%s1808] sm:$0xff]
    %v1810 = vld [vmem:[%s1808 + $0x8] sm:$0xff]
    %v1811 = vsel %vm132, %v1803, 0.0
    %1812 = vadd.xlane.f32.xlu0 %v1811
    %v1813 = vpop.xlane.xlu0 %1812
    %v1814 = vsel %vm132, %v1804, 0.0
    %1815 = vadd.xlane.f32.xlu0 %v1814
    %v1816 = vpop.xlane.xlu0 %1815
    %v1817 = vmul.f32 %v1813, %v139
    %v1818 = vmul.f32 %v1816, %v139
    %v1819 = vsub.f32 %v1803, %v1817
    %v1820 = vsub.f32 %v1804, %v1818
    %v1821 = vmul.f32 %v1819, %v1819
    %v1822 = vmul.f32 %v1820, %v1820
    %v1823 = vsel %vm132, %v1821, 0.0
    %1824 = vadd.xlane.f32.xlu0 %v1823
    %v1825 = vpop.xlane.xlu0 %1824
    %v1826 = vsel %vm132, %v1822, 0.0
    %1827 = vadd.xlane.f32.xlu0 %v1826
    %v1828 = vpop.xlane.xlu0 %1827
    %v1829 = vmul.f32 %v1825, %v139
    %v1830 = vmul.f32 %v1828, %v139
    %v1831 = vadd.f32 %v1829, 1e-05
    %v1832 = vadd.f32 %v1830, 1e-05
    %v1833 = vrsqrt.pop %v1831
    %v1834 = vrsqrt.pop %v1832
    %v1835 = vmul.f32 %v1819, %v1833
    %v1836 = vmul.f32 %v1820, %v1834
    %v1837 = vmul.f32 %v1835, %v1806
    %v1838 = vmul.f32 %v1836, %v1807
    %v1839 = vadd.f32 %v1837, %v1809
    %v1840 = vadd.f32 %v1838, %v1810
    %s1841 = scalar_lea.vmem %s4, 128
    %v1842 = vld [vmem:[%s1841] sm:$0xff]
    %v1843 = vld [vmem:[%s1841 + $0x8] sm:$0xff]
    %v1844 = vld [vmem:[%s1841 + $0x10] sm:$0xff]
    %v1845 = vld [vmem:[%s1841 + $0x18] sm:$0xff]
    %s1846 = scalar_lea.vmem %s4, 160
    %v1847 = vld [vmem:[%s1846] sm:$0xff]
    %v1848 = vld [vmem:[%s1846 + $0x8] sm:$0xff]
    %v1849 = vld [vmem:[%s1846 + $0x10] sm:$0xff]
    %v1850 = vld [vmem:[%s1846 + $0x18] sm:$0xff]
    %s1851 = scalar_lea.vmem %s4, 192
    %v1852 = vld [vmem:[%s1851] sm:$0xff]
    %v1853 = vld [vmem:[%s1851 + $0x8] sm:$0xff]
    %v1854 = vld [vmem:[%s1851 + $0x10] sm:$0xff]
    %v1855 = vld [vmem:[%s1851 + $0x18] sm:$0xff]
    %s1856 = scalar_lea.vmem %s4, 224
    %v1857 = vld [vmem:[%s1856] sm:$0xff]
    %v1858 = vld [vmem:[%s1856 + $0x8] sm:$0xff]
    %v1859 = vld [vmem:[%s1856 + $0x10] sm:$0xff]
    %v1860 = vld [vmem:[%s1856 + $0x18] sm:$0xff]
    %s1861 = scalar_lea.vmem [#allocation8], 4
    %v1862 = vld [vmem:[%s1861] sm:$0x1]
    %v1864 = vlaneseq
    %v1865 = vshrl.u32 %v1864, 7
    %v1866 = vsub.s32 0, %v1865
    %v1867 = vrot.slane %v1862, %v1866
    %v1870 = vsel %vm132, %v1839, 0
    %v1873 = vsel %vm132, %v1840, 0
    %1875 = vmatprep.subr.mxu0 0.0
    %1876 = vmatpush1.msra.mxu0 %v1842
    %1877 = vmatprep.subr.mxu0 0.0
    %1878 = vmatpush1.msra.mxu0 %v1843
    %1879 = vmatprep.subr.mxu0 0.0
    %1880 = vmatpush1.msra.mxu0 %v1844
    %1881 = vmatprep.subr.mxu0 0.0
    %1882 = vmatpush1.msra.mxu0 %v1845
    %1883 = vmatprep.subr.mxu0 0.0
    %1884 = vmatpush1.msra.mxu0 0.0
    %1885 = vmatprep.subr.mxu0 0.0
    %1886 = vmatpush1.msra.mxu0 0.0
    %1887 = vmatprep.subr.mxu0 0.0
    %1888 = vmatpush1.msra.mxu0 0.0
    %1889 = vmatprep.subr.mxu0 0.0
    %1890 = vmatpush1.msra.mxu0 0.0
    %1891 = vmatprep.subr.mxu0 0.0
    %1892 = vmatpush1.msra.mxu0 0.0
    %1893 = vmatprep.subr.mxu0 0.0
    %1894 = vmatpush1.msra.mxu0 0.0
    %1895 = vmatprep.subr.mxu0 0.0
    %1896 = vmatpush1.msra.mxu0 0.0
    %1897 = vmatprep.subr.mxu0 0.0
    %1898 = vmatpush1.msra.mxu0 0.0
    %1899 = vmatprep.subr.mxu0 0.0
    %1900 = vmatpush1.msra.mxu0 0.0
    %1901 = vmatprep.subr.mxu0 0.0
    %1902 = vmatpush1.msra.mxu0 0.0
    %1903 = vmatprep.subr.mxu0 0.0
    %1904 = vmatpush1.msra.mxu0 0.0
    %1905 = vmatprep.subr.mxu0 0.0
    %1906 = vmatpush1.msra.mxu0 0.0
    %1907 = vmatprep.subr.mxu0 0.0
    %1908 = vmatpush1.msra.mxu0 0.0
    %1909 = vmatprep.subr.mxu0 0.0
    %1910 = vmatpush1.msra.mxu0 0.0
    %1911 = vmatprep.subr.mxu0 0.0
    %1912 = vmatpush1.msra.mxu0 0.0
    %1913 = vmatprep.subr.mxu0 0.0
    %1914 = vmatpush1.msra.mxu0 0.0
    %1915 = vmatprep.subr.mxu0 0.0
    %1916 = vmatpush1.msra.mxu0 0.0
    %1917 = vmatprep.subr.mxu0 0.0
    %1918 = vmatpush1.msra.mxu0 0.0
    %1919 = vmatprep.subr.mxu0 0.0
    %1920 = vmatpush1.msra.mxu0 0.0
    %1921 = vmatprep.subr.mxu0 0.0
    %1922 = vmatpush1.msra.mxu0 0.0
    %1923 = vmatprep.subr.mxu0 0.0
    %1924 = vmatpush1.msra.mxu0 0.0
    %1925 = vmatprep.subr.mxu0 0.0
    %1926 = vmatpush1.msra.mxu0 0.0
    %1927 = vmatprep.subr.mxu0 0.0
    %1928 = vmatpush1.msra.mxu0 0.0
    %1929 = vmatprep.subr.mxu0 0.0
    %1930 = vmatpush1.msra.mxu0 0.0
    %1931 = vmatprep.subr.mxu0 0.0
    %1932 = vmatpush1.msra.mxu0 0.0
    %1933 = vmatprep.subr.mxu0 0.0
    %1934 = vmatpush1.msra.mxu0 0.0
    %1935 = vmatprep.subr.mxu0 0.0
    %1936 = vmatpush1.msra.mxu0 0.0
    %1937 = vmatprep.subr.mxu0 0.0
    %1938 = vmatpush1.msra.mxu0 0.0
    %1939 = vmatprep.mubr.f32.mxu0 0.0
    %1940 = vmatmul.mubr.f32.gmra.mrb[0].mxu0 %v1870
    %v1941 = vpop.f32.mrb[0].mxu0
    %v1942 = vadd.f32 %v1867, %v1941
    %v1943 = vpop.f32.mrb[0].mxu0
    %1944 = vmatprep.mubr.f32.mxu0 0.0
    %1945 = vmatmul.mubr.f32.gmra.mrb[0].mxu0 %v1873
    %v1946 = vpop.f32.mrb[0].mxu0
    %v1947 = vadd.f32 %v1867, %v1946
    %v1948 = vpop.f32.mrb[0].mxu0
    %1949 = vdwg.mxu0
    %v1950 = vmul.f32 %v1942, 0.35355338
    %v1951 = vmul.f32 %v1947, 0.35355338
    %s1952 = scalar_lea.vmem [#allocation8], 5
    %v1953 = vld [vmem:[%s1952] sm:$0x1]
    %v1955 = vlaneseq
    %v1956 = vshrl.u32 %v1955, 7
    %v1957 = vsub.s32 0, %v1956
    %v1958 = vrot.slane %v1953, %v1957
    %1960 = vmatprep.subr.mxu0 0.0
    %1961 = vmatpush1.msra.mxu0 %v1847
    %1962 = vmatprep.subr.mxu0 0.0
    %1963 = vmatpush1.msra.mxu0 %v1848
    %1964 = vmatprep.subr.mxu0 0.0
    %1965 = vmatpush1.msra.mxu0 %v1849
    %1966 = vmatprep.subr.mxu0 0.0
    %1967 = vmatpush1.msra.mxu0 %v1850
    %1968 = vmatprep.subr.mxu0 0.0
    %1969 = vmatpush1.msra.mxu0 0.0
    %1970 = vmatprep.subr.mxu0 0.0
    %1971 = vmatpush1.msra.mxu0 0.0
    %1972 = vmatprep.subr.mxu0 0.0
    %1973 = vmatpush1.msra.mxu0 0.0
    %1974 = vmatprep.subr.mxu0 0.0
    %1975 = vmatpush1.msra.mxu0 0.0
    %1976 = vmatprep.subr.mxu0 0.0
    %1977 = vmatpush1.msra.mxu0 0.0
    %1978 = vmatprep.subr.mxu0 0.0
    %1979 = vmatpush1.msra.mxu0 0.0
    %1980 = vmatprep.subr.mxu0 0.0
    %1981 = vmatpush1.msra.mxu0 0.0
    %1982 = vmatprep.subr.mxu0 0.0
    %1983 = vmatpush1.msra.mxu0 0.0
    %1984 = vmatprep.subr.mxu0 0.0
    %1985 = vmatpush1.msra.mxu0 0.0
    %1986 = vmatprep.subr.mxu0 0.0
    %1987 = vmatpush1.msra.mxu0 0.0
    %1988 = vmatprep.subr.mxu0 0.0
    %1989 = vmatpush1.msra.mxu0 0.0
    %1990 = vmatprep.subr.mxu0 0.0
    %1991 = vmatpush1.msra.mxu0 0.0
    %1992 = vmatprep.subr.mxu0 0.0
    %1993 = vmatpush1.msra.mxu0 0.0
    %1994 = vmatprep.subr.mxu0 0.0
    %1995 = vmatpush1.msra.mxu0 0.0
    %1996 = vmatprep.subr.mxu0 0.0
    %1997 = vmatpush1.msra.mxu0 0.0
    %1998 = vmatprep.subr.mxu0 0.0
    %1999 = vmatpush1.msra.mxu0 0.0
    %2000 = vmatprep.subr.mxu0 0.0
    %2001 = vmatpush1.msra.mxu0 0.0
    %2002 = vmatprep.subr.mxu0 0.0
    %2003 = vmatpush1.msra.mxu0 0.0
    %2004 = vmatprep.subr.mxu0 0.0
    %2005 = vmatpush1.msra.mxu0 0.0
    %2006 = vmatprep.subr.mxu0 0.0
    %2007 = vmatpush1.msra.mxu0 0.0
    %2008 = vmatprep.subr.mxu0 0.0
    %2009 = vmatpush1.msra.mxu0 0.0
    %2010 = vmatprep.subr.mxu0 0.0
    %2011 = vmatpush1.msra.mxu0 0.0
    %2012 = vmatprep.subr.mxu0 0.0
    %2013 = vmatpush1.msra.mxu0 0.0
    %2014 = vmatprep.subr.mxu0 0.0
    %2015 = vmatpush1.msra.mxu0 0.0
    %2016 = vmatprep.subr.mxu0 0.0
    %2017 = vmatpush1.msra.mxu0 0.0
    %2018 = vmatprep.subr.mxu0 0.0
    %2019 = vmatpush1.msra.mxu0 0.0
    %2020 = vmatprep.subr.mxu0 0.0
    %2021 = vmatpush1.msra.mxu0 0.0
    %2022 = vmatprep.subr.mxu0 0.0
    %2023 = vmatpush1.msra.mxu0 0.0
    %2024 = vmatprep.mubr.f32.mxu0 0.0
    %2025 = vmatmul.mubr.f32.gmra.mrb[0].mxu0 %v1870
    %v2026 = vpop.f32.mrb[0].mxu0
    %v2027 = vadd.f32 %v1958, %v2026
    %v2028 = vpop.f32.mrb[0].mxu0
    %2029 = vmatprep.mubr.f32.mxu0 0.0
    %2030 = vmatmul.mubr.f32.gmra.mrb[0].mxu0 %v1873
    %v2031 = vpop.f32.mrb[0].mxu0
    %v2032 = vadd.f32 %v1958, %v2031
    %v2033 = vpop.f32.mrb[0].mxu0
    %2034 = vdwg.mxu0
    %s2035 = scalar_lea.vmem [#allocation8], 6
    %v2036 = vld [vmem:[%s2035] sm:$0x1]
    %v2038 = vlaneseq
    %v2039 = vshrl.u32 %v2038, 7
    %v2040 = vsub.s32 0, %v2039
    %v2041 = vrot.slane %v2036, %v2040
    %2043 = vmatprep.subr.mxu0 0.0
    %2044 = vmatpush1.msra.mxu0 %v1852
    %2045 = vmatprep.subr.mxu0 0.0
    %2046 = vmatpush1.msra.mxu0 %v1853
    %2047 = vmatprep.subr.mxu0 0.0
    %2048 = vmatpush1.msra.mxu0 %v1854
    %2049 = vmatprep.subr.mxu0 0.0
    %2050 = vmatpush1.msra.mxu0 %v1855
    %2051 = vmatprep.subr.mxu0 0.0
    %2052 = vmatpush1.msra.mxu0 0.0
    %2053 = vmatprep.subr.mxu0 0.0
    %2054 = vmatpush1.msra.mxu0 0.0
    %2055 = vmatprep.subr.mxu0 0.0
    %2056 = vmatpush1.msra.mxu0 0.0
    %2057 = vmatprep.subr.mxu0 0.0
    %2058 = vmatpush1.msra.mxu0 0.0
    %2059 = vmatprep.subr.mxu0 0.0
    %2060 = vmatpush1.msra.mxu0 0.0
    %2061 = vmatprep.subr.mxu0 0.0
    %2062 = vmatpush1.msra.mxu0 0.0
    %2063 = vmatprep.subr.mxu0 0.0
    %2064 = vmatpush1.msra.mxu0 0.0
    %2065 = vmatprep.subr.mxu0 0.0
    %2066 = vmatpush1.msra.mxu0 0.0
    %2067 = vmatprep.subr.mxu0 0.0
    %2068 = vmatpush1.msra.mxu0 0.0
    %2069 = vmatprep.subr.mxu0 0.0
    %2070 = vmatpush1.msra.mxu0 0.0
    %2071 = vmatprep.subr.mxu0 0.0
    %2072 = vmatpush1.msra.mxu0 0.0
    %2073 = vmatprep.subr.mxu0 0.0
    %2074 = vmatpush1.msra.mxu0 0.0
    %2075 = vmatprep.subr.mxu0 0.0
    %2076 = vmatpush1.msra.mxu0 0.0
    %2077 = vmatprep.subr.mxu0 0.0
    %2078 = vmatpush1.msra.mxu0 0.0
    %2079 = vmatprep.subr.mxu0 0.0
    %2080 = vmatpush1.msra.mxu0 0.0
    %2081 = vmatprep.subr.mxu0 0.0
    %2082 = vmatpush1.msra.mxu0 0.0
    %2083 = vmatprep.subr.mxu0 0.0
    %2084 = vmatpush1.msra.mxu0 0.0
    %2085 = vmatprep.subr.mxu0 0.0
    %2086 = vmatpush1.msra.mxu0 0.0
    %2087 = vmatprep.subr.mxu0 0.0
    %2088 = vmatpush1.msra.mxu0 0.0
    %2089 = vmatprep.subr.mxu0 0.0
    %2090 = vmatpush1.msra.mxu0 0.0
    %2091 = vmatprep.subr.mxu0 0.0
    %2092 = vmatpush1.msra.mxu0 0.0
    %2093 = vmatprep.subr.mxu0 0.0
    %2094 = vmatpush1.msra.mxu0 0.0
    %2095 = vmatprep.subr.mxu0 0.0
    %2096 = vmatpush1.msra.mxu0 0.0
    %2097 = vmatprep.subr.mxu0 0.0
    %2098 = vmatpush1.msra.mxu0 0.0
    %2099 = vmatprep.subr.mxu0 0.0
    %2100 = vmatpush1.msra.mxu0 0.0
    %2101 = vmatprep.subr.mxu0 0.0
    %2102 = vmatpush1.msra.mxu0 0.0
    %2103 = vmatprep.subr.mxu0 0.0
    %2104 = vmatpush1.msra.mxu0 0.0
    %2105 = vmatprep.subr.mxu0 0.0
    %2106 = vmatpush1.msra.mxu0 0.0
    %2107 = vmatprep.mubr.f32.mxu0 0.0
    %2108 = vmatmul.mubr.f32.gmra.mrb[0].mxu0 %v1870
    %v2109 = vpop.f32.mrb[0].mxu0
    %v2110 = vadd.f32 %v2041, %v2109
    %v2111 = vpop.f32.mrb[0].mxu0
    %2112 = vmatprep.mubr.f32.mxu0 0.0
    %2113 = vmatmul.mubr.f32.gmra.mrb[0].mxu0 %v1873
    %v2114 = vpop.f32.mrb[0].mxu0
    %v2115 = vadd.f32 %v2041, %v2114
    %v2116 = vpop.f32.mrb[0].mxu0
    %2117 = vdwg.mxu0
    %v2119 = vsel %vm439, %v1950, 0
    %v2122 = vsel %vm439, %v1951, 0
    %v2125 = vsel %vm439, %v2027, 0
    %v2128 = vsel %vm439, %v2032, 0
    %2130 = vmatprep.subr.mxu0 0.0
    %2131 = vmatpush1.xpose.msra.mxu0 %v2125
    %2132 = vmatprep.subr.mxu0 0.0
    %2133 = vmatpush1.xpose.msra.mxu0 %v2128
    %2134 = vmatprep.subr.mxu0 0.0
    %2135 = vmatpush1.xpose.msra.mxu0 0.0
    %2136 = vmatprep.subr.mxu0 0.0
    %2137 = vmatpush1.xpose.msra.mxu0 0.0
    %2138 = vmatprep.subr.mxu0 0.0
    %2139 = vmatpush1.xpose.msra.mxu0 0.0
    %2140 = vmatprep.subr.mxu0 0.0
    %2141 = vmatpush1.xpose.msra.mxu0 0.0
    %2142 = vmatprep.subr.mxu0 0.0
    %2143 = vmatpush1.xpose.msra.mxu0 0.0
    %2144 = vmatprep.subr.mxu0 0.0
    %2145 = vmatpush1.xpose.msra.mxu0 0.0
    %2146 = vmatprep.subr.mxu0 0.0
    %2147 = vmatpush1.xpose.msra.mxu0 0.0
    %2148 = vmatprep.subr.mxu0 0.0
    %2149 = vmatpush1.xpose.msra.mxu0 0.0
    %2150 = vmatprep.subr.mxu0 0.0
    %2151 = vmatpush1.xpose.msra.mxu0 0.0
    %2152 = vmatprep.subr.mxu0 0.0
    %2153 = vmatpush1.xpose.msra.mxu0 0.0
    %2154 = vmatprep.subr.mxu0 0.0
    %2155 = vmatpush1.xpose.msra.mxu0 0.0
    %2156 = vmatprep.subr.mxu0 0.0
    %2157 = vmatpush1.xpose.msra.mxu0 0.0
    %2158 = vmatprep.subr.mxu0 0.0
    %2159 = vmatpush1.xpose.msra.mxu0 0.0
    %2160 = vmatprep.subr.mxu0 0.0
    %2161 = vmatpush1.xpose.msra.mxu0 0.0
    %2162 = vmatprep.subr.mxu0 0.0
    %2163 = vmatpush1.xpose.msra.mxu0 0.0
    %2164 = vmatprep.subr.mxu0 0.0
    %2165 = vmatpush1.xpose.msra.mxu0 0.0
    %2166 = vmatprep.subr.mxu0 0.0
    %2167 = vmatpush1.xpose.msra.mxu0 0.0
    %2168 = vmatprep.subr.mxu0 0.0
    %2169 = vmatpush1.xpose.msra.mxu0 0.0
    %2170 = vmatprep.subr.mxu0 0.0
    %2171 = vmatpush1.xpose.msra.mxu0 0.0
    %2172 = vmatprep.subr.mxu0 0.0
    %2173 = vmatpush1.xpose.msra.mxu0 0.0
    %2174 = vmatprep.subr.mxu0 0.0
    %2175 = vmatpush1.xpose.msra.mxu0 0.0
    %2176 = vmatprep.subr.mxu0 0.0
    %2177 = vmatpush1.xpose.msra.mxu0 0.0
    %2178 = vmatprep.subr.mxu0 0.0
    %2179 = vmatpush1.xpose.msra.mxu0 0.0
    %2180 = vmatprep.subr.mxu0 0.0
    %2181 = vmatpush1.xpose.msra.mxu0 0.0
    %2182 = vmatprep.subr.mxu0 0.0
    %2183 = vmatpush1.xpose.msra.mxu0 0.0
    %2184 = vmatprep.subr.mxu0 0.0
    %2185 = vmatpush1.xpose.msra.mxu0 0.0
    %2186 = vmatprep.subr.mxu0 0.0
    %2187 = vmatpush1.xpose.msra.mxu0 0.0
    %2188 = vmatprep.subr.mxu0 0.0
    %2189 = vmatpush1.xpose.msra.mxu0 0.0
    %2190 = vmatprep.subr.mxu0 0.0
    %2191 = vmatpush1.xpose.msra.mxu0 0.0
    %2192 = vmatprep.subr.mxu0 0.0
    %2193 = vmatpush1.xpose.msra.mxu0 0.0
    %2194 = vmatprep.mubr.f32.mxu0 0.0
    %2195 = vmatmul.mubr.f32.gmra.mrb[0].mxu0 %v2119
    %v2196 = vpop.f32.mrb[0].mxu0
    %v2197 = vadd.f32 %v126, %v2196
    %v2198 = vpop.f32.mrb[0].mxu0
    %2199 = vmatprep.mubr.f32.mxu0 0.0
    %2200 = vmatmul.mubr.f32.gmra.mrb[0].mxu0 %v2122
    %v2201 = vpop.f32.mrb[0].mxu0
    %v2202 = vadd.f32 %v127, %v2201
    %v2203 = vpop.f32.mrb[0].mxu0
    %2204 = vdwg.mxu0
    %v2205 = vsel %vm527, %v2197, -inf
    %2206 = vmax.xlane.f32.xlu0 %v2205
    %v2207 = vpop.xlane.xlu0 %2206
    %v2208 = vsel %vm527, %v2202, -inf
    %2209 = vmax.xlane.f32.xlu0 %v2208
    %v2210 = vpop.xlane.xlu0 %2209
    %v2211 = vsub.f32 %v2197, %v2207
    %v2212 = vsub.f32 %v2202, %v2210
    %v2213 = vmul.f32 %v2211, 1.442695
    %v2214 = vpow.pop %v2213
    %v2215 = vmul.f32 %v2212, 1.442695
    %v2216 = vpow.pop %v2215
    %v2217 = vsel %vm527, %v2214, 0.0
    %2218 = vadd.xlane.f32.xlu0 %v2217
    %v2219 = vpop.xlane.xlu0 %2218
    %v2220 = vsel %vm527, %v2216, 0.0
    %2221 = vadd.xlane.f32.xlu0 %v2220
    %v2222 = vpop.xlane.xlu0 %2221
    %v2223 = vrcp.pop %v2219
    %v2224 = vmul.f32 %v2214, %v2223
    %v2225 = vrcp.pop %v2222
    %v2226 = vmul.f32 %v2216, %v2225
    %v2228 = vsel %vm527, %v2224, 0
    %v2231 = vsel %vm527, %v2226, 0
    %2233 = vmatprep.subr.mxu0 0.0
    %2234 = vmatpush1.msra.mxu0 %v2110
    %2235 = vmatprep.subr.mxu0 0.0
    %2236 = vmatpush1.msra.mxu0 %v2115
    %2237 = vmatprep.subr.mxu0 0.0
    %2238 = vmatpush1.msra.mxu0 0.0
    %2239 = vmatprep.subr.mxu0 0.0
    %2240 = vmatpush1.msra.mxu0 0.0
    %2241 = vmatprep.subr.mxu0 0.0
    %2242 = vmatpush1.msra.mxu0 0.0
    %2243 = vmatprep.subr.mxu0 0.0
    %2244 = vmatpush1.msra.mxu0 0.0
    %2245 = vmatprep.subr.mxu0 0.0
    %2246 = vmatpush1.msra.mxu0 0.0
    %2247 = vmatprep.subr.mxu0 0.0
    %2248 = vmatpush1.msra.mxu0 0.0
    %2249 = vmatprep.subr.mxu0 0.0
    %2250 = vmatpush1.msra.mxu0 0.0
    %2251 = vmatprep.subr.mxu0 0.0
    %2252 = vmatpush1.msra.mxu0 0.0
    %2253 = vmatprep.subr.mxu0 0.0
    %2254 = vmatpush1.msra.mxu0 0.0
    %2255 = vmatprep.subr.mxu0 0.0
    %2256 = vmatpush1.msra.mxu0 0.0
    %2257 = vmatprep.subr.mxu0 0.0
    %2258 = vmatpush1.msra.mxu0 0.0
    %2259 = vmatprep.subr.mxu0 0.0
    %2260 = vmatpush1.msra.mxu0 0.0
    %2261 = vmatprep.subr.mxu0 0.0
    %2262 = vmatpush1.msra.mxu0 0.0
    %2263 = vmatprep.subr.mxu0 0.0
    %2264 = vmatpush1.msra.mxu0 0.0
    %2265 = vmatprep.subr.mxu0 0.0
    %2266 = vmatpush1.msra.mxu0 0.0
    %2267 = vmatprep.subr.mxu0 0.0
    %2268 = vmatpush1.msra.mxu0 0.0
    %2269 = vmatprep.subr.mxu0 0.0
    %2270 = vmatpush1.msra.mxu0 0.0
    %2271 = vmatprep.subr.mxu0 0.0
    %2272 = vmatpush1.msra.mxu0 0.0
    %2273 = vmatprep.subr.mxu0 0.0
    %2274 = vmatpush1.msra.mxu0 0.0
    %2275 = vmatprep.subr.mxu0 0.0
    %2276 = vmatpush1.msra.mxu0 0.0
    %2277 = vmatprep.subr.mxu0 0.0
    %2278 = vmatpush1.msra.mxu0 0.0
    %2279 = vmatprep.subr.mxu0 0.0
    %2280 = vmatpush1.msra.mxu0 0.0
    %2281 = vmatprep.subr.mxu0 0.0
    %2282 = vmatpush1.msra.mxu0 0.0
    %2283 = vmatprep.subr.mxu0 0.0
    %2284 = vmatpush1.msra.mxu0 0.0
    %2285 = vmatprep.subr.mxu0 0.0
    %2286 = vmatpush1.msra.mxu0 0.0
    %2287 = vmatprep.subr.mxu0 0.0
    %2288 = vmatpush1.msra.mxu0 0.0
    %2289 = vmatprep.subr.mxu0 0.0
    %2290 = vmatpush1.msra.mxu0 0.0
    %2291 = vmatprep.subr.mxu0 0.0
    %2292 = vmatpush1.msra.mxu0 0.0
    %2293 = vmatprep.subr.mxu0 0.0
    %2294 = vmatpush1.msra.mxu0 0.0
    %2295 = vmatprep.subr.mxu0 0.0
    %2296 = vmatpush1.msra.mxu0 0.0
    %2297 = vmatprep.mubr.f32.mxu0 0.0
    %2298 = vmatmul.mubr.f32.gmra.mrb[0].mxu0 %v2228
    %v2299 = vpop.f32.mrb[0].mxu0
    %v2300 = vadd.f32 0.0, %v2299
    %v2301 = vpop.f32.mrb[0].mxu0
    %2302 = vmatprep.mubr.f32.mxu0 0.0
    %2303 = vmatmul.mubr.f32.gmra.mrb[0].mxu0 %v2231
    %v2304 = vpop.f32.mrb[0].mxu0
    %v2305 = vadd.f32 0.0, %v2304
    %v2306 = vpop.f32.mrb[0].mxu0
    %2307 = vdwg.mxu0
    %2308 = vrot.lane.b32.xlu0 %v1950, 120
    %v2309 = vpop.permute.xlu0 %2308
    %2310 = vrot.lane.b32.xlu0 %v1951, 120
    %v2311 = vpop.permute.xlu0 %2310
    %2312 = vrot.lane.b32.xlu0 %v2027, 120
    %v2313 = vpop.permute.xlu0 %2312
    %2314 = vrot.lane.b32.xlu0 %v2032, 120
    %v2315 = vpop.permute.xlu0 %2314
    %v2316 = vsel %vm439, %v2309, 0
    %v2318 = vsel %vm439, %v2311, 0
    %v2320 = vsel %vm439, %v2313, 0
    %v2322 = vsel %vm439, %v2315, 0
    %2324 = vmatprep.subr.mxu0 0.0
    %2325 = vmatpush1.xpose.msra.mxu0 %v2320
    %2326 = vmatprep.subr.mxu0 0.0
    %2327 = vmatpush1.xpose.msra.mxu0 %v2322
    %2328 = vmatprep.subr.mxu0 0.0
    %2329 = vmatpush1.xpose.msra.mxu0 0.0
    %2330 = vmatprep.subr.mxu0 0.0
    %2331 = vmatpush1.xpose.msra.mxu0 0.0
    %2332 = vmatprep.subr.mxu0 0.0
    %2333 = vmatpush1.xpose.msra.mxu0 0.0
    %2334 = vmatprep.subr.mxu0 0.0
    %2335 = vmatpush1.xpose.msra.mxu0 0.0
    %2336 = vmatprep.subr.mxu0 0.0
    %2337 = vmatpush1.xpose.msra.mxu0 0.0
    %2338 = vmatprep.subr.mxu0 0.0
    %2339 = vmatpush1.xpose.msra.mxu0 0.0
    %2340 = vmatprep.subr.mxu0 0.0
    %2341 = vmatpush1.xpose.msra.mxu0 0.0
    %2342 = vmatprep.subr.mxu0 0.0
    %2343 = vmatpush1.xpose.msra.mxu0 0.0
    %2344 = vmatprep.subr.mxu0 0.0
    %2345 = vmatpush1.xpose.msra.mxu0 0.0
    %2346 = vmatprep.subr.mxu0 0.0
    %2347 = vmatpush1.xpose.msra.mxu0 0.0
    %2348 = vmatprep.subr.mxu0 0.0
    %2349 = vmatpush1.xpose.msra.mxu0 0.0
    %2350 = vmatprep.subr.mxu0 0.0
    %2351 = vmatpush1.xpose.msra.mxu0 0.0
    %2352 = vmatprep.subr.mxu0 0.0
    %2353 = vmatpush1.xpose.msra.mxu0 0.0
    %2354 = vmatprep.subr.mxu0 0.0
    %2355 = vmatpush1.xpose.msra.mxu0 0.0
    %2356 = vmatprep.subr.mxu0 0.0
    %2357 = vmatpush1.xpose.msra.mxu0 0.0
    %2358 = vmatprep.subr.mxu0 0.0
    %2359 = vmatpush1.xpose.msra.mxu0 0.0
    %2360 = vmatprep.subr.mxu0 0.0
    %2361 = vmatpush1.xpose.msra.mxu0 0.0
    %2362 = vmatprep.subr.mxu0 0.0
    %2363 = vmatpush1.xpose.msra.mxu0 0.0
    %2364 = vmatprep.subr.mxu0 0.0
    %2365 = vmatpush1.xpose.msra.mxu0 0.0
    %2366 = vmatprep.subr.mxu0 0.0
    %2367 = vmatpush1.xpose.msra.mxu0 0.0
    %2368 = vmatprep.subr.mxu0 0.0
    %2369 = vmatpush1.xpose.msra.mxu0 0.0
    %2370 = vmatprep.subr.mxu0 0.0
    %2371 = vmatpush1.xpose.msra.mxu0 0.0
    %2372 = vmatprep.subr.mxu0 0.0
    %2373 = vmatpush1.xpose.msra.mxu0 0.0
    %2374 = vmatprep.subr.mxu0 0.0
    %2375 = vmatpush1.xpose.msra.mxu0 0.0
    %2376 = vmatprep.subr.mxu0 0.0
    %2377 = vmatpush1.xpose.msra.mxu0 0.0
    %2378 = vmatprep.subr.mxu0 0.0
    %2379 = vmatpush1.xpose.msra.mxu0 0.0
    %2380 = vmatprep.subr.mxu0 0.0
    %2381 = vmatpush1.xpose.msra.mxu0 0.0
    %2382 = vmatprep.subr.mxu0 0.0
    %2383 = vmatpush1.xpose.msra.mxu0 0.0
    %2384 = vmatprep.subr.mxu0 0.0
    %2385 = vmatpush1.xpose.msra.mxu0 0.0
    %2386 = vmatprep.subr.mxu0 0.0
    %2387 = vmatpush1.xpose.msra.mxu0 0.0
    %2388 = vmatprep.mubr.f32.mxu0 0.0
    %2389 = vmatmul.mubr.f32.gmra.mrb[0].mxu0 %v2316
    %v2390 = vpop.f32.mrb[0].mxu0
    %v2391 = vadd.f32 %v126, %v2390
    %v2392 = vpop.f32.mrb[0].mxu0
    %2393 = vmatprep.mubr.f32.mxu0 0.0
    %2394 = vmatmul.mubr.f32.gmra.mrb[0].mxu0 %v2318
    %v2395 = vpop.f32.mrb[0].mxu0
    %v2396 = vadd.f32 %v127, %v2395
    %v2397 = vpop.f32.mrb[0].mxu0
    %2398 = vdwg.mxu0
    %v2399 = vsel %vm527, %v2391, -inf
    %2400 = vmax.xlane.f32.xlu0 %v2399
    %v2401 = vpop.xlane.xlu0 %2400
    %v2402 = vsel %vm527, %v2396, -inf
    %2403 = vmax.xlane.f32.xlu0 %v2402
    %v2404 = vpop.xlane.xlu0 %2403
    %v2405 = vsub.f32 %v2391, %v2401
    %v2406 = vsub.f32 %v2396, %v2404
    %v2407 = vmul.f32 %v2405, 1.442695
    %v2408 = vpow.pop %v2407
    %v2409 = vmul.f32 %v2406, 1.442695
    %v2410 = vpow.pop %v2409
    %v2411 = vsel %vm527, %v2408, 0.0
    %2412 = vadd.xlane.f32.xlu0 %v2411
    %v2413 = vpop.xlane.xlu0 %2412
    %v2414 = vsel %vm527, %v2410, 0.0
    %2415 = vadd.xlane.f32.xlu0 %v2414
    %v2416 = vpop.xlane.xlu0 %2415
    %v2417 = vrcp.pop %v2413
    %v2418 = vmul.f32 %v2408, %v2417
    %v2419 = vrcp.pop %v2416
    %v2420 = vmul.f32 %v2410, %v2419
    %2423 = vrot.lane.b32.xlu0 %v2110, 120
    %v2424 = vpop.permute.xlu0 %2423
    %2425 = vrot.lane.b32.xlu0 %v2115, 120
    %v2426 = vpop.permute.xlu0 %2425
    %v2430 = vsel %vm527, %v2418, 0
    %v2433 = vsel %vm527, %v2420, 0
    %2435 = vmatprep.subr.mxu0 0.0
    %2436 = vmatpush1.msra.mxu0 %v2424
    %2437 = vmatprep.subr.mxu0 0.0
    %2438 = vmatpush1.msra.mxu0 %v2426
    %2439 = vmatprep.subr.mxu0 0.0
    %2440 = vmatpush1.msra.mxu0 0.0
    %2441 = vmatprep.subr.mxu0 0.0
    %2442 = vmatpush1.msra.mxu0 0.0
    %2443 = vmatprep.subr.mxu0 0.0
    %2444 = vmatpush1.msra.mxu0 0.0
    %2445 = vmatprep.subr.mxu0 0.0
    %2446 = vmatpush1.msra.mxu0 0.0
    %2447 = vmatprep.subr.mxu0 0.0
    %2448 = vmatpush1.msra.mxu0 0.0
    %2449 = vmatprep.subr.mxu0 0.0
    %2450 = vmatpush1.msra.mxu0 0.0
    %2451 = vmatprep.subr.mxu0 0.0
    %2452 = vmatpush1.msra.mxu0 0.0
    %2453 = vmatprep.subr.mxu0 0.0
    %2454 = vmatpush1.msra.mxu0 0.0
    %2455 = vmatprep.subr.mxu0 0.0
    %2456 = vmatpush1.msra.mxu0 0.0
    %2457 = vmatprep.subr.mxu0 0.0
    %2458 = vmatpush1.msra.mxu0 0.0
    %2459 = vmatprep.subr.mxu0 0.0
    %2460 = vmatpush1.msra.mxu0 0.0
    %2461 = vmatprep.subr.mxu0 0.0
    %2462 = vmatpush1.msra.mxu0 0.0
    %2463 = vmatprep.subr.mxu0 0.0
    %2464 = vmatpush1.msra.mxu0 0.0
    %2465 = vmatprep.subr.mxu0 0.0
    %2466 = vmatpush1.msra.mxu0 0.0
    %2467 = vmatprep.subr.mxu0 0.0
    %2468 = vmatpush1.msra.mxu0 0.0
    %2469 = vmatprep.subr.mxu0 0.0
    %2470 = vmatpush1.msra.mxu0 0.0
    %2471 = vmatprep.subr.mxu0 0.0
    %2472 = vmatpush1.msra.mxu0 0.0
    %2473 = vmatprep.subr.mxu0 0.0
    %2474 = vmatpush1.msra.mxu0 0.0
    %2475 = vmatprep.subr.mxu0 0.0
    %2476 = vmatpush1.msra.mxu0 0.0
    %2477 = vmatprep.subr.mxu0 0.0
    %2478 = vmatpush1.msra.mxu0 0.0
    %2479 = vmatprep.subr.mxu0 0.0
    %2480 = vmatpush1.msra.mxu0 0.0
    %2481 = vmatprep.subr.mxu0 0.0
    %2482 = vmatpush1.msra.mxu0 0.0
    %2483 = vmatprep.subr.mxu0 0.0
    %2484 = vmatpush1.msra.mxu0 0.0
    %2485 = vmatprep.subr.mxu0 0.0
    %2486 = vmatpush1.msra.mxu0 0.0
    %2487 = vmatprep.subr.mxu0 0.0
    %2488 = vmatpush1.msra.mxu0 0.0
    %2489 = vmatprep.subr.mxu0 0.0
    %2490 = vmatpush1.msra.mxu0 0.0
    %2491 = vmatprep.subr.mxu0 0.0
    %2492 = vmatpush1.msra.mxu0 0.0
    %2493 = vmatprep.subr.mxu0 0.0
    %2494 = vmatpush1.msra.mxu0 0.0
    %2495 = vmatprep.subr.mxu0 0.0
    %2496 = vmatpush1.msra.mxu0 0.0
    %2497 = vmatprep.subr.mxu0 0.0
    %2498 = vmatpush1.msra.mxu0 0.0
    %2499 = vmatprep.mubr.f32.mxu0 0.0
    %2500 = vmatmul.mubr.f32.gmra.mrb[0].mxu0 %v2430
    %v2501 = vpop.f32.mrb[0].mxu0
    %v2502 = vadd.f32 0.0, %v2501
    %v2503 = vpop.f32.mrb[0].mxu0
    %2504 = vmatprep.mubr.f32.mxu0 0.0
    %2505 = vmatmul.mubr.f32.gmra.mrb[0].mxu0 %v2433
    %v2506 = vpop.f32.mrb[0].mxu0
    %v2507 = vadd.f32 0.0, %v2506
    %v2508 = vpop.f32.mrb[0].mxu0
    %2509 = vdwg.mxu0
    %v2511 = vsel %vm439, %v2502, 0
    %v2514 = vsel %vm439, %v2507, 0
    %2516 = vmatprep.subr.mxu0 0.0
    %2517 = vmatpush1.msra.mxu0 %v1858
    %2518 = vmatprep.subr.mxu0 0.0
    %2519 = vmatpush1.msra.mxu0 0.0
    %2520 = vmatprep.subr.mxu0 0.0
    %2521 = vmatpush1.msra.mxu0 0.0
    %2522 = vmatprep.subr.mxu0 0.0
    %2523 = vmatpush1.msra.mxu0 0.0
    %2524 = vmatprep.subr.mxu0 0.0
    %2525 = vmatpush1.msra.mxu0 0.0
    %2526 = vmatprep.subr.mxu0 0.0
    %2527 = vmatpush1.msra.mxu0 0.0
    %2528 = vmatprep.subr.mxu0 0.0
    %2529 = vmatpush1.msra.mxu0 0.0
    %2530 = vmatprep.subr.mxu0 0.0
    %2531 = vmatpush1.msra.mxu0 0.0
    %2532 = vmatprep.subr.mxu0 0.0
    %2533 = vmatpush1.msra.mxu0 0.0
    %2534 = vmatprep.subr.mxu0 0.0
    %2535 = vmatpush1.msra.mxu0 0.0
    %2536 = vmatprep.subr.mxu0 0.0
    %2537 = vmatpush1.msra.mxu0 0.0
    %2538 = vmatprep.subr.mxu0 0.0
    %2539 = vmatpush1.msra.mxu0 0.0
    %2540 = vmatprep.subr.mxu0 0.0
    %2541 = vmatpush1.msra.mxu0 0.0
    %2542 = vmatprep.subr.mxu0 0.0
    %2543 = vmatpush1.msra.mxu0 0.0
    %2544 = vmatprep.subr.mxu0 0.0
    %2545 = vmatpush1.msra.mxu0 0.0
    %2546 = vmatprep.subr.mxu0 0.0
    %2547 = vmatpush1.msra.mxu0 0.0
    %2548 = vmatprep.subr.mxu0 0.0
    %2549 = vmatpush1.msra.mxu0 0.0
    %2550 = vmatprep.subr.mxu0 0.0
    %2551 = vmatpush1.msra.mxu0 0.0
    %2552 = vmatprep.subr.mxu0 0.0
    %2553 = vmatpush1.msra.mxu0 0.0
    %2554 = vmatprep.subr.mxu0 0.0
    %2555 = vmatpush1.msra.mxu0 0.0
    %2556 = vmatprep.subr.mxu0 0.0
    %2557 = vmatpush1.msra.mxu0 0.0
    %2558 = vmatprep.subr.mxu0 0.0
    %2559 = vmatpush1.msra.mxu0 0.0
    %2560 = vmatprep.subr.mxu0 0.0
    %2561 = vmatpush1.msra.mxu0 0.0
    %2562 = vmatprep.subr.mxu0 0.0
    %2563 = vmatpush1.msra.mxu0 0.0
    %2564 = vmatprep.subr.mxu0 0.0
    %2565 = vmatpush1.msra.mxu0 0.0
    %2566 = vmatprep.subr.mxu0 0.0
    %2567 = vmatpush1.msra.mxu0 0.0
    %2568 = vmatprep.subr.mxu0 0.0
    %2569 = vmatpush1.msra.mxu0 0.0
    %2570 = vmatprep.subr.mxu0 0.0
    %2571 = vmatpush1.msra.mxu0 0.0
    %2572 = vmatprep.subr.mxu0 0.0
    %2573 = vmatpush1.msra.mxu0 0.0
    %2574 = vmatprep.subr.mxu0 0.0
    %2575 = vmatpush1.msra.mxu0 0.0
    %2576 = vmatprep.subr.mxu0 0.0
    %2577 = vmatpush1.msra.mxu0 0.0
    %2578 = vmatprep.subr.mxu0 0.0
    %2579 = vmatpush1.msra.mxu0 0.0
    %2580 = vmatprep.mubr.f32.mxu0 0.0
    %2581 = vmatmul.mubr.f32.gmra.mrb[0].mxu0 %v2511
    %v2582 = vpop.f32.mrb[0].mxu0
    %v2583 = vadd.f32 0.0, %v2582
    %v2584 = vpop.f32.mrb[0].mxu0
    %2585 = vmatprep.mubr.f32.mxu0 0.0
    %2586 = vmatmul.mubr.f32.gmra.mrb[0].mxu0 %v2514
    %v2587 = vpop.f32.mrb[0].mxu0
    %v2588 = vadd.f32 0.0, %v2587
    %v2589 = vpop.f32.mrb[0].mxu0
    %2590 = vdwg.mxu0
    %v2592 = vsel %vm439, %v2300, 0
    %v2595 = vsel %vm439, %v2305, 0
    %2597 = vmatprep.subr.mxu0 0.0
    %2598 = vmatpush1.msra.mxu0 %v1857
    %2599 = vmatprep.subr.mxu0 0.0
    %2600 = vmatpush1.msra.mxu0 0.0
    %2601 = vmatprep.subr.mxu0 0.0
    %2602 = vmatpush1.msra.mxu0 0.0
    %2603 = vmatprep.subr.mxu0 0.0
    %2604 = vmatpush1.msra.mxu0 0.0
    %2605 = vmatprep.subr.mxu0 0.0
    %2606 = vmatpush1.msra.mxu0 0.0
    %2607 = vmatprep.subr.mxu0 0.0
    %2608 = vmatpush1.msra.mxu0 0.0
    %2609 = vmatprep.subr.mxu0 0.0
    %2610 = vmatpush1.msra.mxu0 0.0
    %2611 = vmatprep.subr.mxu0 0.0
    %2612 = vmatpush1.msra.mxu0 0.0
    %2613 = vmatprep.subr.mxu0 0.0
    %2614 = vmatpush1.msra.mxu0 0.0
    %2615 = vmatprep.subr.mxu0 0.0
    %2616 = vmatpush1.msra.mxu0 0.0
    %2617 = vmatprep.subr.mxu0 0.0
    %2618 = vmatpush1.msra.mxu0 0.0
    %2619 = vmatprep.subr.mxu0 0.0
    %2620 = vmatpush1.msra.mxu0 0.0
    %2621 = vmatprep.subr.mxu0 0.0
    %2622 = vmatpush1.msra.mxu0 0.0
    %2623 = vmatprep.subr.mxu0 0.0
    %2624 = vmatpush1.msra.mxu0 0.0
    %2625 = vmatprep.subr.mxu0 0.0
    %2626 = vmatpush1.msra.mxu0 0.0
    %2627 = vmatprep.subr.mxu0 0.0
    %2628 = vmatpush1.msra.mxu0 0.0
    %2629 = vmatprep.subr.mxu0 0.0
    %2630 = vmatpush1.msra.mxu0 0.0
    %2631 = vmatprep.subr.mxu0 0.0
    %2632 = vmatpush1.msra.mxu0 0.0
    %2633 = vmatprep.subr.mxu0 0.0
    %2634 = vmatpush1.msra.mxu0 0.0
    %2635 = vmatprep.subr.mxu0 0.0
    %2636 = vmatpush1.msra.mxu0 0.0
    %2637 = vmatprep.subr.mxu0 0.0
    %2638 = vmatpush1.msra.mxu0 0.0
    %2639 = vmatprep.subr.mxu0 0.0
    %2640 = vmatpush1.msra.mxu0 0.0
    %2641 = vmatprep.subr.mxu0 0.0
    %2642 = vmatpush1.msra.mxu0 0.0
    %2643 = vmatprep.subr.mxu0 0.0
    %2644 = vmatpush1.msra.mxu0 0.0
    %2645 = vmatprep.subr.mxu0 0.0
    %2646 = vmatpush1.msra.mxu0 0.0
    %2647 = vmatprep.subr.mxu0 0.0
    %2648 = vmatpush1.msra.mxu0 0.0
    %2649 = vmatprep.subr.mxu0 0.0
    %2650 = vmatpush1.msra.mxu0 0.0
    %2651 = vmatprep.subr.mxu0 0.0
    %2652 = vmatpush1.msra.mxu0 0.0
    %2653 = vmatprep.subr.mxu0 0.0
    %2654 = vmatpush1.msra.mxu0 0.0
    %2655 = vmatprep.subr.mxu0 0.0
    %2656 = vmatpush1.msra.mxu0 0.0
    %2657 = vmatprep.subr.mxu0 0.0
    %2658 = vmatpush1.msra.mxu0 0.0
    %2659 = vmatprep.subr.mxu0 0.0
    %2660 = vmatpush1.msra.mxu0 0.0
    %2661 = vmatprep.mubr.f32.mxu0 0.0
    %2662 = vmatmul.mubr.f32.gmra.mrb[0].mxu0 %v2592
    %v2663 = vpop.f32.mrb[0].mxu0
    %v2664 = vadd.f32 %v2583, %v2663
    %v2665 = vpop.f32.mrb[0].mxu0
    %2666 = vmatprep.mubr.f32.mxu0 0.0
    %2667 = vmatmul.mubr.f32.gmra.mrb[0].mxu0 %v2595
    %v2668 = vpop.f32.mrb[0].mxu0
    %v2669 = vadd.f32 %v2588, %v2668
    %v2670 = vpop.f32.mrb[0].mxu0
    %2671 = vdwg.mxu0
    %2672 = vrot.lane.b32.xlu0 %v1950, 112
    %v2673 = vpop.permute.xlu0 %2672
    %2674 = vrot.lane.b32.xlu0 %v1951, 112
    %v2675 = vpop.permute.xlu0 %2674
    %2676 = vrot.lane.b32.xlu0 %v2027, 112
    %v2677 = vpop.permute.xlu0 %2676
    %2678 = vrot.lane.b32.xlu0 %v2032, 112
    %v2679 = vpop.permute.xlu0 %2678
    %v2680 = vsel %vm439, %v2673, 0
    %v2682 = vsel %vm439, %v2675, 0
    %v2684 = vsel %vm439, %v2677, 0
    %v2686 = vsel %vm439, %v2679, 0
    %2688 = vmatprep.subr.mxu0 0.0
    %2689 = vmatpush1.xpose.msra.mxu0 %v2684
    %2690 = vmatprep.subr.mxu0 0.0
    %2691 = vmatpush1.xpose.msra.mxu0 %v2686
    %2692 = vmatprep.subr.mxu0 0.0
    %2693 = vmatpush1.xpose.msra.mxu0 0.0
    %2694 = vmatprep.subr.mxu0 0.0
    %2695 = vmatpush1.xpose.msra.mxu0 0.0
    %2696 = vmatprep.subr.mxu0 0.0
    %2697 = vmatpush1.xpose.msra.mxu0 0.0
    %2698 = vmatprep.subr.mxu0 0.0
    %2699 = vmatpush1.xpose.msra.mxu0 0.0
    %2700 = vmatprep.subr.mxu0 0.0
    %2701 = vmatpush1.xpose.msra.mxu0 0.0
    %2702 = vmatprep.subr.mxu0 0.0
    %2703 = vmatpush1.xpose.msra.mxu0 0.0
    %2704 = vmatprep.subr.mxu0 0.0
    %2705 = vmatpush1.xpose.msra.mxu0 0.0
    %2706 = vmatprep.subr.mxu0 0.0
    %2707 = vmatpush1.xpose.msra.mxu0 0.0
    %2708 = vmatprep.subr.mxu0 0.0
    %2709 = vmatpush1.xpose.msra.mxu0 0.0
    %2710 = vmatprep.subr.mxu0 0.0
    %2711 = vmatpush1.xpose.msra.mxu0 0.0
    %2712 = vmatprep.subr.mxu0 0.0
    %2713 = vmatpush1.xpose.msra.mxu0 0.0
    %2714 = vmatprep.subr.mxu0 0.0
    %2715 = vmatpush1.xpose.msra.mxu0 0.0
    %2716 = vmatprep.subr.mxu0 0.0
    %2717 = vmatpush1.xpose.msra.mxu0 0.0
    %2718 = vmatprep.subr.mxu0 0.0
    %2719 = vmatpush1.xpose.msra.mxu0 0.0
    %2720 = vmatprep.subr.mxu0 0.0
    %2721 = vmatpush1.xpose.msra.mxu0 0.0
    %2722 = vmatprep.subr.mxu0 0.0
    %2723 = vmatpush1.xpose.msra.mxu0 0.0
    %2724 = vmatprep.subr.mxu0 0.0
    %2725 = vmatpush1.xpose.msra.mxu0 0.0
    %2726 = vmatprep.subr.mxu0 0.0
    %2727 = vmatpush1.xpose.msra.mxu0 0.0
    %2728 = vmatprep.subr.mxu0 0.0
    %2729 = vmatpush1.xpose.msra.mxu0 0.0
    %2730 = vmatprep.subr.mxu0 0.0
    %2731 = vmatpush1.xpose.msra.mxu0 0.0
    %2732 = vmatprep.subr.mxu0 0.0
    %2733 = vmatpush1.xpose.msra.mxu0 0.0
    %2734 = vmatprep.subr.mxu0 0.0
    %2735 = vmatpush1.xpose.msra.mxu0 0.0
    %2736 = vmatprep.subr.mxu0 0.0
    %2737 = vmatpush1.xpose.msra.mxu0 0.0
    %2738 = vmatprep.subr.mxu0 0.0
    %2739 = vmatpush1.xpose.msra.mxu0 0.0
    %2740 = vmatprep.subr.mxu0 0.0
    %2741 = vmatpush1.xpose.msra.mxu0 0.0
    %2742 = vmatprep.subr.mxu0 0.0
    %2743 = vmatpush1.xpose.msra.mxu0 0.0
    %2744 = vmatprep.subr.mxu0 0.0
    %2745 = vmatpush1.xpose.msra.mxu0 0.0
    %2746 = vmatprep.subr.mxu0 0.0
    %2747 = vmatpush1.xpose.msra.mxu0 0.0
    %2748 = vmatprep.subr.mxu0 0.0
    %2749 = vmatpush1.xpose.msra.mxu0 0.0
    %2750 = vmatprep.subr.mxu0 0.0
    %2751 = vmatpush1.xpose.msra.mxu0 0.0
    %2752 = vmatprep.mubr.f32.mxu0 0.0
    %2753 = vmatmul.mubr.f32.gmra.mrb[0].mxu0 %v2680
    %v2754 = vpop.f32.mrb[0].mxu0
    %v2755 = vadd.f32 %v126, %v2754
    %v2756 = vpop.f32.mrb[0].mxu0
    %2757 = vmatprep.mubr.f32.mxu0 0.0
    %2758 = vmatmul.mubr.f32.gmra.mrb[0].mxu0 %v2682
    %v2759 = vpop.f32.mrb[0].mxu0
    %v2760 = vadd.f32 %v127, %v2759
    %v2761 = vpop.f32.mrb[0].mxu0
    %2762 = vdwg.mxu0
    %v2763 = vsel %vm527, %v2755, -inf
    %2764 = vmax.xlane.f32.xlu0 %v2763
    %v2765 = vpop.xlane.xlu0 %2764
    %v2766 = vsel %vm527, %v2760, -inf
    %2767 = vmax.xlane.f32.xlu0 %v2766
    %v2768 = vpop.xlane.xlu0 %2767
    %v2769 = vsub.f32 %v2755, %v2765
    %v2770 = vsub.f32 %v2760, %v2768
    %v2771 = vmul.f32 %v2769, 1.442695
    %v2772 = vpow.pop %v2771
    %v2773 = vmul.f32 %v2770, 1.442695
    %v2774 = vpow.pop %v2773
    %v2775 = vsel %vm527, %v2772, 0.0
    %2776 = vadd.xlane.f32.xlu0 %v2775
    %v2777 = vpop.xlane.xlu0 %2776
    %v2778 = vsel %vm527, %v2774, 0.0
    %2779 = vadd.xlane.f32.xlu0 %v2778
    %v2780 = vpop.xlane.xlu0 %2779
    %v2781 = vrcp.pop %v2777
    %v2782 = vmul.f32 %v2772, %v2781
    %v2783 = vrcp.pop %v2780
    %v2784 = vmul.f32 %v2774, %v2783
    %2785 = vrot.lane.b32.xlu0 %v2110, 112
    %v2786 = vpop.permute.xlu0 %2785
    %2787 = vrot.lane.b32.xlu0 %v2115, 112
    %v2788 = vpop.permute.xlu0 %2787
    %v2792 = vsel %vm527, %v2782, 0
    %v2795 = vsel %vm527, %v2784, 0
    %2797 = vmatprep.subr.mxu0 0.0
    %2798 = vmatpush1.msra.mxu0 %v2786
    %2799 = vmatprep.subr.mxu0 0.0
    %2800 = vmatpush1.msra.mxu0 %v2788
    %2801 = vmatprep.subr.mxu0 0.0
    %2802 = vmatpush1.msra.mxu0 0.0
    %2803 = vmatprep.subr.mxu0 0.0
    %2804 = vmatpush1.msra.mxu0 0.0
    %2805 = vmatprep.subr.mxu0 0.0
    %2806 = vmatpush1.msra.mxu0 0.0
    %2807 = vmatprep.subr.mxu0 0.0
    %2808 = vmatpush1.msra.mxu0 0.0
    %2809 = vmatprep.subr.mxu0 0.0
    %2810 = vmatpush1.msra.mxu0 0.0
    %2811 = vmatprep.subr.mxu0 0.0
    %2812 = vmatpush1.msra.mxu0 0.0
    %2813 = vmatprep.subr.mxu0 0.0
    %2814 = vmatpush1.msra.mxu0 0.0
    %2815 = vmatprep.subr.mxu0 0.0
    %2816 = vmatpush1.msra.mxu0 0.0
    %2817 = vmatprep.subr.mxu0 0.0
    %2818 = vmatpush1.msra.mxu0 0.0
    %2819 = vmatprep.subr.mxu0 0.0
    %2820 = vmatpush1.msra.mxu0 0.0
    %2821 = vmatprep.subr.mxu0 0.0
    %2822 = vmatpush1.msra.mxu0 0.0
    %2823 = vmatprep.subr.mxu0 0.0
    %2824 = vmatpush1.msra.mxu0 0.0
    %2825 = vmatprep.subr.mxu0 0.0
    %2826 = vmatpush1.msra.mxu0 0.0
    %2827 = vmatprep.subr.mxu0 0.0
    %2828 = vmatpush1.msra.mxu0 0.0
    %2829 = vmatprep.subr.mxu0 0.0
    %2830 = vmatpush1.msra.mxu0 0.0
    %2831 = vmatprep.subr.mxu0 0.0
    %2832 = vmatpush1.msra.mxu0 0.0
    %2833 = vmatprep.subr.mxu0 0.0
    %2834 = vmatpush1.msra.mxu0 0.0
    %2835 = vmatprep.subr.mxu0 0.0
    %2836 = vmatpush1.msra.mxu0 0.0
    %2837 = vmatprep.subr.mxu0 0.0
    %2838 = vmatpush1.msra.mxu0 0.0
    %2839 = vmatprep.subr.mxu0 0.0
    %2840 = vmatpush1.msra.mxu0 0.0
    %2841 = vmatprep.subr.mxu0 0.0
    %2842 = vmatpush1.msra.mxu0 0.0
    %2843 = vmatprep.subr.mxu0 0.0
    %2844 = vmatpush1.msra.mxu0 0.0
    %2845 = vmatprep.subr.mxu0 0.0
    %2846 = vmatpush1.msra.mxu0 0.0
    %2847 = vmatprep.subr.mxu0 0.0
    %2848 = vmatpush1.msra.mxu0 0.0
    %2849 = vmatprep.subr.mxu0 0.0
    %2850 = vmatpush1.msra.mxu0 0.0
    %2851 = vmatprep.subr.mxu0 0.0
    %2852 = vmatpush1.msra.mxu0 0.0
    %2853 = vmatprep.subr.mxu0 0.0
    %2854 = vmatpush1.msra.mxu0 0.0
    %2855 = vmatprep.subr.mxu0 0.0
    %2856 = vmatpush1.msra.mxu0 0.0
    %2857 = vmatprep.subr.mxu0 0.0
    %2858 = vmatpush1.msra.mxu0 0.0
    %2859 = vmatprep.subr.mxu0 0.0
    %2860 = vmatpush1.msra.mxu0 0.0
    %2861 = vmatprep.mubr.f32.mxu0 0.0
    %2862 = vmatmul.mubr.f32.gmra.mrb[0].mxu0 %v2792
    %v2863 = vpop.f32.mrb[0].mxu0
    %v2864 = vadd.f32 0.0, %v2863
    %v2865 = vpop.f32.mrb[0].mxu0
    %2866 = vmatprep.mubr.f32.mxu0 0.0
    %2867 = vmatmul.mubr.f32.gmra.mrb[0].mxu0 %v2795
    %v2868 = vpop.f32.mrb[0].mxu0
    %v2869 = vadd.f32 0.0, %v2868
    %v2870 = vpop.f32.mrb[0].mxu0
    %2871 = vdwg.mxu0
    %v2873 = vsel %vm439, %v2864, 0
    %v2876 = vsel %vm439, %v2869, 0
    %2878 = vmatprep.subr.mxu0 0.0
    %2879 = vmatpush1.msra.mxu0 %v1859
    %2880 = vmatprep.subr.mxu0 0.0
    %2881 = vmatpush1.msra.mxu0 0.0
    %2882 = vmatprep.subr.mxu0 0.0
    %2883 = vmatpush1.msra.mxu0 0.0
    %2884 = vmatprep.subr.mxu0 0.0
    %2885 = vmatpush1.msra.mxu0 0.0
    %2886 = vmatprep.subr.mxu0 0.0
    %2887 = vmatpush1.msra.mxu0 0.0
    %2888 = vmatprep.subr.mxu0 0.0
    %2889 = vmatpush1.msra.mxu0 0.0
    %2890 = vmatprep.subr.mxu0 0.0
    %2891 = vmatpush1.msra.mxu0 0.0
    %2892 = vmatprep.subr.mxu0 0.0
    %2893 = vmatpush1.msra.mxu0 0.0
    %2894 = vmatprep.subr.mxu0 0.0
    %2895 = vmatpush1.msra.mxu0 0.0
    %2896 = vmatprep.subr.mxu0 0.0
    %2897 = vmatpush1.msra.mxu0 0.0
    %2898 = vmatprep.subr.mxu0 0.0
    %2899 = vmatpush1.msra.mxu0 0.0
    %2900 = vmatprep.subr.mxu0 0.0
    %2901 = vmatpush1.msra.mxu0 0.0
    %2902 = vmatprep.subr.mxu0 0.0
    %2903 = vmatpush1.msra.mxu0 0.0
    %2904 = vmatprep.subr.mxu0 0.0
    %2905 = vmatpush1.msra.mxu0 0.0
    %2906 = vmatprep.subr.mxu0 0.0
    %2907 = vmatpush1.msra.mxu0 0.0
    %2908 = vmatprep.subr.mxu0 0.0
    %2909 = vmatpush1.msra.mxu0 0.0
    %2910 = vmatprep.subr.mxu0 0.0
    %2911 = vmatpush1.msra.mxu0 0.0
    %2912 = vmatprep.subr.mxu0 0.0
    %2913 = vmatpush1.msra.mxu0 0.0
    %2914 = vmatprep.subr.mxu0 0.0
    %2915 = vmatpush1.msra.mxu0 0.0
    %2916 = vmatprep.subr.mxu0 0.0
    %2917 = vmatpush1.msra.mxu0 0.0
    %2918 = vmatprep.subr.mxu0 0.0
    %2919 = vmatpush1.msra.mxu0 0.0
    %2920 = vmatprep.subr.mxu0 0.0
    %2921 = vmatpush1.msra.mxu0 0.0
    %2922 = vmatprep.subr.mxu0 0.0
    %2923 = vmatpush1.msra.mxu0 0.0
    %2924 = vmatprep.subr.mxu0 0.0
    %2925 = vmatpush1.msra.mxu0 0.0
    %2926 = vmatprep.subr.mxu0 0.0
    %2927 = vmatpush1.msra.mxu0 0.0
    %2928 = vmatprep.subr.mxu0 0.0
    %2929 = vmatpush1.msra.mxu0 0.0
    %2930 = vmatprep.subr.mxu0 0.0
    %2931 = vmatpush1.msra.mxu0 0.0
    %2932 = vmatprep.subr.mxu0 0.0
    %2933 = vmatpush1.msra.mxu0 0.0
    %2934 = vmatprep.subr.mxu0 0.0
    %2935 = vmatpush1.msra.mxu0 0.0
    %2936 = vmatprep.subr.mxu0 0.0
    %2937 = vmatpush1.msra.mxu0 0.0
    %2938 = vmatprep.subr.mxu0 0.0
    %2939 = vmatpush1.msra.mxu0 0.0
    %2940 = vmatprep.subr.mxu0 0.0
    %2941 = vmatpush1.msra.mxu0 0.0
    %2942 = vmatprep.mubr.f32.mxu0 0.0
    %2943 = vmatmul.mubr.f32.gmra.mrb[0].mxu0 %v2873
    %v2944 = vpop.f32.mrb[0].mxu0
    %v2945 = vadd.f32 0.0, %v2944
    %v2946 = vpop.f32.mrb[0].mxu0
    %2947 = vmatprep.mubr.f32.mxu0 0.0
    %2948 = vmatmul.mubr.f32.gmra.mrb[0].mxu0 %v2876
    %v2949 = vpop.f32.mrb[0].mxu0
    %v2950 = vadd.f32 0.0, %v2949
    %v2951 = vpop.f32.mrb[0].mxu0
    %2952 = vdwg.mxu0
    %v2953 = vadd.f32 %v2664, %v2945
    %v2954 = vadd.f32 %v2669, %v2950
    %2955 = vrot.lane.b32.xlu0 %v1950, 104
    %v2956 = vpop.permute.xlu0 %2955
    %2957 = vrot.lane.b32.xlu0 %v1951, 104
    %v2958 = vpop.permute.xlu0 %2957
    %2959 = vrot.lane.b32.xlu0 %v2027, 104
    %v2960 = vpop.permute.xlu0 %2959
    %2961 = vrot.lane.b32.xlu0 %v2032, 104
    %v2962 = vpop.permute.xlu0 %2961
    %v2963 = vsel %vm439, %v2956, 0
    %v2965 = vsel %vm439, %v2958, 0
    %v2967 = vsel %vm439, %v2960, 0
    %v2969 = vsel %vm439, %v2962, 0
    %2971 = vmatprep.subr.mxu0 0.0
    %2972 = vmatpush1.xpose.msra.mxu0 %v2967
    %2973 = vmatprep.subr.mxu0 0.0
    %2974 = vmatpush1.xpose.msra.mxu0 %v2969
    %2975 = vmatprep.subr.mxu0 0.0
    %2976 = vmatpush1.xpose.msra.mxu0 0.0
    %2977 = vmatprep.subr.mxu0 0.0
    %2978 = vmatpush1.xpose.msra.mxu0 0.0
    %2979 = vmatprep.subr.mxu0 0.0
    %2980 = vmatpush1.xpose.msra.mxu0 0.0
    %2981 = vmatprep.subr.mxu0 0.0
    %2982 = vmatpush1.xpose.msra.mxu0 0.0
    %2983 = vmatprep.subr.mxu0 0.0
    %2984 = vmatpush1.xpose.msra.mxu0 0.0
    %2985 = vmatprep.subr.mxu0 0.0
    %2986 = vmatpush1.xpose.msra.mxu0 0.0
    %2987 = vmatprep.subr.mxu0 0.0
    %2988 = vmatpush1.xpose.msra.mxu0 0.0
    %2989 = vmatprep.subr.mxu0 0.0
    %2990 = vmatpush1.xpose.msra.mxu0 0.0
    %2991 = vmatprep.subr.mxu0 0.0
    %2992 = vmatpush1.xpose.msra.mxu0 0.0
    %2993 = vmatprep.subr.mxu0 0.0
    %2994 = vmatpush1.xpose.msra.mxu0 0.0
    %2995 = vmatprep.subr.mxu0 0.0
    %2996 = vmatpush1.xpose.msra.mxu0 0.0
    %2997 = vmatprep.subr.mxu0 0.0
    %2998 = vmatpush1.xpose.msra.mxu0 0.0
    %2999 = vmatprep.subr.mxu0 0.0
    %3000 = vmatpush1.xpose.msra.mxu0 0.0
    %3001 = vmatprep.subr.mxu0 0.0
    %3002 = vmatpush1.xpose.msra.mxu0 0.0
    %3003 = vmatprep.subr.mxu0 0.0
    %3004 = vmatpush1.xpose.msra.mxu0 0.0
    %3005 = vmatprep.subr.mxu0 0.0
    %3006 = vmatpush1.xpose.msra.mxu0 0.0
    %3007 = vmatprep.subr.mxu0 0.0
    %3008 = vmatpush1.xpose.msra.mxu0 0.0
    %3009 = vmatprep.subr.mxu0 0.0
    %3010 = vmatpush1.xpose.msra.mxu0 0.0
    %3011 = vmatprep.subr.mxu0 0.0
    %3012 = vmatpush1.xpose.msra.mxu0 0.0
    %3013 = vmatprep.subr.mxu0 0.0
    %3014 = vmatpush1.xpose.msra.mxu0 0.0
    %3015 = vmatprep.subr.mxu0 0.0
    %3016 = vmatpush1.xpose.msra.mxu0 0.0
    %3017 = vmatprep.subr.mxu0 0.0
    %3018 = vmatpush1.xpose.msra.mxu0 0.0
    %3019 = vmatprep.subr.mxu0 0.0
    %3020 = vmatpush1.xpose.msra.mxu0 0.0
    %3021 = vmatprep.subr.mxu0 0.0
    %3022 = vmatpush1.xpose.msra.mxu0 0.0
    %3023 = vmatprep.subr.mxu0 0.0
    %3024 = vmatpush1.xpose.msra.mxu0 0.0
    %3025 = vmatprep.subr.mxu0 0.0
    %3026 = vmatpush1.xpose.msra.mxu0 0.0
    %3027 = vmatprep.subr.mxu0 0.0
    %3028 = vmatpush1.xpose.msra.mxu0 0.0
    %3029 = vmatprep.subr.mxu0 0.0
    %3030 = vmatpush1.xpose.msra.mxu0 0.0
    %3031 = vmatprep.subr.mxu0 0.0
    %3032 = vmatpush1.xpose.msra.mxu0 0.0
    %3033 = vmatprep.subr.mxu0 0.0
    %3034 = vmatpush1.xpose.msra.mxu0 0.0
    %3035 = vmatprep.mubr.f32.mxu0 0.0
    %3036 = vmatmul.mubr.f32.gmra.mrb[0].mxu0 %v2963
    %v3037 = vpop.f32.mrb[0].mxu0
    %v3038 = vadd.f32 %v126, %v3037
    %v3039 = vpop.f32.mrb[0].mxu0
    %3040 = vmatprep.mubr.f32.mxu0 0.0
    %3041 = vmatmul.mubr.f32.gmra.mrb[0].mxu0 %v2965
    %v3042 = vpop.f32.mrb[0].mxu0
    %v3043 = vadd.f32 %v127, %v3042
    %v3044 = vpop.f32.mrb[0].mxu0
    %3045 = vdwg.mxu0
    %v3046 = vsel %vm527, %v3038, -inf
    %3047 = vmax.xlane.f32.xlu0 %v3046
    %v3048 = vpop.xlane.xlu0 %3047
    %v3049 = vsel %vm527, %v3043, -inf
    %3050 = vmax.xlane.f32.xlu0 %v3049
    %v3051 = vpop.xlane.xlu0 %3050
    %v3052 = vsub.f32 %v3038, %v3048
    %v3053 = vsub.f32 %v3043, %v3051
    %v3054 = vmul.f32 %v3052, 1.442695
    %v3055 = vpow.pop %v3054
    %v3056 = vmul.f32 %v3053, 1.442695
    %v3057 = vpow.pop %v3056
    %v3058 = vsel %vm527, %v3055, 0.0
    %3059 = vadd.xlane.f32.xlu0 %v3058
    %v3060 = vpop.xlane.xlu0 %3059
    %v3061 = vsel %vm527, %v3057, 0.0
    %3062 = vadd.xlane.f32.xlu0 %v3061
    %v3063 = vpop.xlane.xlu0 %3062
    %v3064 = vrcp.pop %v3060
    %v3065 = vmul.f32 %v3055, %v3064
    %v3066 = vrcp.pop %v3063
    %v3067 = vmul.f32 %v3057, %v3066
    %3068 = vrot.lane.b32.xlu0 %v2110, 104
    %v3069 = vpop.permute.xlu0 %3068
    %3070 = vrot.lane.b32.xlu0 %v2115, 104
    %v3071 = vpop.permute.xlu0 %3070
    %v3075 = vsel %vm527, %v3065, 0
    %v3078 = vsel %vm527, %v3067, 0
    %3080 = vmatprep.subr.mxu0 0.0
    %3081 = vmatpush1.msra.mxu0 %v3069
    %3082 = vmatprep.subr.mxu0 0.0
    %3083 = vmatpush1.msra.mxu0 %v3071
    %3084 = vmatprep.subr.mxu0 0.0
    %3085 = vmatpush1.msra.mxu0 0.0
    %3086 = vmatprep.subr.mxu0 0.0
    %3087 = vmatpush1.msra.mxu0 0.0
    %3088 = vmatprep.subr.mxu0 0.0
    %3089 = vmatpush1.msra.mxu0 0.0
    %3090 = vmatprep.subr.mxu0 0.0
    %3091 = vmatpush1.msra.mxu0 0.0
    %3092 = vmatprep.subr.mxu0 0.0
    %3093 = vmatpush1.msra.mxu0 0.0
    %3094 = vmatprep.subr.mxu0 0.0
    %3095 = vmatpush1.msra.mxu0 0.0
    %3096 = vmatprep.subr.mxu0 0.0
    %3097 = vmatpush1.msra.mxu0 0.0
    %3098 = vmatprep.subr.mxu0 0.0
    %3099 = vmatpush1.msra.mxu0 0.0
    %3100 = vmatprep.subr.mxu0 0.0
    %3101 = vmatpush1.msra.mxu0 0.0
    %3102 = vmatprep.subr.mxu0 0.0
    %3103 = vmatpush1.msra.mxu0 0.0
    %3104 = vmatprep.subr.mxu0 0.0
    %3105 = vmatpush1.msra.mxu0 0.0
    %3106 = vmatprep.subr.mxu0 0.0
    %3107 = vmatpush1.msra.mxu0 0.0
    %3108 = vmatprep.subr.mxu0 0.0
    %3109 = vmatpush1.msra.mxu0 0.0
    %3110 = vmatprep.subr.mxu0 0.0
    %3111 = vmatpush1.msra.mxu0 0.0
    %3112 = vmatprep.subr.mxu0 0.0
    %3113 = vmatpush1.msra.mxu0 0.0
    %3114 = vmatprep.subr.mxu0 0.0
    %3115 = vmatpush1.msra.mxu0 0.0
    %3116 = vmatprep.subr.mxu0 0.0
    %3117 = vmatpush1.msra.mxu0 0.0
    %3118 = vmatprep.subr.mxu0 0.0
    %3119 = vmatpush1.msra.mxu0 0.0
    %3120 = vmatprep.subr.mxu0 0.0
    %3121 = vmatpush1.msra.mxu0 0.0
    %3122 = vmatprep.subr.mxu0 0.0
    %3123 = vmatpush1.msra.mxu0 0.0
    %3124 = vmatprep.subr.mxu0 0.0
    %3125 = vmatpush1.msra.mxu0 0.0
    %3126 = vmatprep.subr.mxu0 0.0
    %3127 = vmatpush1.msra.mxu0 0.0
    %3128 = vmatprep.subr.mxu0 0.0
    %3129 = vmatpush1.msra.mxu0 0.0
    %3130 = vmatprep.subr.mxu0 0.0
    %3131 = vmatpush1.msra.mxu0 0.0
    %3132 = vmatprep.subr.mxu0 0.0
    %3133 = vmatpush1.msra.mxu0 0.0
    %3134 = vmatprep.subr.mxu0 0.0
    %3135 = vmatpush1.msra.mxu0 0.0
    %3136 = vmatprep.subr.mxu0 0.0
    %3137 = vmatpush1.msra.mxu0 0.0
    %3138 = vmatprep.subr.mxu0 0.0
    %3139 = vmatpush1.msra.mxu0 0.0
    %3140 = vmatprep.subr.mxu0 0.0
    %3141 = vmatpush1.msra.mxu0 0.0
    %3142 = vmatprep.subr.mxu0 0.0
    %3143 = vmatpush1.msra.mxu0 0.0
    %3144 = vmatprep.mubr.f32.mxu0 0.0
    %3145 = vmatmul.mubr.f32.gmra.mrb[0].mxu0 %v3075
    %v3146 = vpop.f32.mrb[0].mxu0
    %v3147 = vadd.f32 0.0, %v3146
    %v3148 = vpop.f32.mrb[0].mxu0
    %3149 = vmatprep.mubr.f32.mxu0 0.0
    %3150 = vmatmul.mubr.f32.gmra.mrb[0].mxu0 %v3078
    %v3151 = vpop.f32.mrb[0].mxu0
    %v3152 = vadd.f32 0.0, %v3151
    %v3153 = vpop.f32.mrb[0].mxu0
    %3154 = vdwg.mxu0
    %v3156 = vsel %vm439, %v3147, 0
    %v3159 = vsel %vm439, %v3152, 0
    %3161 = vmatprep.subr.mxu0 0.0
    %3162 = vmatpush1.msra.mxu0 %v1860
    %3163 = vmatprep.subr.mxu0 0.0
    %3164 = vmatpush1.msra.mxu0 0.0
    %3165 = vmatprep.subr.mxu0 0.0
    %3166 = vmatpush1.msra.mxu0 0.0
    %3167 = vmatprep.subr.mxu0 0.0
    %3168 = vmatpush1.msra.mxu0 0.0
    %3169 = vmatprep.subr.mxu0 0.0
    %3170 = vmatpush1.msra.mxu0 0.0
    %3171 = vmatprep.subr.mxu0 0.0
    %3172 = vmatpush1.msra.mxu0 0.0
    %3173 = vmatprep.subr.mxu0 0.0
    %3174 = vmatpush1.msra.mxu0 0.0
    %3175 = vmatprep.subr.mxu0 0.0
    %3176 = vmatpush1.msra.mxu0 0.0
    %3177 = vmatprep.subr.mxu0 0.0
    %3178 = vmatpush1.msra.mxu0 0.0
    %3179 = vmatprep.subr.mxu0 0.0
    %3180 = vmatpush1.msra.mxu0 0.0
    %3181 = vmatprep.subr.mxu0 0.0
    %3182 = vmatpush1.msra.mxu0 0.0
    %3183 = vmatprep.subr.mxu0 0.0
    %3184 = vmatpush1.msra.mxu0 0.0
    %3185 = vmatprep.subr.mxu0 0.0
    %3186 = vmatpush1.msra.mxu0 0.0
    %3187 = vmatprep.subr.mxu0 0.0
    %3188 = vmatpush1.msra.mxu0 0.0
    %3189 = vmatprep.subr.mxu0 0.0
    %3190 = vmatpush1.msra.mxu0 0.0
    %3191 = vmatprep.subr.mxu0 0.0
    %3192 = vmatpush1.msra.mxu0 0.0
    %3193 = vmatprep.subr.mxu0 0.0
    %3194 = vmatpush1.msra.mxu0 0.0
    %3195 = vmatprep.subr.mxu0 0.0
    %3196 = vmatpush1.msra.mxu0 0.0
    %3197 = vmatprep.subr.mxu0 0.0
    %3198 = vmatpush1.msra.mxu0 0.0
    %3199 = vmatprep.subr.mxu0 0.0
    %3200 = vmatpush1.msra.mxu0 0.0
    %3201 = vmatprep.subr.mxu0 0.0
    %3202 = vmatpush1.msra.mxu0 0.0
    %3203 = vmatprep.subr.mxu0 0.0
    %3204 = vmatpush1.msra.mxu0 0.0
    %3205 = vmatprep.subr.mxu0 0.0
    %3206 = vmatpush1.msra.mxu0 0.0
    %3207 = vmatprep.subr.mxu0 0.0
    %3208 = vmatpush1.msra.mxu0 0.0
    %3209 = vmatprep.subr.mxu0 0.0
    %3210 = vmatpush1.msra.mxu0 0.0
    %3211 = vmatprep.subr.mxu0 0.0
    %3212 = vmatpush1.msra.mxu0 0.0
    %3213 = vmatprep.subr.mxu0 0.0
    %3214 = vmatpush1.msra.mxu0 0.0
    %3215 = vmatprep.subr.mxu0 0.0
    %3216 = vmatpush1.msra.mxu0 0.0
    %3217 = vmatprep.subr.mxu0 0.0
    %3218 = vmatpush1.msra.mxu0 0.0
    %3219 = vmatprep.subr.mxu0 0.0
    %3220 = vmatpush1.msra.mxu0 0.0
    %3221 = vmatprep.subr.mxu0 0.0
    %3222 = vmatpush1.msra.mxu0 0.0
    %3223 = vmatprep.subr.mxu0 0.0
    %3224 = vmatpush1.msra.mxu0 0.0
    %3225 = vmatprep.mubr.f32.mxu0 0.0
    %3226 = vmatmul.mubr.f32.gmra.mrb[0].mxu0 %v3156
    %v3227 = vpop.f32.mrb[0].mxu0
    %v3228 = vadd.f32 0.0, %v3227
    %v3229 = vpop.f32.mrb[0].mxu0
    %3230 = vmatprep.mubr.f32.mxu0 0.0
    %3231 = vmatmul.mubr.f32.gmra.mrb[0].mxu0 %v3159
    %v3232 = vpop.f32.mrb[0].mxu0
    %v3233 = vadd.f32 0.0, %v3232
    %v3234 = vpop.f32.mrb[0].mxu0
    %3235 = vdwg.mxu0
    %v3236 = vadd.f32 %v2953, %v3228
    %v3237 = vadd.f32 %v2954, %v3233
    %v3238 = vadd.f32 %v1803, %v3236
    %v3239 = vadd.f32 %v1804, %v3237
    %s3240 = scalar_lea.vmem [#allocation8], 7
    %v3241 = vld [vmem:[%s3240] sm:$0x1]
    %v3243 = vlaneseq
    %v3244 = vshrl.u32 %v3243, 7
    %v3245 = vsub.s32 0, %v3244
    %v3246 = vrot.slane %v3241, %v3245
    %v3248 = vadd.f32 %v3238, %v3246
    %v3249 = vadd.f32 %v3239, %v3246
    %s3250 = scalar_lea.vmem %s2, 48
    %v3251 = vld [vmem:[%s3250] sm:$0xff]
    %v3252 = vld [vmem:[%s3250 + $0x8] sm:$0xff]
    %s3253 = scalar_lea.vmem [#allocation7], 48
    %v3254 = vld [vmem:[%s3253] sm:$0xff]
    %v3255 = vld [vmem:[%s3253 + $0x8] sm:$0xff]
    %v3256 = vsel %vm132, %v3248, 0.0
    %3257 = vadd.xlane.f32.xlu0 %v3256
    %v3258 = vpop.xlane.xlu0 %3257
    %v3259 = vsel %vm132, %v3249, 0.0
    %3260 = vadd.xlane.f32.xlu0 %v3259
    %v3261 = vpop.xlane.xlu0 %3260
    %v3262 = vmul.f32 %v3258, %v139
    %v3263 = vmul.f32 %v3261, %v139
    %v3264 = vsub.f32 %v3248, %v3262
    %v3265 = vsub.f32 %v3249, %v3263
    %v3266 = vmul.f32 %v3264, %v3264
    %v3267 = vmul.f32 %v3265, %v3265
    %v3268 = vsel %vm132, %v3266, 0.0
    %3269 = vadd.xlane.f32.xlu0 %v3268
    %v3270 = vpop.xlane.xlu0 %3269
    %v3271 = vsel %vm132, %v3267, 0.0
    %3272 = vadd.xlane.f32.xlu0 %v3271
    %v3273 = vpop.xlane.xlu0 %3272
    %v3274 = vmul.f32 %v3270, %v139
    %v3275 = vmul.f32 %v3273, %v139
    %v3276 = vadd.f32 %v3274, 1e-05
    %v3277 = vadd.f32 %v3275, 1e-05
    %v3278 = vrsqrt.pop %v3276
    %v3279 = vrsqrt.pop %v3277
    %v3280 = vmul.f32 %v3264, %v3278
    %v3281 = vmul.f32 %v3265, %v3279
    %v3282 = vmul.f32 %v3280, %v3251
    %v3283 = vmul.f32 %v3281, %v3252
    %v3284 = vadd.f32 %v3282, %v3254
    %v3285 = vadd.f32 %v3283, %v3255
    %s3286 = scalar_lea.vmem [#allocation10], 32
    %v3287 = vld [vmem:[%s3286] sm:$0xff]
    %v3288 = vld [vmem:[%s3286 + $0x8] sm:$0xff]
    %v3289 = vld [vmem:[%s3286 + $0x10] sm:$0xff]
    %v3290 = vld [vmem:[%s3286 + $0x18] sm:$0xff]
    %s3291 = scalar_lea.vmem %s7, 1
    %v3292 = vld [vmem:[%s3291] sm:$0x1]
    %v3294 = vlaneseq
    %v3295 = vshrl.u32 %v3294, 7
    %v3296 = vsub.s32 0, %v3295
    %v3297 = vrot.slane %v3292, %v3296
    %v3300 = vsel %vm132, %v3284, 0
    %v3303 = vsel %vm132, %v3285, 0
    %3305 = vmatprep.subr.mxu0 0.0
    %3306 = vmatpush1.msra.mxu0 %v3287
    %3307 = vmatprep.subr.mxu0 0.0
    %3308 = vmatpush1.msra.mxu0 %v3288
    %3309 = vmatprep.subr.mxu0 0.0
    %3310 = vmatpush1.msra.mxu0 %v3289
    %3311 = vmatprep.subr.mxu0 0.0
    %3312 = vmatpush1.msra.mxu0 %v3290
    %3313 = vmatprep.subr.mxu0 0.0
    %3314 = vmatpush1.msra.mxu0 0.0
    %3315 = vmatprep.subr.mxu0 0.0
    %3316 = vmatpush1.msra.mxu0 0.0
    %3317 = vmatprep.subr.mxu0 0.0
    %3318 = vmatpush1.msra.mxu0 0.0
    %3319 = vmatprep.subr.mxu0 0.0
    %3320 = vmatpush1.msra.mxu0 0.0
    %3321 = vmatprep.subr.mxu0 0.0
    %3322 = vmatpush1.msra.mxu0 0.0
    %3323 = vmatprep.subr.mxu0 0.0
    %3324 = vmatpush1.msra.mxu0 0.0
    %3325 = vmatprep.subr.mxu0 0.0
    %3326 = vmatpush1.msra.mxu0 0.0
    %3327 = vmatprep.subr.mxu0 0.0
    %3328 = vmatpush1.msra.mxu0 0.0
    %3329 = vmatprep.subr.mxu0 0.0
    %3330 = vmatpush1.msra.mxu0 0.0
    %3331 = vmatprep.subr.mxu0 0.0
    %3332 = vmatpush1.msra.mxu0 0.0
    %3333 = vmatprep.subr.mxu0 0.0
    %3334 = vmatpush1.msra.mxu0 0.0
    %3335 = vmatprep.subr.mxu0 0.0
    %3336 = vmatpush1.msra.mxu0 0.0
    %3337 = vmatprep.subr.mxu0 0.0
    %3338 = vmatpush1.msra.mxu0 0.0
    %3339 = vmatprep.subr.mxu0 0.0
    %3340 = vmatpush1.msra.mxu0 0.0
    %3341 = vmatprep.subr.mxu0 0.0
    %3342 = vmatpush1.msra.mxu0 0.0
    %3343 = vmatprep.subr.mxu0 0.0
    %3344 = vmatpush1.msra.mxu0 0.0
    %3345 = vmatprep.subr.mxu0 0.0
    %3346 = vmatpush1.msra.mxu0 0.0
    %3347 = vmatprep.subr.mxu0 0.0
    %3348 = vmatpush1.msra.mxu0 0.0
    %3349 = vmatprep.subr.mxu0 0.0
    %3350 = vmatpush1.msra.mxu0 0.0
    %3351 = vmatprep.subr.mxu0 0.0
    %3352 = vmatpush1.msra.mxu0 0.0
    %3353 = vmatprep.subr.mxu0 0.0
    %3354 = vmatpush1.msra.mxu0 0.0
    %3355 = vmatprep.subr.mxu0 0.0
    %3356 = vmatpush1.msra.mxu0 0.0
    %3357 = vmatprep.subr.mxu0 0.0
    %3358 = vmatpush1.msra.mxu0 0.0
    %3359 = vmatprep.subr.mxu0 0.0
    %3360 = vmatpush1.msra.mxu0 0.0
    %3361 = vmatprep.subr.mxu0 0.0
    %3362 = vmatpush1.msra.mxu0 0.0
    %3363 = vmatprep.subr.mxu0 0.0
    %3364 = vmatpush1.msra.mxu0 0.0
    %3365 = vmatprep.subr.mxu0 0.0
    %3366 = vmatpush1.msra.mxu0 0.0
    %3367 = vmatprep.subr.mxu0 0.0
    %3368 = vmatpush1.msra.mxu0 0.0
    %3369 = vmatprep.mubr.f32.mxu0 0.0
    %3370 = vmatmul.mubr.f32.gmra.mrb[0].mxu0 %v3300
    %v3371 = vpop.f32.mrb[0].mxu0
    %v3372 = vadd.f32 %v3297, %v3371
    %v3373 = vpop.f32.mrb[0].mxu0
    %3374 = vmatprep.mubr.f32.mxu0 0.0
    %3375 = vmatmul.mubr.f32.gmra.mrb[0].mxu0 %v3303
    %v3376 = vpop.f32.mrb[0].mxu0
    %v3377 = vadd.f32 %v3297, %v3376
    %v3378 = vpop.f32.mrb[0].mxu0
    %3379 = vdwg.mxu0
    %v3380 = vmax.f32 %v3372, 0.0
    %v3381 = vmax.f32 %v3377, 0.0
    %s3382 = scalar_lea.vmem %s8, 128
    %v3383 = vld [vmem:[%s3382] sm:$0xff]
    %v3384 = vld [vmem:[%s3382 + $0x8] sm:$0xff]
    %v3385 = vld [vmem:[%s3382 + $0x10] sm:$0xff]
    %v3386 = vld [vmem:[%s3382 + $0x18] sm:$0xff]
    %v3387 = vld [vmem:[%s3382 + $0x20] sm:$0xff]
    %v3388 = vld [vmem:[%s3382 + $0x28] sm:$0xff]
    %v3389 = vld [vmem:[%s3382 + $0x30] sm:$0xff]
    %v3390 = vld [vmem:[%s3382 + $0x38] sm:$0xff]
    %v3391 = vld [vmem:[%s3382 + $0x40] sm:$0xff]
    %v3392 = vld [vmem:[%s3382 + $0x48] sm:$0xff]
    %v3393 = vld [vmem:[%s3382 + $0x50] sm:$0xff]
    %v3394 = vld [vmem:[%s3382 + $0x58] sm:$0xff]
    %v3395 = vld [vmem:[%s3382 + $0x60] sm:$0xff]
    %v3396 = vld [vmem:[%s3382 + $0x68] sm:$0xff]
    %v3397 = vld [vmem:[%s3382 + $0x70] sm:$0xff]
    %v3398 = vld [vmem:[%s3382 + $0x78] sm:$0xff]
    %3399 = vmatprep.subr.mxu0 0.0
    %3400 = vmatpush1.msra.mxu0 %v3383
    %3401 = vmatprep.subr.mxu0 0.0
    %3402 = vmatpush1.msra.mxu0 %v3384
    %3403 = vmatprep.subr.mxu0 0.0
    %3404 = vmatpush1.msra.mxu0 %v3385
    %3405 = vmatprep.subr.mxu0 0.0
    %3406 = vmatpush1.msra.mxu0 %v3386
    %3407 = vmatprep.subr.mxu0 0.0
    %3408 = vmatpush1.msra.mxu0 %v3387
    %3409 = vmatprep.subr.mxu0 0.0
    %3410 = vmatpush1.msra.mxu0 %v3388
    %3411 = vmatprep.subr.mxu0 0.0
    %3412 = vmatpush1.msra.mxu0 %v3389
    %3413 = vmatprep.subr.mxu0 0.0
    %3414 = vmatpush1.msra.mxu0 %v3390
    %3415 = vmatprep.subr.mxu0 0.0
    %3416 = vmatpush1.msra.mxu0 %v3391
    %3417 = vmatprep.subr.mxu0 0.0
    %3418 = vmatpush1.msra.mxu0 %v3392
    %3419 = vmatprep.subr.mxu0 0.0
    %3420 = vmatpush1.msra.mxu0 %v3393
    %3421 = vmatprep.subr.mxu0 0.0
    %3422 = vmatpush1.msra.mxu0 %v3394
    %3423 = vmatprep.subr.mxu0 0.0
    %3424 = vmatpush1.msra.mxu0 %v3395
    %3425 = vmatprep.subr.mxu0 0.0
    %3426 = vmatpush1.msra.mxu0 %v3396
    %3427 = vmatprep.subr.mxu0 0.0
    %3428 = vmatpush1.msra.mxu0 %v3397
    %3429 = vmatprep.subr.mxu0 0.0
    %3430 = vmatpush1.msra.mxu0 %v3398
    %3431 = vmatprep.subr.mxu0 0.0
    %3432 = vmatpush1.msra.mxu0 0.0
    %3433 = vmatprep.subr.mxu0 0.0
    %3434 = vmatpush1.msra.mxu0 0.0
    %3435 = vmatprep.subr.mxu0 0.0
    %3436 = vmatpush1.msra.mxu0 0.0
    %3437 = vmatprep.subr.mxu0 0.0
    %3438 = vmatpush1.msra.mxu0 0.0
    %3439 = vmatprep.subr.mxu0 0.0
    %3440 = vmatpush1.msra.mxu0 0.0
    %3441 = vmatprep.subr.mxu0 0.0
    %3442 = vmatpush1.msra.mxu0 0.0
    %3443 = vmatprep.subr.mxu0 0.0
    %3444 = vmatpush1.msra.mxu0 0.0
    %3445 = vmatprep.subr.mxu0 0.0
    %3446 = vmatpush1.msra.mxu0 0.0
    %3447 = vmatprep.subr.mxu0 0.0
    %3448 = vmatpush1.msra.mxu0 0.0
    %3449 = vmatprep.subr.mxu0 0.0
    %3450 = vmatpush1.msra.mxu0 0.0
    %3451 = vmatprep.subr.mxu0 0.0
    %3452 = vmatpush1.msra.mxu0 0.0
    %3453 = vmatprep.subr.mxu0 0.0
    %3454 = vmatpush1.msra.mxu0 0.0
    %3455 = vmatprep.subr.mxu0 0.0
    %3456 = vmatpush1.msra.mxu0 0.0
    %3457 = vmatprep.subr.mxu0 0.0
    %3458 = vmatpush1.msra.mxu0 0.0
    %3459 = vmatprep.subr.mxu0 0.0
    %3460 = vmatpush1.msra.mxu0 0.0
    %3461 = vmatprep.subr.mxu0 0.0
    %3462 = vmatpush1.msra.mxu0 0.0
    %3463 = vmatprep.mubr.f32.mxu0 0.0
    %3464 = vmatmul.mubr.f32.gmra.mrb[0].mxu0 %v3380
    %v3465 = vpop.f32.mrb[0].mxu0
    %v3466 = vadd.f32 0.0, %v3465
    %v3467 = vpop.f32.mrb[0].mxu0
    %3468 = vmatprep.mubr.f32.mxu0 0.0
    %3469 = vmatmul.mubr.f32.gmra.mrb[0].mxu0 %v3381
    %v3470 = vpop.f32.mrb[0].mxu0
    %v3471 = vadd.f32 0.0, %v3470
    %v3472 = vpop.f32.mrb[0].mxu0
    %3473 = vdwg.mxu0
    %v3474 = vadd.f32 %v3248, %v3466
    %v3475 = vadd.f32 %v3249, %v3471
    %s3476 = scalar_lea.vmem [#allocation11], 1
    %v3477 = vld [vmem:[%s3476] sm:$0x1]
    %v3479 = vlaneseq
    %v3480 = vshrl.u32 %v3479, 7
    %v3481 = vsub.s32 0, %v3480
    %v3482 = vrot.slane %v3477, %v3481
    %v3484 = vadd.f32 %v3474, %v3482
    %v3485 = vadd.f32 %v3475, %v3482
    %v3486 = vld [vmem:[%s10] sm:$0xff]
    %v3487 = vld [vmem:[%s10 + $0x8] sm:$0xff]
    %v3488 = vld [vmem:[%s10 + $0x10] sm:$0xff]
    %v3489 = vld [vmem:[%s10 + $0x18] sm:$0xff]
    %v3490 = vld [vmem:[%s11] sm:$0x1]
    %v3492 = vlaneseq
    %v3493 = vshrl.u32 %v3492, 7
    %v3494 = vsub.s32 0, %v3493
    %v3495 = vrot.slane %v3490, %v3494
    %v3498 = vsel %vm132, %v3484, 0
    %v3501 = vsel %vm132, %v3485, 0
    %3503 = vmatprep.subr.mxu0 0.0
    %3504 = vmatpush1.msra.mxu0 %v3486
    %3505 = vmatprep.subr.mxu0 0.0
    %3506 = vmatpush1.msra.mxu0 %v3487
    %3507 = vmatprep.subr.mxu0 0.0
    %3508 = vmatpush1.msra.mxu0 %v3488
    %3509 = vmatprep.subr.mxu0 0.0
    %3510 = vmatpush1.msra.mxu0 %v3489
    %3511 = vmatprep.subr.mxu0 0.0
    %3512 = vmatpush1.msra.mxu0 0.0
    %3513 = vmatprep.subr.mxu0 0.0
    %3514 = vmatpush1.msra.mxu0 0.0
    %3515 = vmatprep.subr.mxu0 0.0
    %3516 = vmatpush1.msra.mxu0 0.0
    %3517 = vmatprep.subr.mxu0 0.0
    %3518 = vmatpush1.msra.mxu0 0.0
    %3519 = vmatprep.subr.mxu0 0.0
    %3520 = vmatpush1.msra.mxu0 0.0
    %3521 = vmatprep.subr.mxu0 0.0
    %3522 = vmatpush1.msra.mxu0 0.0
    %3523 = vmatprep.subr.mxu0 0.0
    %3524 = vmatpush1.msra.mxu0 0.0
    %3525 = vmatprep.subr.mxu0 0.0
    %3526 = vmatpush1.msra.mxu0 0.0
    %3527 = vmatprep.subr.mxu0 0.0
    %3528 = vmatpush1.msra.mxu0 0.0
    %3529 = vmatprep.subr.mxu0 0.0
    %3530 = vmatpush1.msra.mxu0 0.0
    %3531 = vmatprep.subr.mxu0 0.0
    %3532 = vmatpush1.msra.mxu0 0.0
    %3533 = vmatprep.subr.mxu0 0.0
    %3534 = vmatpush1.msra.mxu0 0.0
    %3535 = vmatprep.subr.mxu0 0.0
    %3536 = vmatpush1.msra.mxu0 0.0
    %3537 = vmatprep.subr.mxu0 0.0
    %3538 = vmatpush1.msra.mxu0 0.0
    %3539 = vmatprep.subr.mxu0 0.0
    %3540 = vmatpush1.msra.mxu0 0.0
    %3541 = vmatprep.subr.mxu0 0.0
    %3542 = vmatpush1.msra.mxu0 0.0
    %3543 = vmatprep.subr.mxu0 0.0
    %3544 = vmatpush1.msra.mxu0 0.0
    %3545 = vmatprep.subr.mxu0 0.0
    %3546 = vmatpush1.msra.mxu0 0.0
    %3547 = vmatprep.subr.mxu0 0.0
    %3548 = vmatpush1.msra.mxu0 0.0
    %3549 = vmatprep.subr.mxu0 0.0
    %3550 = vmatpush1.msra.mxu0 0.0
    %3551 = vmatprep.subr.mxu0 0.0
    %3552 = vmatpush1.msra.mxu0 0.0
    %3553 = vmatprep.subr.mxu0 0.0
    %3554 = vmatpush1.msra.mxu0 0.0
    %3555 = vmatprep.subr.mxu0 0.0
    %3556 = vmatpush1.msra.mxu0 0.0
    %3557 = vmatprep.subr.mxu0 0.0
    %3558 = vmatpush1.msra.mxu0 0.0
    %3559 = vmatprep.subr.mxu0 0.0
    %3560 = vmatpush1.msra.mxu0 0.0
    %3561 = vmatprep.subr.mxu0 0.0
    %3562 = vmatpush1.msra.mxu0 0.0
    %3563 = vmatprep.subr.mxu0 0.0
    %3564 = vmatpush1.msra.mxu0 0.0
    %3565 = vmatprep.subr.mxu0 0.0
    %3566 = vmatpush1.msra.mxu0 0.0
    %3567 = vmatprep.mubr.f32.mxu0 0.0
    %3568 = vmatmul.mubr.f32.gmra.mrb[0].mxu0 %v3498
    %v3569 = vpop.f32.mrb[0].mxu0
    %v3570 = vadd.f32 %v3495, %v3569
    %v3571 = vpop.f32.mrb[0].mxu0
    %3572 = vmatprep.mubr.f32.mxu0 0.0
    %3573 = vmatmul.mubr.f32.gmra.mrb[0].mxu0 %v3501
    %v3574 = vpop.f32.mrb[0].mxu0
    %v3575 = vadd.f32 %v3495, %v3574
    %v3576 = vpop.f32.mrb[0].mxu0
    %3577 = vdwg.mxu0
    %3578 = vst.msk [vmem:[#allocation13] sm:$0xff] %vm527, %v3570
    %3579 = vst.msk [vmem:[#allocation13 + $0x8] sm:$0xff] %vm527, %v3575
    // Predicated region
    $region74: #{tpu_custom_call.1} parent=1 // pred_check
      _
    $region75: #{tpu_custom_call.1} parent=1 // pred_check_branch
      %3581 = sbr.rel (0) target = $region77
    $region76: #{tpu_custom_call.1} parent=1 // pred_region
      %s3583 = ssub.s32 256, 256
      %3584 = vsyncadd [#allocation4], %s3583
      %s3585 = sshll.u32 [#allocation13], 4
      %s3586 = int_to_ptr.vmem [resolvable:$true] %s3585
      %3591 = dma.vmem_to_hbm [thread:$0]  %s3586, 256, %s12, [#allocation4], 128, 128, 8
    $region77: #{tpu_custom_call.1} parent=1 // pred_fallthru
      _
    // Predicated region
    $region78: #{tpu_custom_call.1} parent=1 // pred_check
      _
    $region79: #{tpu_custom_call.1} parent=1 // pred_check_branch
      %3593 = sbr.rel (0) target = $region81
    $region80: #{tpu_custom_call.1} parent=1 // pred_region
      %3594 = dma.done [#allocation4], 256
    $region81: #{tpu_custom_call.1} parent=1 // pred_fallthru
      _
    %3595 = vsyncpa [#allocation3], 1
    %3596 = vsyncpa [#allocation6], 1
    %3597 = vsyncpa [#allocation9], 1
    %3598 = vsyncpa [#allocation12], 1
    %3599 = vsyncpa [#allocation4], 1

</llo_original>
